<compile_context>
chip_gen: v5e
topology: v5e:2x2
jax: 0.10.0
libtpu: 0.0.40
codegen_flags: <defaults>
</compile_context>

<pallas_src>
import jax
import jax.numpy as jnp
from jax.experimental import pallas as pl
from jax.experimental.pallas import tpu as pltpu

EPS = 1e-5  # torch.nn.LayerNorm default eps

_VMEM_BUDGET = 48 * 1024 * 1024   # tile-sizing budget: leaves headroom on v7x (64 MiB VMEM)
_VMEM_LIMIT = 64 * 1024 * 1024    # raise the default 16/32 MiB scoped-vmem limit


# ----------------------------- shared math helpers -------------------------- #
# (pure jnp -> usable both inside Pallas kernels and in the JAX reference)

def _ln(x, g, b):
    mu = jnp.mean(x, axis=-1, keepdims=True)
    xc = x - mu
    var = jnp.mean(xc * xc, axis=-1, keepdims=True)
    return xc * jax.lax.rsqrt(var + EPS) * g + b


def _gelu(x):
    # exact (erf-based) GELU, matching torch.nn.GELU() default
    return 0.5 * x * (1.0 + jax.lax.erf(x * 0.7071067811865476))


def _mm(a, w):
    # bf16 operands on the MXU, f32 accumulation
    return jnp.dot(a.astype(w.dtype), w, preferred_element_type=jnp.float32)


def _ffn(y, w1, b1, w2, b2):
    # Linear -> GELU -> Linear   (dropout = identity)
    h = _gelu(_mm(y, w1) + b1)
    return _mm(h, w2) + b2


# -------------------------------- kernels ---------------------------------- #

def down_kernel(x_ref, ng_ref, nb_ref, mg_ref, mb_ref, sd_ref, o_ref):
    # y = LN(x) ; z = LN_mix(y) ; down_rows = z @ S  (nearest downsample, exact 0/1)
    y = _ln(x_ref[...], ng_ref[...], nb_ref[...])
    z = _ln(y, mg_ref[...], mb_ref[...])
    o_ref[...] = _mm(z, sd_ref[...])


def block_kernel(x_ref, c_ref,
                 ng_ref, nb_ref, pw_ref, pb_ref, mg_ref, mb_ref, up_ref,
                 mw1_ref, mb1_ref, mw2_ref, mb2_ref,
                 fw1_ref, fb1_ref, fw2_ref, fb2_ref, o_ref):
    x = x_ref[...]
    y = _ln(x, ng_ref[...], nb_ref[...])                         # shared block LN
    u = _mm(y, pw_ref[...]) + pb_ref[...]                        # MGU projection
    ctx = _mm(c_ref[...], up_ref[...])                           # nearest upsample (0/1)
    s1 = ctx + y                                                 # mixer residual
    v = _ffn(_ln(s1, mg_ref[...], mb_ref[...]),
             mw1_ref[...], mb1_ref[...], mw2_ref[...], mb2_ref[...]) + s1
    s2 = u * v + x                                               # gate + outer residual
    o_ref[...] = _ffn(_ln(s2, ng_ref[...], nb_ref[...]),
                      fw1_ref[...], fb1_ref[...], fw2_ref[...], fb2_ref[...]) + s2


# ----------------------------- pallas_call glue ----------------------------- #

def _choose_tm(M, per_row_bytes, resident_bytes):
    """Largest row tile (multiple of 8, preferring multiples of 256 to fill the
    v6e/v7x MXU) that fits the VMEM budget, divides M, and keeps >=2 grid steps
    so both v7x TensorCores get work."""
    avail = max(_VMEM_BUDGET - resident_bytes, 1 << 20)
    cap = max(int(avail // max(per_row_bytes, 1)), 8)
    cap = min(cap, 1024, M)
    if M >= 16:
        cap = min(cap, M // 2)           # keep the grid >= 2 (v7x megacore)
    cap = (cap // 256) * 256 if cap >= 256 else max((cap // 8) * 8, 8)
    tm = cap
    while tm >= 8:
        if M % tm == 0:
            return tm
        tm -= 8
    return M                             # M not a multiple of 8: single-block fallback


def _row_call(kernel, row_args, param_args, out_cols, hidden_cols=0):
    """Row-tiled pallas_call. row_args are [M, *] arrays tiled over rows; param_args
    (weights / biases / LN params / selection matrices) stay resident every step."""
    M, D = row_args[0].shape
    # VMEM estimate: params double-buffered + double-buffered i/o row tiles + f32 temps.
    resident = 2 * sum(a.size * a.dtype.itemsize for a in param_args)
    per_row = 4 * (2 * (sum(a.shape[1] for a in row_args) + out_cols)
                   + hidden_cols + 8 * D)
    tm = _choose_tm(M, per_row, resident)
    # TODO(synk): for d_model/d_ffn large enough that the fused weight set overflows
    # v7x's 64 MiB VMEM, split the two FFNs into separate calls or add a d_ffn grid axis.
    row_specs = [pl.BlockSpec((tm, a.shape[1]), lambda i: (i, 0)) for a in row_args]
    param_specs = [pl.BlockSpec(a.shape, lambda i: (0, 0)) for a in param_args]
    return pl.pallas_call(
        kernel,
        out_shape=jax.ShapeDtypeStruct((M, out_cols), jnp.float32),
        grid=(M // tm,),
        in_specs=row_specs + param_specs,
        out_specs=pl.BlockSpec((tm, out_cols), lambda i: (i, 0)),
        compiler_params=pltpu.CompilerParams(
            dimension_semantics=("parallel",),
            vmem_limit_bytes=_VMEM_LIMIT),
    )(*row_args, *param_args)


# ------------------------------ model forward ------------------------------- #

def nin_block_forward(x, p, num_tokens):
    B, N, D = x.shape
    assert N == num_tokens, "context path requires seq_len == num_tokens"
    assert D % num_tokens == 0
    q = D // num_tokens
    M = B * N
    x2d = x.reshape(M, D)
    d_ffn = p["mix_w1"].shape[1]

    # phase 1: per-row LN -> LN -> nearest downsample (picked via 0/1 matmul)
    down_rows = _row_call(
        down_kernel, [x2d],
        [p["norm_g"], p["norm_b"], p["mix_norm_g"], p["mix_norm_b"], p["sel_down"]],
        out_cols=q)

    # tiny context projection [B, D] @ [D, D] — plain XLA (launch overhead > compute)
    down = down_rows.reshape(B, D)
    c = _mm(down, p["ctx_w"]) + p["ctx_b"]
    c_rows = c.reshape(B, N, q).reshape(M, q)        # chunk n of c[b] feeds row (b, n)

    # phase 2: everything else, fused into one row-tiled kernel
    out = _row_call(
        block_kernel, [x2d, c_rows],
        [p["norm_g"], p["norm_b"], p["proj_w"], p["proj_b"],
         p["mix_norm_g"], p["mix_norm_b"], p["sel_up"],
         p["mix_w1"], p["mix_b1"], p["mix_w2"], p["mix_b2"],
         p["ffn_w1"], p["ffn_b1"], p["ffn_w2"], p["ffn_b2"]],
        out_cols=D, hidden_cols=d_ffn)
    return out.reshape(B, N, D)


def contextualizer_nin(x, params, num_tokens):
    for p in params:
        x = nin_block_forward(x, p, num_tokens)
    return x


# -------------------- references (pure JAX, no Pallas) ---------------------- #

def ref_block_mixed(x, p, num_tokens):
    """Same math / same bf16 matmul-operand precision as the kernels."""
    B, N, D = x.shape
    q = D // num_tokens
    x2 = x.reshape(B * N, D)
    y = _ln(x2, p["norm_g"], p["norm_b"])
    z = _ln(y, p["mix_norm_g"], p["mix_norm_b"])
    down = _mm(z, p["sel_down"]).reshape(B, D)
    c = _mm(down, p["ctx_w"]) + p["ctx_b"]
    ctx = _mm(c.reshape(B * N, q), p["sel_up"])
    u = _mm(y, p["proj_w"]) + p["proj_b"]
    s1 = ctx + y
    v = _ffn(_ln(s1, p["mix_norm_g"], p["mix_norm_b"]),
             p["mix_w1"], p["mix_b1"], p["mix_w2"], p["mix_b2"]) + s1
    s2 = u * v + x2
    out = _ffn(_ln(s2, p["norm_g"], p["norm_b"]),
               p["ffn_w1"], p["ffn_b1"], p["ffn_w2"], p["ffn_b2"]) + s2
    return out.reshape(B, N, D)


def ref_model_mixed(x, params, num_tokens):
    for p in params:
        x = ref_block_mixed(x, p, num_tokens)
    return x


def _f32(w):
    return w.astype(jnp.float32)


def _ref_ln_f32(t, g, b):
    mu = t.mean(-1, keepdims=True)
    var = ((t - mu) ** 2).mean(-1, keepdims=True)
    return (t - mu) / jnp.sqrt(var + EPS) * g.reshape(-1) + b.reshape(-1)


def _ref_ffn_f32(t, w1, b1, w2, b2):
    return _gelu(t @ _f32(w1) + b1.reshape(-1)) @ _f32(w2) + b2.reshape(-1)


def ref_block_f32(x, p, num_tokens):
    """Torch-semantics reference: full f32, explicit strided downsample / repeat."""
    B, N, D = x.shape
    res = x
    y = _ref_ln_f32(x, p["norm_g"], p["norm_b"])
    u = y @ _f32(p["proj_w"]) + p["proj_b"].reshape(-1)
    r1 = y
    z = _ref_ln_f32(y, p["mix_norm_g"], p["mix_norm_b"])
    down = z.reshape(B, N * D)[:, ::num_tokens]                  # nearest, 1/num_tokens
    c = down @ _f32(p["ctx_w"]) + p["ctx_b"].reshape(-1)
    ctx = jnp.repeat(c, num_tokens, axis=1).reshape(B, N, D)     # nearest, x num_tokens
    x2 = ctx + r1
    v = _ref_ffn_f32(_ref_ln_f32(x2, p["mix_norm_g"], p["mix_norm_b"]),
                     p["mix_w1"], p["mix_b1"], p["mix_w2"], p["mix_b2"]) + x2
    x3 = u * v + res
    out = _ref_ffn_f32(_ref_ln_f32(x3, p["norm_g"], p["norm_b"]),
                       p["ffn_w1"], p["ffn_b1"], p["ffn_w2"], p["ffn_b2"]) + x3
    return out


def ref_model_f32(x, params, num_tokens):
    for p in params:
        x = ref_block_f32(x, p, num_tokens)
    return x


# ------------------------------ parameter init ------------------------------ #

def init_block_params(key, d_model, d_ffn, num_tokens):
    ks = jax.random.split(key, 10)
    s = 0.05
    f32, bf16 = jnp.float32, jnp.bfloat16
    q = d_model // num_tokens

    def w(k, shape):
        return (s * jax.random.normal(k, shape, f32)).astype(bf16)

    # exact 0/1 selection matrices for the nearest down/upsample (MXU-friendly)
    sel_down = (jnp.arange(d_model)[:, None]
                == (jnp.arange(q) * num_tokens)[None, :]).astype(bf16)      # [D, q]
    sel_up = ((jnp.arange(d_model)[None, :] // num_tokens)
              == jnp.arange(q)[:, None]).astype(bf16)                       # [q, D]

    return {
        # shared LayerNorm of the NiN block (torch default init)
        "norm_g": jnp.ones((1, d_model), f32),
        "norm_b": jnp.zeros((1, d_model), f32),
        # MGU proj
        "proj_w": w(ks[0], (d_model, d_model)),
        "proj_b": s * jax.random.normal(ks[1], (1, d_model), f32),
        # mixer (ContextualizerBlock)
        "mix_norm_g": jnp.ones((1, d_model), f32),
        "mix_norm_b": jnp.zeros((1, d_model), f32),
        "ctx_w": w(ks[2], (d_model, d_model)),
        "ctx_b": s * jax.random.normal(ks[3], (1, d_model), f32),
        "mix_w1": w(ks[4], (d_model, d_ffn)),
        "mix_b1": s * jax.random.normal(ks[5], (1, d_ffn), f32),
        "mix_w2": w(ks[6], (d_ffn, d_model)),
        "mix_b2": s * jax.random.normal(ks[7], (1, d_model), f32),
        # outer FFN
        "ffn_w1": w(ks[8], (d_model, d_ffn)),
        "ffn_b1": jnp.zeros((1, d_ffn), f32),
        "ffn_w2": w(ks[9], (d_ffn, d_model)),
        "ffn_b2": jnp.zeros((1, d_model), f32),
        # nearest down/upsample selection matrices
        "sel_down": sel_down,
        "sel_up": sel_up,
    }


# ----------------------------------- main ----------------------------------- #

if __name__ == "__main__":
    # d_model = 128 keeps every kernel output lane-dense (last dim multiple of 128).
    B, num_tokens, d_model, d_ffn, num_layers = 2, 8, 128, 256, 2
    # dropout = 0.0 -> identity (inference semantics)

    key = jax.random.PRNGKey(0)
    kx, kp = jax.random.split(key)
    x = jax.random.normal(kx, (B, num_tokens, d_model), jnp.float32)
    params = [init_block_params(k, d_model, d_ffn, num_tokens)
              for k in jax.random.split(kp, num_layers)]

    fwd = jax.jit(lambda t: contextualizer_nin(t, params, num_tokens))
    out = jax.block_until_ready(fwd(x))
    assert out.shape == (B, num_tokens, d_model)

    # strict check: same math at the same (bf16-operand / f32-accumulate) precision
    ref_mx = ref_model_mixed(x, params, num_tokens)
    err_mx = float(jnp.max(jnp.abs(out - ref_mx)))
    if err_mx > 3e-3:
        raise SystemExit(f"mismatch vs matched-precision reference: {err_mx}")

    # sanity check: torch-semantics full-f32 reference (bounds the bf16 tradeoff)
    ref32 = ref_model_f32(x, params, num_tokens)
    err32 = float(jnp.max(jnp.abs(out - ref32)))
    if err32 > 0.25:
        raise SystemExit(f"mismatch vs f32 torch-semantics reference: {err32}")

    print("KERNEL_OK")
</pallas_src>

<mosaic_0001>
module attributes {stable_mosaic.version = 11 : i64} {
  func.func @down_kernel(%arg0: i32, %arg1: memref<8x128xf32, #tpu.memory_space<vmem>>, %arg2: memref<1x128xf32, #tpu.memory_space<vmem>>, %arg3: memref<1x128xf32, #tpu.memory_space<vmem>>, %arg4: memref<1x128xf32, #tpu.memory_space<vmem>>, %arg5: memref<1x128xf32, #tpu.memory_space<vmem>>, %arg6: memref<128x16xbf16, #tpu.memory_space<vmem>>, %arg7: memref<8x16xf32, #tpu.memory_space<vmem>>) attributes {dimension_semantics = [#tpu.dimension_semantics<parallel>], iteration_bounds = array<i64: 2>, scalar_prefetch = 0 : i64, scratch_operands = 0 : i64, tpu.core_type = #tpu.core_type<tc>, window_params = [{transform_indices = @transform_0, window_bounds = array<i64: 8, 128>}, {pipeline_mode = #tpu.pipeline_mode<synchronous>, transform_indices = @transform_1, window_bounds = array<i64: 1, 128>}, {pipeline_mode = #tpu.pipeline_mode<synchronous>, transform_indices = @transform_2, window_bounds = array<i64: 1, 128>}, {pipeline_mode = #tpu.pipeline_mode<synchronous>, transform_indices = @transform_3, window_bounds = array<i64: 1, 128>}, {pipeline_mode = #tpu.pipeline_mode<synchronous>, transform_indices = @transform_4, window_bounds = array<i64: 1, 128>}, {pipeline_mode = #tpu.pipeline_mode<synchronous>, transform_indices = @transform_5, window_bounds = array<i64: 128, 16>}, {transform_indices = @transform_6, window_bounds = array<i64: 8, 16>}]} {
    %c0 = arith.constant 0 : index
    %c0_0 = arith.constant 0 : index
    %0 = vector.load %arg1[%c0, %c0_0] : memref<8x128xf32, #tpu.memory_space<vmem>>, vector<8x128xf32>
    %c0_1 = arith.constant 0 : index
    %c0_2 = arith.constant 0 : index
    %1 = vector.load %arg2[%c0_1, %c0_2] : memref<1x128xf32, #tpu.memory_space<vmem>>, vector<1x128xf32>
    %c0_3 = arith.constant 0 : index
    %c0_4 = arith.constant 0 : index
    %2 = vector.load %arg3[%c0_3, %c0_4] : memref<1x128xf32, #tpu.memory_space<vmem>>, vector<1x128xf32>
    %cst = arith.constant dense<0.000000e+00> : vector<8xf32>
    %3 = vector.multi_reduction <add>, %0, %cst [1] : vector<8x128xf32> to vector<8xf32>
    %4 = vector.shape_cast %3 : vector<8xf32> to vector<8x1xf32>
    %cst_5 = arith.constant 1.280000e+02 : f32
    %5 = vector.broadcast %cst_5 : f32 to vector<8x1xf32>
    %6 = arith.divf %4, %5 : vector<8x1xf32>
    %7 = vector.broadcast %6 : vector<8x1xf32> to vector<8x128xf32>
    %8 = arith.subf %0, %7 : vector<8x128xf32>
    %9 = arith.mulf %8, %8 : vector<8x128xf32>
    %cst_6 = arith.constant dense<0.000000e+00> : vector<8xf32>
    %10 = vector.multi_reduction <add>, %9, %cst_6 [1] : vector<8x128xf32> to vector<8xf32>
    %11 = vector.shape_cast %10 : vector<8xf32> to vector<8x1xf32>
    %cst_7 = arith.constant 1.280000e+02 : f32
    %12 = vector.broadcast %cst_7 : f32 to vector<8x1xf32>
    %13 = arith.divf %11, %12 : vector<8x1xf32>
    %cst_8 = arith.constant 9.99999974E-6 : f32
    %14 = vector.broadcast %cst_8 : f32 to vector<8x1xf32>
    %15 = arith.addf %13, %14 : vector<8x1xf32>
    %16 = math.rsqrt %15 : vector<8x1xf32>
    %17 = vector.broadcast %16 : vector<8x1xf32> to vector<8x128xf32>
    %18 = arith.mulf %8, %17 : vector<8x128xf32>
    %19 = vector.broadcast %1 : vector<1x128xf32> to vector<8x128xf32>
    %20 = arith.mulf %18, %19 : vector<8x128xf32>
    %21 = vector.broadcast %2 : vector<1x128xf32> to vector<8x128xf32>
    %22 = arith.addf %20, %21 : vector<8x128xf32>
    %c0_9 = arith.constant 0 : index
    %c0_10 = arith.constant 0 : index
    %23 = vector.load %arg4[%c0_9, %c0_10] : memref<1x128xf32, #tpu.memory_space<vmem>>, vector<1x128xf32>
    %c0_11 = arith.constant 0 : index
    %c0_12 = arith.constant 0 : index
    %24 = vector.load %arg5[%c0_11, %c0_12] : memref<1x128xf32, #tpu.memory_space<vmem>>, vector<1x128xf32>
    %cst_13 = arith.constant dense<0.000000e+00> : vector<8xf32>
    %25 = vector.multi_reduction <add>, %22, %cst_13 [1] : vector<8x128xf32> to vector<8xf32>
    %26 = vector.shape_cast %25 : vector<8xf32> to vector<8x1xf32>
    %cst_14 = arith.constant 1.280000e+02 : f32
    %27 = vector.broadcast %cst_14 : f32 to vector<8x1xf32>
    %28 = arith.divf %26, %27 : vector<8x1xf32>
    %29 = vector.broadcast %28 : vector<8x1xf32> to vector<8x128xf32>
    %30 = arith.subf %22, %29 : vector<8x128xf32>
    %31 = arith.mulf %30, %30 : vector<8x128xf32>
    %cst_15 = arith.constant dense<0.000000e+00> : vector<8xf32>
    %32 = vector.multi_reduction <add>, %31, %cst_15 [1] : vector<8x128xf32> to vector<8xf32>
    %33 = vector.shape_cast %32 : vector<8xf32> to vector<8x1xf32>
    %cst_16 = arith.constant 1.280000e+02 : f32
    %34 = vector.broadcast %cst_16 : f32 to vector<8x1xf32>
    %35 = arith.divf %33, %34 : vector<8x1xf32>
    %cst_17 = arith.constant 9.99999974E-6 : f32
    %36 = vector.broadcast %cst_17 : f32 to vector<8x1xf32>
    %37 = arith.addf %35, %36 : vector<8x1xf32>
    %38 = math.rsqrt %37 : vector<8x1xf32>
    %39 = vector.broadcast %38 : vector<8x1xf32> to vector<8x128xf32>
    %40 = arith.mulf %30, %39 : vector<8x128xf32>
    %41 = vector.broadcast %23 : vector<1x128xf32> to vector<8x128xf32>
    %42 = arith.mulf %40, %41 : vector<8x128xf32>
    %43 = vector.broadcast %24 : vector<1x128xf32> to vector<8x128xf32>
    %44 = arith.addf %42, %43 : vector<8x128xf32>
    %c0_18 = arith.constant 0 : index
    %c0_19 = arith.constant 0 : index
    %45 = vector.load %arg6[%c0_18, %c0_19] : memref<128x16xbf16, #tpu.memory_space<vmem>>, vector<128x16xbf16>
    %46 = arith.truncf %44 : vector<8x128xf32> to vector<8x128xbf16>
    %cst_20 = arith.constant dense<0.000000e+00> : vector<8x16xf32>
    %47 = tpu.matmul %46, %45, %cst_20 {dimension_numbers = #tpu.dot_dimension_numbers<[1], [0], [0], [1], [0, 0, 1, 1], [], []>} : vector<8x128xbf16>, vector<128x16xbf16>, vector<8x16xf32> -> vector<8x16xf32>
    %c0_21 = arith.constant 0 : index
    %c0_22 = arith.constant 0 : index
    %48 = vector.load %arg7[%c0_21, %c0_22] : memref<8x16xf32, #tpu.memory_space<vmem>>, vector<8x16xf32>
    tpu.vector_store %arg7[%c0_21, %c0_22], %47 {strides = array<i32>} : memref<8x16xf32, #tpu.memory_space<vmem>>, vector<8x16xf32>,
    return
  }
  func.func @transform_0(%arg0: i32) -> (i32, i32) {
    %c0_i32 = arith.constant 0 : i32
    %c0_i32_0 = arith.constant 0 : i32
    return %arg0, %c0_i32 : i32, i32
  }
  func.func @transform_1(%arg0: i32) -> (i32, i32) {
    %c0_i32 = arith.constant 0 : i32
    %c0_i32_0 = arith.constant 0 : i32
    %c0_i32_1 = arith.constant 0 : i32
    return %c0_i32, %c0_i32_0 : i32, i32
  }
  func.func @transform_2(%arg0: i32) -> (i32, i32) {
    %c0_i32 = arith.constant 0 : i32
    %c0_i32_0 = arith.constant 0 : i32
    %c0_i32_1 = arith.constant 0 : i32
    return %c0_i32, %c0_i32_0 : i32, i32
  }
  func.func @transform_3(%arg0: i32) -> (i32, i32) {
    %c0_i32 = arith.constant 0 : i32
    %c0_i32_0 = arith.constant 0 : i32
    %c0_i32_1 = arith.constant 0 : i32
    return %c0_i32, %c0_i32_0 : i32, i32
  }
  func.func @transform_4(%arg0: i32) -> (i32, i32) {
    %c0_i32 = arith.constant 0 : i32
    %c0_i32_0 = arith.constant 0 : i32
    %c0_i32_1 = arith.constant 0 : i32
    return %c0_i32, %c0_i32_0 : i32, i32
  }
  func.func @transform_5(%arg0: i32) -> (i32, i32) {
    %c0_i32 = arith.constant 0 : i32
    %c0_i32_0 = arith.constant 0 : i32
    %c0_i32_1 = arith.constant 0 : i32
    return %c0_i32, %c0_i32_0 : i32, i32
  }
  func.func @transform_6(%arg0: i32) -> (i32, i32) {
    %c0_i32 = arith.constant 0 : i32
    %c0_i32_0 = arith.constant 0 : i32
    return %arg0, %c0_i32 : i32, i32
  }
}

module attributes {stable_mosaic.version = 11 : i64} {
  func.func @down_kernel(%arg0: i32, %arg1: memref<8x128xf32, #tpu.memory_space<vmem>>, %arg2: memref<1x128xf32, #tpu.memory_space<vmem>>, %arg3: memref<1x128xf32, #tpu.memory_space<vmem>>, %arg4: memref<1x128xf32, #tpu.memory_space<vmem>>, %arg5: memref<1x128xf32, #tpu.memory_space<vmem>>, %arg6: memref<128x16xbf16, #tpu.memory_space<vmem>>, %arg7: memref<8x16xf32, #tpu.memory_space<vmem>>) attributes {dimension_semantics = [#tpu.dimension_semantics<parallel>], iteration_bounds = array<i64: 2>, scalar_prefetch = 0 : i64, scratch_operands = 0 : i64, tpu.core_type = #tpu.core_type<tc>, window_params = [{transform_indices = @transform_0, window_bounds = array<i64: 8, 128>}, {pipeline_mode = #tpu.pipeline_mode<synchronous>, transform_indices = @transform_1, window_bounds = array<i64: 1, 128>}, {pipeline_mode = #tpu.pipeline_mode<synchronous>, transform_indices = @transform_2, window_bounds = array<i64: 1, 128>}, {pipeline_mode = #tpu.pipeline_mode<synchronous>, transform_indices = @transform_3, window_bounds = array<i64: 1, 128>}, {pipeline_mode = #tpu.pipeline_mode<synchronous>, transform_indices = @transform_4, window_bounds = array<i64: 1, 128>}, {pipeline_mode = #tpu.pipeline_mode<synchronous>, transform_indices = @transform_5, window_bounds = array<i64: 128, 16>}, {transform_indices = @transform_6, window_bounds = array<i64: 8, 16>}]} {
    %c0 = arith.constant 0 : index
    %c0_0 = arith.constant 0 : index
    %0 = vector.load %arg1[%c0, %c0_0] : memref<8x128xf32, #tpu.memory_space<vmem>>, vector<8x128xf32>
    %c0_1 = arith.constant 0 : index
    %c0_2 = arith.constant 0 : index
    %1 = vector.load %arg2[%c0_1, %c0_2] : memref<1x128xf32, #tpu.memory_space<vmem>>, vector<1x128xf32>
    %c0_3 = arith.constant 0 : index
    %c0_4 = arith.constant 0 : index
    %2 = vector.load %arg3[%c0_3, %c0_4] : memref<1x128xf32, #tpu.memory_space<vmem>>, vector<1x128xf32>
    %cst = arith.constant dense<0.000000e+00> : vector<8xf32>
    %3 = vector.multi_reduction <add>, %0, %cst [1] : vector<8x128xf32> to vector<8xf32>
    %4 = vector.shape_cast %3 : vector<8xf32> to vector<8x1xf32>
    %cst_5 = arith.constant 1.280000e+02 : f32
    %5 = vector.broadcast %cst_5 : f32 to vector<8x1xf32>
    %6 = arith.divf %4, %5 : vector<8x1xf32>
    %7 = vector.broadcast %6 : vector<8x1xf32> to vector<8x128xf32>
    %8 = arith.subf %0, %7 : vector<8x128xf32>
    %9 = arith.mulf %8, %8 : vector<8x128xf32>
    %cst_6 = arith.constant dense<0.000000e+00> : vector<8xf32>
    %10 = vector.multi_reduction <add>, %9, %cst_6 [1] : vector<8x128xf32> to vector<8xf32>
    %11 = vector.shape_cast %10 : vector<8xf32> to vector<8x1xf32>
    %cst_7 = arith.constant 1.280000e+02 : f32
    %12 = vector.broadcast %cst_7 : f32 to vector<8x1xf32>
    %13 = arith.divf %11, %12 : vector<8x1xf32>
    %cst_8 = arith.constant 9.99999974E-6 : f32
    %14 = vector.broadcast %cst_8 : f32 to vector<8x1xf32>
    %15 = arith.addf %13, %14 : vector<8x1xf32>
    %16 = math.rsqrt %15 : vector<8x1xf32>
    %17 = vector.broadcast %16 : vector<8x1xf32> to vector<8x128xf32>
    %18 = arith.mulf %8, %17 : vector<8x128xf32>
    %19 = vector.broadcast %1 : vector<1x128xf32> to vector<8x128xf32>
    %20 = arith.mulf %18, %19 : vector<8x128xf32>
    %21 = vector.broadcast %2 : vector<1x128xf32> to vector<8x128xf32>
    %22 = arith.addf %20, %21 : vector<8x128xf32>
    %c0_9 = arith.constant 0 : index
    %c0_10 = arith.constant 0 : index
    %23 = vector.load %arg4[%c0_9, %c0_10] : memref<1x128xf32, #tpu.memory_space<vmem>>, vector<1x128xf32>
    %c0_11 = arith.constant 0 : index
    %c0_12 = arith.constant 0 : index
    %24 = vector.load %arg5[%c0_11, %c0_12] : memref<1x128xf32, #tpu.memory_space<vmem>>, vector<1x128xf32>
    %cst_13 = arith.constant dense<0.000000e+00> : vector<8xf32>
    %25 = vector.multi_reduction <add>, %22, %cst_13 [1] : vector<8x128xf32> to vector<8xf32>
    %26 = vector.shape_cast %25 : vector<8xf32> to vector<8x1xf32>
    %cst_14 = arith.constant 1.280000e+02 : f32
    %27 = vector.broadcast %cst_14 : f32 to vector<8x1xf32>
    %28 = arith.divf %26, %27 : vector<8x1xf32>
    %29 = vector.broadcast %28 : vector<8x1xf32> to vector<8x128xf32>
    %30 = arith.subf %22, %29 : vector<8x128xf32>
    %31 = arith.mulf %30, %30 : vector<8x128xf32>
    %cst_15 = arith.constant dense<0.000000e+00> : vector<8xf32>
    %32 = vector.multi_reduction <add>, %31, %cst_15 [1] : vector<8x128xf32> to vector<8xf32>
    %33 = vector.shape_cast %32 : vector<8xf32> to vector<8x1xf32>
    %cst_16 = arith.constant 1.280000e+02 : f32
    %34 = vector.broadcast %cst_16 : f32 to vector<8x1xf32>
    %35 = arith.divf %33, %34 : vector<8x1xf32>
    %cst_17 = arith.constant 9.99999974E-6 : f32
    %36 = vector.broadcast %cst_17 : f32 to vector<8x1xf32>
    %37 = arith.addf %35, %36 : vector<8x1xf32>
    %38 = math.rsqrt %37 : vector<8x1xf32>
    %39 = vector.broadcast %38 : vector<8x1xf32> to vector<8x128xf32>
    %40 = arith.mulf %30, %39 : vector<8x128xf32>
    %41 = vector.broadcast %23 : vector<1x128xf32> to vector<8x128xf32>
    %42 = arith.mulf %40, %41 : vector<8x128xf32>
    %43 = vector.broadcast %24 : vector<1x128xf32> to vector<8x128xf32>
    %44 = arith.addf %42, %43 : vector<8x128xf32>
    %c0_18 = arith.constant 0 : index
    %c0_19 = arith.constant 0 : index
    %45 = vector.load %arg6[%c0_18, %c0_19] : memref<128x16xbf16, #tpu.memory_space<vmem>>, vector<128x16xbf16>
    %46 = arith.truncf %44 : vector<8x128xf32> to vector<8x128xbf16>
    %cst_20 = arith.constant dense<0.000000e+00> : vector<8x16xf32>
    %47 = tpu.matmul %46, %45, %cst_20 {dimension_numbers = #tpu.dot_dimension_numbers<[1], [0], [0], [1], [0, 0, 1, 1], [], []>} : vector<8x128xbf16>, vector<128x16xbf16>, vector<8x16xf32> -> vector<8x16xf32>
    %c0_21 = arith.constant 0 : index
    %c0_22 = arith.constant 0 : index
    %48 = vector.load %arg7[%c0_21, %c0_22] : memref<8x16xf32, #tpu.memory_space<vmem>>, vector<8x16xf32>
    tpu.vector_store %arg7[%c0_21, %c0_22], %47 {strides = array<i32>} : memref<8x16xf32, #tpu.memory_space<vmem>>, vector<8x16xf32>,
    return
  }
  func.func @transform_0(%arg0: i32) -> (i32, i32) {
    %c0_i32 = arith.constant 0 : i32
    %c0_i32_0 = arith.constant 0 : i32
    return %arg0, %c0_i32 : i32, i32
  }
  func.func @transform_1(%arg0: i32) -> (i32, i32) {
    %c0_i32 = arith.constant 0 : i32
    %c0_i32_0 = arith.constant 0 : i32
    %c0_i32_1 = arith.constant 0 : i32
    return %c0_i32, %c0_i32_0 : i32, i32
  }
  func.func @transform_2(%arg0: i32) -> (i32, i32) {
    %c0_i32 = arith.constant 0 : i32
    %c0_i32_0 = arith.constant 0 : i32
    %c0_i32_1 = arith.constant 0 : i32
    return %c0_i32, %c0_i32_0 : i32, i32
  }
  func.func @transform_3(%arg0: i32) -> (i32, i32) {
    %c0_i32 = arith.constant 0 : i32
    %c0_i32_0 = arith.constant 0 : i32
    %c0_i32_1 = arith.constant 0 : i32
    return %c0_i32, %c0_i32_0 : i32, i32
  }
  func.func @transform_4(%arg0: i32) -> (i32, i32) {
    %c0_i32 = arith.constant 0 : i32
    %c0_i32_0 = arith.constant 0 : i32
    %c0_i32_1 = arith.constant 0 : i32
    return %c0_i32, %c0_i32_0 : i32, i32
  }
  func.func @transform_5(%arg0: i32) -> (i32, i32) {
    %c0_i32 = arith.constant 0 : i32
    %c0_i32_0 = arith.constant 0 : i32
    %c0_i32_1 = arith.constant 0 : i32
    return %c0_i32, %c0_i32_0 : i32, i32
  }
  func.func @transform_6(%arg0: i32) -> (i32, i32) {
    %c0_i32 = arith.constant 0 : i32
    %c0_i32_0 = arith.constant 0 : i32
    return %arg0, %c0_i32 : i32, i32
  }
}

module attributes {stable_mosaic.version = 11 : i64} {
  func.func @block_kernel(%arg0: i32, %arg1: memref<8x128xf32, #tpu.memory_space<vmem>>, %arg2: memref<8x16xf32, #tpu.memory_space<vmem>>, %arg3: memref<1x128xf32, #tpu.memory_space<vmem>>, %arg4: memref<1x128xf32, #tpu.memory_space<vmem>>, %arg5: memref<128x128xbf16, #tpu.memory_space<vmem>>, %arg6: memref<1x128xf32, #tpu.memory_space<vmem>>, %arg7: memref<1x128xf32, #tpu.memory_space<vmem>>, %arg8: memref<1x128xf32, #tpu.memory_space<vmem>>, %arg9: memref<16x128xbf16, #tpu.memory_space<vmem>>, %arg10: memref<128x256xbf16, #tpu.memory_space<vmem>>, %arg11: memref<1x256xf32, #tpu.memory_space<vmem>>, %arg12: memref<256x128xbf16, #tpu.memory_space<vmem>>, %arg13: memref<1x128xf32, #tpu.memory_space<vmem>>, %arg14: memref<128x256xbf16, #tpu.memory_space<vmem>>, %arg15: memref<1x256xf32, #tpu.memory_space<vmem>>, %arg16: memref<256x128xbf16, #tpu.memory_space<vmem>>, %arg17: memref<1x128xf32, #tpu.memory_space<vmem>>, %arg18: memref<8x128xf32, #tpu.memory_space<vmem>>) attributes {dimension_semantics = [#tpu.dimension_semantics<parallel>], iteration_bounds = array<i64: 2>, scalar_prefetch = 0 : i64, scratch_operands = 0 : i64, tpu.core_type = #tpu.core_type<tc>, window_params = [{transform_indices = @transform_0, window_bounds = array<i64: 8, 128>}, {transform_indices = @transform_1, window_bounds = array<i64: 8, 16>}, {pipeline_mode = #tpu.pipeline_mode<synchronous>, transform_indices = @transform_2, window_bounds = array<i64: 1, 128>}, {pipeline_mode = #tpu.pipeline_mode<synchronous>, transform_indices = @transform_3, window_bounds = array<i64: 1, 128>}, {pipeline_mode = #tpu.pipeline_mode<synchronous>, transform_indices = @transform_4, window_bounds = array<i64: 128, 128>}, {pipeline_mode = #tpu.pipeline_mode<synchronous>, transform_indices = @transform_5, window_bounds = array<i64: 1, 128>}, {pipeline_mode = #tpu.pipeline_mode<synchronous>, transform_indices = @transform_6, window_bounds = array<i64: 1, 128>}, {pipeline_mode = #tpu.pipeline_mode<synchronous>, transform_indices = @transform_7, window_bounds = array<i64: 1, 128>}, {pipeline_mode = #tpu.pipeline_mode<synchronous>, transform_indices = @transform_8, window_bounds = array<i64: 16, 128>}, {pipeline_mode = #tpu.pipeline_mode<synchronous>, transform_indices = @transform_9, window_bounds = array<i64: 128, 256>}, {pipeline_mode = #tpu.pipeline_mode<synchronous>, transform_indices = @transform_10, window_bounds = array<i64: 1, 256>}, {pipeline_mode = #tpu.pipeline_mode<synchronous>, transform_indices = @transform_11, window_bounds = array<i64: 256, 128>}, {pipeline_mode = #tpu.pipeline_mode<synchronous>, transform_indices = @transform_12, window_bounds = array<i64: 1, 128>}, {pipeline_mode = #tpu.pipeline_mode<synchronous>, transform_indices = @transform_13, window_bounds = array<i64: 128, 256>}, {pipeline_mode = #tpu.pipeline_mode<synchronous>, transform_indices = @transform_14, window_bounds = array<i64: 1, 256>}, {pipeline_mode = #tpu.pipeline_mode<synchronous>, transform_indices = @transform_15, window_bounds = array<i64: 256, 128>}, {pipeline_mode = #tpu.pipeline_mode<synchronous>, transform_indices = @transform_16, window_bounds = array<i64: 1, 128>}, {transform_indices = @transform_17, window_bounds = array<i64: 8, 128>}]} {
    %c0 = arith.constant 0 : index
    %c0_0 = arith.constant 0 : index
    %0 = vector.load %arg1[%c0, %c0_0] : memref<8x128xf32, #tpu.memory_space<vmem>>, vector<8x128xf32>
    %c0_1 = arith.constant 0 : index
    %c0_2 = arith.constant 0 : index
    %1 = vector.load %arg3[%c0_1, %c0_2] : memref<1x128xf32, #tpu.memory_space<vmem>>, vector<1x128xf32>
    %c0_3 = arith.constant 0 : index
    %c0_4 = arith.constant 0 : index
    %2 = vector.load %arg4[%c0_3, %c0_4] : memref<1x128xf32, #tpu.memory_space<vmem>>, vector<1x128xf32>
    %cst = arith.constant dense<0.000000e+00> : vector<8xf32>
    %3 = vector.multi_reduction <add>, %0, %cst [1] : vector<8x128xf32> to vector<8xf32>
    %4 = vector.shape_cast %3 : vector<8xf32> to vector<8x1xf32>
    %cst_5 = arith.constant 1.280000e+02 : f32
    %5 = vector.broadcast %cst_5 : f32 to vector<8x1xf32>
    %6 = arith.divf %4, %5 : vector<8x1xf32>
    %7 = vector.broadcast %6 : vector<8x1xf32> to vector<8x128xf32>
    %8 = arith.subf %0, %7 : vector<8x128xf32>
    %9 = arith.mulf %8, %8 : vector<8x128xf32>
    %cst_6 = arith.constant dense<0.000000e+00> : vector<8xf32>
    %10 = vector.multi_reduction <add>, %9, %cst_6 [1] : vector<8x128xf32> to vector<8xf32>
    %11 = vector.shape_cast %10 : vector<8xf32> to vector<8x1xf32>
    %cst_7 = arith.constant 1.280000e+02 : f32
    %12 = vector.broadcast %cst_7 : f32 to vector<8x1xf32>
    %13 = arith.divf %11, %12 : vector<8x1xf32>
    %cst_8 = arith.constant 9.99999974E-6 : f32
    %14 = vector.broadcast %cst_8 : f32 to vector<8x1xf32>
    %15 = arith.addf %13, %14 : vector<8x1xf32>
    %16 = math.rsqrt %15 : vector<8x1xf32>
    %17 = vector.broadcast %16 : vector<8x1xf32> to vector<8x128xf32>
    %18 = arith.mulf %8, %17 : vector<8x128xf32>
    %19 = vector.broadcast %1 : vector<1x128xf32> to vector<8x128xf32>
    %20 = arith.mulf %18, %19 : vector<8x128xf32>
    %21 = vector.broadcast %2 : vector<1x128xf32> to vector<8x128xf32>
    %22 = arith.addf %20, %21 : vector<8x128xf32>
    %c0_9 = arith.constant 0 : index
    %c0_10 = arith.constant 0 : index
    %23 = vector.load %arg5[%c0_9, %c0_10] : memref<128x128xbf16, #tpu.memory_space<vmem>>, vector<128x128xbf16>
    %24 = arith.truncf %22 : vector<8x128xf32> to vector<8x128xbf16>
    %cst_11 = arith.constant dense<0.000000e+00> : vector<8x128xf32>
    %25 = tpu.matmul %24, %23, %cst_11 {dimension_numbers = #tpu.dot_dimension_numbers<[1], [0], [0], [1], [0, 0, 1, 1], [], []>} : vector<8x128xbf16>, vector<128x128xbf16>, vector<8x128xf32> -> vector<8x128xf32>
    %c0_12 = arith.constant 0 : index
    %c0_13 = arith.constant 0 : index
    %26 = vector.load %arg6[%c0_12, %c0_13] : memref<1x128xf32, #tpu.memory_space<vmem>>, vector<1x128xf32>
    %27 = vector.broadcast %26 : vector<1x128xf32> to vector<8x128xf32>
    %28 = arith.addf %25, %27 : vector<8x128xf32>
    %c0_14 = arith.constant 0 : index
    %c0_15 = arith.constant 0 : index
    %29 = vector.load %arg2[%c0_14, %c0_15] : memref<8x16xf32, #tpu.memory_space<vmem>>, vector<8x16xf32>
    %c0_16 = arith.constant 0 : index
    %c0_17 = arith.constant 0 : index
    %30 = vector.load %arg9[%c0_16, %c0_17] : memref<16x128xbf16, #tpu.memory_space<vmem>>, vector<16x128xbf16>
    %31 = arith.truncf %29 : vector<8x16xf32> to vector<8x16xbf16>
    %cst_18 = arith.constant dense<0.000000e+00> : vector<8x128xf32>
    %32 = tpu.matmul %31, %30, %cst_18 {dimension_numbers = #tpu.dot_dimension_numbers<[1], [0], [0], [1], [0, 0, 1, 1], [], []>} : vector<8x16xbf16>, vector<16x128xbf16>, vector<8x128xf32> -> vector<8x128xf32>
    %33 = arith.addf %32, %22 : vector<8x128xf32>
    %c0_19 = arith.constant 0 : index
    %c0_20 = arith.constant 0 : index
    %34 = vector.load %arg7[%c0_19, %c0_20] : memref<1x128xf32, #tpu.memory_space<vmem>>, vector<1x128xf32>
    %c0_21 = arith.constant 0 : index
    %c0_22 = arith.constant 0 : index
    %35 = vector.load %arg8[%c0_21, %c0_22] : memref<1x128xf32, #tpu.memory_space<vmem>>, vector<1x128xf32>
    %cst_23 = arith.constant dense<0.000000e+00> : vector<8xf32>
    %36 = vector.multi_reduction <add>, %33, %cst_23 [1] : vector<8x128xf32> to vector<8xf32>
    %37 = vector.shape_cast %36 : vector<8xf32> to vector<8x1xf32>
    %cst_24 = arith.constant 1.280000e+02 : f32
    %38 = vector.broadcast %cst_24 : f32 to vector<8x1xf32>
    %39 = arith.divf %37, %38 : vector<8x1xf32>
    %40 = vector.broadcast %39 : vector<8x1xf32> to vector<8x128xf32>
    %41 = arith.subf %33, %40 : vector<8x128xf32>
    %42 = arith.mulf %41, %41 : vector<8x128xf32>
    %cst_25 = arith.constant dense<0.000000e+00> : vector<8xf32>
    %43 = vector.multi_reduction <add>, %42, %cst_25 [1] : vector<8x128xf32> to vector<8xf32>
    %44 = vector.shape_cast %43 : vector<8xf32> to vector<8x1xf32>
    %cst_26 = arith.constant 1.280000e+02 : f32
    %45 = vector.broadcast %cst_26 : f32 to vector<8x1xf32>
    %46 = arith.divf %44, %45 : vector<8x1xf32>
    %cst_27 = arith.constant 9.99999974E-6 : f32
    %47 = vector.broadcast %cst_27 : f32 to vector<8x1xf32>
    %48 = arith.addf %46, %47 : vector<8x1xf32>
    %49 = math.rsqrt %48 : vector<8x1xf32>
    %50 = vector.broadcast %49 : vector<8x1xf32> to vector<8x128xf32>
    %51 = arith.mulf %41, %50 : vector<8x128xf32>
    %52 = vector.broadcast %34 : vector<1x128xf32> to vector<8x128xf32>
    %53 = arith.mulf %51, %52 : vector<8x128xf32>
    %54 = vector.broadcast %35 : vector<1x128xf32> to vector<8x128xf32>
    %55 = arith.addf %53, %54 : vector<8x128xf32>
    %c0_28 = arith.constant 0 : index
    %c0_29 = arith.constant 0 : index
    %56 = vector.load %arg10[%c0_28, %c0_29] : memref<128x256xbf16, #tpu.memory_space<vmem>>, vector<128x256xbf16>
    %c0_30 = arith.constant 0 : index
    %c0_31 = arith.constant 0 : index
    %57 = vector.load %arg11[%c0_30, %c0_31] : memref<1x256xf32, #tpu.memory_space<vmem>>, vector<1x256xf32>
    %c0_32 = arith.constant 0 : index
    %c0_33 = arith.constant 0 : index
    %58 = vector.load %arg12[%c0_32, %c0_33] : memref<256x128xbf16, #tpu.memory_space<vmem>>, vector<256x128xbf16>
    %c0_34 = arith.constant 0 : index
    %c0_35 = arith.constant 0 : index
    %59 = vector.load %arg13[%c0_34, %c0_35] : memref<1x128xf32, #tpu.memory_space<vmem>>, vector<1x128xf32>
    %60 = arith.truncf %55 : vector<8x128xf32> to vector<8x128xbf16>
    %cst_36 = arith.constant dense<0.000000e+00> : vector<8x256xf32>
    %61 = tpu.matmul %60, %56, %cst_36 {dimension_numbers = #tpu.dot_dimension_numbers<[1], [0], [0], [1], [0, 0, 1, 1], [], []>} : vector<8x128xbf16>, vector<128x256xbf16>, vector<8x256xf32> -> vector<8x256xf32>
    %62 = vector.broadcast %57 : vector<1x256xf32> to vector<8x256xf32>
    %63 = arith.addf %61, %62 : vector<8x256xf32>
    %cst_37 = arith.constant 5.000000e-01 : f32
    %64 = vector.broadcast %cst_37 : f32 to vector<8x256xf32>
    %65 = arith.mulf %64, %63 : vector<8x256xf32>
    %cst_38 = arith.constant 0.707106769 : f32
    %66 = vector.broadcast %cst_38 : f32 to vector<8x256xf32>
    %67 = arith.mulf %63, %66 : vector<8x256xf32>
    %68 = math.erf %67 : vector<8x256xf32>
    %cst_39 = arith.constant 1.000000e+00 : f32
    %69 = vector.broadcast %cst_39 : f32 to vector<8x256xf32>
    %70 = arith.addf %69, %68 : vector<8x256xf32>
    %71 = arith.mulf %65, %70 : vector<8x256xf32>
    %72 = arith.truncf %71 : vector<8x256xf32> to vector<8x256xbf16>
    %cst_40 = arith.constant dense<0.000000e+00> : vector<8x128xf32>
    %73 = tpu.matmul %72, %58, %cst_40 {dimension_numbers = #tpu.dot_dimension_numbers<[1], [0], [0], [1], [0, 0, 1, 1], [], []>} : vector<8x256xbf16>, vector<256x128xbf16>, vector<8x128xf32> -> vector<8x128xf32>
    %74 = vector.broadcast %59 : vector<1x128xf32> to vector<8x128xf32>
    %75 = arith.addf %73, %74 : vector<8x128xf32>
    %76 = arith.addf %75, %33 : vector<8x128xf32>
    %77 = arith.mulf %28, %76 : vector<8x128xf32>
    %78 = arith.addf %77, %0 : vector<8x128xf32>
    %c0_41 = arith.constant 0 : index
    %c0_42 = arith.constant 0 : index
    %79 = vector.load %arg3[%c0_41, %c0_42] : memref<1x128xf32, #tpu.memory_space<vmem>>, vector<1x128xf32>
    %c0_43 = arith.constant 0 : index
    %c0_44 = arith.constant 0 : index
    %80 = vector.load %arg4[%c0_43, %c0_44] : memref<1x128xf32, #tpu.memory_space<vmem>>, vector<1x128xf32>
    %cst_45 = arith.constant dense<0.000000e+00> : vector<8xf32>
    %81 = vector.multi_reduction <add>, %78, %cst_45 [1] : vector<8x128xf32> to vector<8xf32>
    %82 = vector.shape_cast %81 : vector<8xf32> to vector<8x1xf32>
    %cst_46 = arith.constant 1.280000e+02 : f32
    %83 = vector.broadcast %cst_46 : f32 to vector<8x1xf32>
    %84 = arith.divf %82, %83 : vector<8x1xf32>
    %85 = vector.broadcast %84 : vector<8x1xf32> to vector<8x128xf32>
    %86 = arith.subf %78, %85 : vector<8x128xf32>
    %87 = arith.mulf %86, %86 : vector<8x128xf32>
    %cst_47 = arith.constant dense<0.000000e+00> : vector<8xf32>
    %88 = vector.multi_reduction <add>, %87, %cst_47 [1] : vector<8x128xf32> to vector<8xf32>
    %89 = vector.shape_cast %88 : vector<8xf32> to vector<8x1xf32>
    %cst_48 = arith.constant 1.280000e+02 : f32
    %90 = vector.broadcast %cst_48 : f32 to vector<8x1xf32>
    %91 = arith.divf %89, %90 : vector<8x1xf32>
    %cst_49 = arith.constant 9.99999974E-6 : f32
    %92 = vector.broadcast %cst_49 : f32 to vector<8x1xf32>
    %93 = arith.addf %91, %92 : vector<8x1xf32>
    %94 = math.rsqrt %93 : vector<8x1xf32>
    %95 = vector.broadcast %94 : vector<8x1xf32> to vector<8x128xf32>
    %96 = arith.mulf %86, %95 : vector<8x128xf32>
    %97 = vector.broadcast %79 : vector<1x128xf32> to vector<8x128xf32>
    %98 = arith.mulf %96, %97 : vector<8x128xf32>
    %99 = vector.broadcast %80 : vector<1x128xf32> to vector<8x128xf32>
    %100 = arith.addf %98, %99 : vector<8x128xf32>
    %c0_50 = arith.constant 0 : index
    %c0_51 = arith.constant 0 : index
    %101 = vector.load %arg14[%c0_50, %c0_51] : memref<128x256xbf16, #tpu.memory_space<vmem>>, vector<128x256xbf16>
    %c0_52 = arith.constant 0 : index
    %c0_53 = arith.constant 0 : index
    %102 = vector.load %arg15[%c0_52, %c0_53] : memref<1x256xf32, #tpu.memory_space<vmem>>, vector<1x256xf32>
    %c0_54 = arith.constant 0 : index
    %c0_55 = arith.constant 0 : index
    %103 = vector.load %arg16[%c0_54, %c0_55] : memref<256x128xbf16, #tpu.memory_space<vmem>>, vector<256x128xbf16>
    %c0_56 = arith.constant 0 : index
    %c0_57 = arith.constant 0 : index
    %104 = vector.load %arg17[%c0_56, %c0_57] : memref<1x128xf32, #tpu.memory_space<vmem>>, vector<1x128xf32>
    %105 = arith.truncf %100 : vector<8x128xf32> to vector<8x128xbf16>
    %cst_58 = arith.constant dense<0.000000e+00> : vector<8x256xf32>
    %106 = tpu.matmul %105, %101, %cst_58 {dimension_numbers = #tpu.dot_dimension_numbers<[1], [0], [0], [1], [0, 0, 1, 1], [], []>} : vector<8x128xbf16>, vector<128x256xbf16>, vector<8x256xf32> -> vector<8x256xf32>
    %107 = vector.broadcast %102 : vector<1x256xf32> to vector<8x256xf32>
    %108 = arith.addf %106, %107 : vector<8x256xf32>
    %cst_59 = arith.constant 5.000000e-01 : f32
    %109 = vector.broadcast %cst_59 : f32 to vector<8x256xf32>
    %110 = arith.mulf %109, %108 : vector<8x256xf32>
    %cst_60 = arith.constant 0.707106769 : f32
    %111 = vector.broadcast %cst_60 : f32 to vector<8x256xf32>
    %112 = arith.mulf %108, %111 : vector<8x256xf32>
    %113 = math.erf %112 : vector<8x256xf32>
    %cst_61 = arith.constant 1.000000e+00 : f32
    %114 = vector.broadcast %cst_61 : f32 to vector<8x256xf32>
    %115 = arith.addf %114, %113 : vector<8x256xf32>
    %116 = arith.mulf %110, %115 : vector<8x256xf32>
    %117 = arith.truncf %116 : vector<8x256xf32> to vector<8x256xbf16>
    %cst_62 = arith.constant dense<0.000000e+00> : vector<8x128xf32>
    %118 = tpu.matmul %117, %103, %cst_62 {dimension_numbers = #tpu.dot_dimension_numbers<[1], [0], [0], [1], [0, 0, 1, 1], [], []>} : vector<8x256xbf16>, vector<256x128xbf16>, vector<8x128xf32> -> vector<8x128xf32>
    %119 = vector.broadcast %104 : vector<1x128xf32> to vector<8x128xf32>
    %120 = arith.addf %118, %119 : vector<8x128xf32>
    %121 = arith.addf %120, %78 : vector<8x128xf32>
    %c0_63 = arith.constant 0 : index
    %c0_64 = arith.constant 0 : index
    %122 = vector.load %arg18[%c0_63, %c0_64] : memref<8x128xf32, #tpu.memory_space<vmem>>, vector<8x128xf32>
    tpu.vector_store %arg18[%c0_63, %c0_64], %121 {strides = array<i32>} : memref<8x128xf32, #tpu.memory_space<vmem>>, vector<8x128xf32>,
    return
  }
  func.func @transform_0(%arg0: i32) -> (i32, i32) {
    %c0_i32 = arith.constant 0 : i32
    %c0_i32_0 = arith.constant 0 : i32
    return %arg0, %c0_i32 : i32, i32
  }
  func.func @transform_1(%arg0: i32) -> (i32, i32) {
    %c0_i32 = arith.constant 0 : i32
    %c0_i32_0 = arith.constant 0 : i32
    return %arg0, %c0_i32 : i32, i32
  }
  func.func @transform_2(%arg0: i32) -> (i32, i32) {
    %c0_i32 = arith.constant 0 : i32
    %c0_i32_0 = arith.constant 0 : i32
    %c0_i32_1 = arith.constant 0 : i32
    return %c0_i32, %c0_i32_0 : i32, i32
  }
  func.func @transform_3(%arg0: i32) -> (i32, i32) {
    %c0_i32 = arith.constant 0 : i32
    %c0_i32_0 = arith.constant 0 : i32
    %c0_i32_1 = arith.constant 0 : i32
    return %c0_i32, %c0_i32_0 : i32, i32
  }
  func.func @transform_4(%arg0: i32) -> (i32, i32) {
    %c0_i32 = arith.constant 0 : i32
    %c0_i32_0 = arith.constant 0 : i32
    %c0_i32_1 = arith.constant 0 : i32
    return %c0_i32, %c0_i32_0 : i32, i32
  }
  func.func @transform_5(%arg0: i32) -> (i32, i32) {
    %c0_i32 = arith.constant 0 : i32
    %c0_i32_0 = arith.constant 0 : i32
    %c0_i32_1 = arith.constant 0 : i32
    return %c0_i32, %c0_i32_0 : i32, i32
  }
  func.func @transform_6(%arg0: i32) -> (i32, i32) {
    %c0_i32 = arith.constant 0 : i32
    %c0_i32_0 = arith.constant 0 : i32
    %c0_i32_1 = arith.constant 0 : i32
    return %c0_i32, %c0_i32_0 : i32, i32
  }
  func.func @transform_7(%arg0: i32) -> (i32, i32) {
    %c0_i32 = arith.constant 0 : i32
    %c0_i32_0 = arith.constant 0 : i32
    %c0_i32_1 = arith.constant 0 : i32
    return %c0_i32, %c0_i32_0 : i32, i32
  }
  func.func @transform_8(%arg0: i32) -> (i32, i32) {
    %c0_i32 = arith.constant 0 : i32
    %c0_i32_0 = arith.constant 0 : i32
    %c0_i32_1 = arith.constant 0 : i32
    return %c0_i32, %c0_i32_0 : i32, i32
  }
  func.func @transform_9(%arg0: i32) -> (i32, i32) {
    %c0_i32 = arith.constant 0 : i32
    %c0_i32_0 = arith.constant 0 : i32
    %c0_i32_1 = arith.constant 0 : i32
    return %c0_i32, %c0_i32_0 : i32, i32
  }
  func.func @transform_10(%arg0: i32) -> (i32, i32) {
    %c0_i32 = arith.constant 0 : i32
    %c0_i32_0 = arith.constant 0 : i32
    %c0_i32_1 = arith.constant 0 : i32
    return %c0_i32, %c0_i32_0 : i32, i32
  }
  func.func @transform_11(%arg0: i32) -> (i32, i32) {
    %c0_i32 = arith.constant 0 : i32
    %c0_i32_0 = arith.constant 0 : i32
    %c0_i32_1 = arith.constant 0 : i32
    return %c0_i32, %c0_i32_0 : i32, i32
  }
  func.func @transform_12(%arg0: i32) -> (i32, i32) {
    %c0_i32 = arith.constant 0 : i32
    %c0_i32_0 = arith.constant 0 : i32
    %c0_i32_1 = arith.constant 0 : i32
    return %c0_i32, %c0_i32_0 : i32, i32
  }
  func.func @transform_13(%arg0: i32) -> (i32, i32) {
    %c0_i32 = arith.constant 0 : i32
    %c0_i32_0 = arith.constant 0 : i32
    %c0_i32_1 = arith.constant 0 : i32
    return %c0_i32, %c0_i32_0 : i32, i32
  }
  func.func @transform_14(%arg0: i32) -> (i32, i32) {
    %c0_i32 = arith.constant 0 : i32
    %c0_i32_0 = arith.constant 0 : i32
    %c0_i32_1 = arith.constant 0 : i32
    return %c0_i32, %c0_i32_0 : i32, i32
  }
  func.func @transform_15(%arg0: i32) -> (i32, i32) {
    %c0_i32 = arith.constant 0 : i32
    %c0_i32_0 = arith.constant 0 : i32
    %c0_i32_1 = arith.constant 0 : i32
    return %c0_i32, %c0_i32_0 : i32, i32
  }
  func.func @transform_16(%arg0: i32) -> (i32, i32) {
    %c0_i32 = arith.constant 0 : i32
    %c0_i32_0 = arith.constant 0 : i32
    %c0_i32_1 = arith.constant 0 : i32
    return %c0_i32, %c0_i32_0 : i32, i32
  }
  func.func @transform_17(%arg0: i32) -> (i32, i32) {
    %c0_i32 = arith.constant 0 : i32
    %c0_i32_0 = arith.constant 0 : i32
    return %arg0, %c0_i32 : i32, i32
  }
}

module attributes {stable_mosaic.version = 11 : i64} {
  func.func @block_kernel(%arg0: i32, %arg1: memref<8x128xf32, #tpu.memory_space<vmem>>, %arg2: memref<8x16xf32, #tpu.memory_space<vmem>>, %arg3: memref<1x128xf32, #tpu.memory_space<vmem>>, %arg4: memref<1x128xf32, #tpu.memory_space<vmem>>, %arg5: memref<128x128xbf16, #tpu.memory_space<vmem>>, %arg6: memref<1x128xf32, #tpu.memory_space<vmem>>, %arg7: memref<1x128xf32, #tpu.memory_space<vmem>>, %arg8: memref<1x128xf32, #tpu.memory_space<vmem>>, %arg9: memref<16x128xbf16, #tpu.memory_space<vmem>>, %arg10: memref<128x256xbf16, #tpu.memory_space<vmem>>, %arg11: memref<1x256xf32, #tpu.memory_space<vmem>>, %arg12: memref<256x128xbf16, #tpu.memory_space<vmem>>, %arg13: memref<1x128xf32, #tpu.memory_space<vmem>>, %arg14: memref<128x256xbf16, #tpu.memory_space<vmem>>, %arg15: memref<1x256xf32, #tpu.memory_space<vmem>>, %arg16: memref<256x128xbf16, #tpu.memory_space<vmem>>, %arg17: memref<1x128xf32, #tpu.memory_space<vmem>>, %arg18: memref<8x128xf32, #tpu.memory_space<vmem>>) attributes {dimension_semantics = [#tpu.dimension_semantics<parallel>], iteration_bounds = array<i64: 2>, scalar_prefetch = 0 : i64, scratch_operands = 0 : i64, tpu.core_type = #tpu.core_type<tc>, window_params = [{transform_indices = @transform_0, window_bounds = array<i64: 8, 128>}, {transform_indices = @transform_1, window_bounds = array<i64: 8, 16>}, {pipeline_mode = #tpu.pipeline_mode<synchronous>, transform_indices = @transform_2, window_bounds = array<i64: 1, 128>}, {pipeline_mode = #tpu.pipeline_mode<synchronous>, transform_indices = @transform_3, window_bounds = array<i64: 1, 128>}, {pipeline_mode = #tpu.pipeline_mode<synchronous>, transform_indices = @transform_4, window_bounds = array<i64: 128, 128>}, {pipeline_mode = #tpu.pipeline_mode<synchronous>, transform_indices = @transform_5, window_bounds = array<i64: 1, 128>}, {pipeline_mode = #tpu.pipeline_mode<synchronous>, transform_indices = @transform_6, window_bounds = array<i64: 1, 128>}, {pipeline_mode = #tpu.pipeline_mode<synchronous>, transform_indices = @transform_7, window_bounds = array<i64: 1, 128>}, {pipeline_mode = #tpu.pipeline_mode<synchronous>, transform_indices = @transform_8, window_bounds = array<i64: 16, 128>}, {pipeline_mode = #tpu.pipeline_mode<synchronous>, transform_indices = @transform_9, window_bounds = array<i64: 128, 256>}, {pipeline_mode = #tpu.pipeline_mode<synchronous>, transform_indices = @transform_10, window_bounds = array<i64: 1, 256>}, {pipeline_mode = #tpu.pipeline_mode<synchronous>, transform_indices = @transform_11, window_bounds = array<i64: 256, 128>}, {pipeline_mode = #tpu.pipeline_mode<synchronous>, transform_indices = @transform_12, window_bounds = array<i64: 1, 128>}, {pipeline_mode = #tpu.pipeline_mode<synchronous>, transform_indices = @transform_13, window_bounds = array<i64: 128, 256>}, {pipeline_mode = #tpu.pipeline_mode<synchronous>, transform_indices = @transform_14, window_bounds = array<i64: 1, 256>}, {pipeline_mode = #tpu.pipeline_mode<synchronous>, transform_indices = @transform_15, window_bounds = array<i64: 256, 128>}, {pipeline_mode = #tpu.pipeline_mode<synchronous>, transform_indices = @transform_16, window_bounds = array<i64: 1, 128>}, {transform_indices = @transform_17, window_bounds = array<i64: 8, 128>}]} {
    %c0 = arith.constant 0 : index
    %c0_0 = arith.constant 0 : index
    %0 = vector.load %arg1[%c0, %c0_0] : memref<8x128xf32, #tpu.memory_space<vmem>>, vector<8x128xf32>
    %c0_1 = arith.constant 0 : index
    %c0_2 = arith.constant 0 : index
    %1 = vector.load %arg3[%c0_1, %c0_2] : memref<1x128xf32, #tpu.memory_space<vmem>>, vector<1x128xf32>
    %c0_3 = arith.constant 0 : index
    %c0_4 = arith.constant 0 : index
    %2 = vector.load %arg4[%c0_3, %c0_4] : memref<1x128xf32, #tpu.memory_space<vmem>>, vector<1x128xf32>
    %cst = arith.constant dense<0.000000e+00> : vector<8xf32>
    %3 = vector.multi_reduction <add>, %0, %cst [1] : vector<8x128xf32> to vector<8xf32>
    %4 = vector.shape_cast %3 : vector<8xf32> to vector<8x1xf32>
    %cst_5 = arith.constant 1.280000e+02 : f32
    %5 = vector.broadcast %cst_5 : f32 to vector<8x1xf32>
    %6 = arith.divf %4, %5 : vector<8x1xf32>
    %7 = vector.broadcast %6 : vector<8x1xf32> to vector<8x128xf32>
    %8 = arith.subf %0, %7 : vector<8x128xf32>
    %9 = arith.mulf %8, %8 : vector<8x128xf32>
    %cst_6 = arith.constant dense<0.000000e+00> : vector<8xf32>
    %10 = vector.multi_reduction <add>, %9, %cst_6 [1] : vector<8x128xf32> to vector<8xf32>
    %11 = vector.shape_cast %10 : vector<8xf32> to vector<8x1xf32>
    %cst_7 = arith.constant 1.280000e+02 : f32
    %12 = vector.broadcast %cst_7 : f32 to vector<8x1xf32>
    %13 = arith.divf %11, %12 : vector<8x1xf32>
    %cst_8 = arith.constant 9.99999974E-6 : f32
    %14 = vector.broadcast %cst_8 : f32 to vector<8x1xf32>
    %15 = arith.addf %13, %14 : vector<8x1xf32>
    %16 = math.rsqrt %15 : vector<8x1xf32>
    %17 = vector.broadcast %16 : vector<8x1xf32> to vector<8x128xf32>
    %18 = arith.mulf %8, %17 : vector<8x128xf32>
    %19 = vector.broadcast %1 : vector<1x128xf32> to vector<8x128xf32>
    %20 = arith.mulf %18, %19 : vector<8x128xf32>
    %21 = vector.broadcast %2 : vector<1x128xf32> to vector<8x128xf32>
    %22 = arith.addf %20, %21 : vector<8x128xf32>
    %c0_9 = arith.constant 0 : index
    %c0_10 = arith.constant 0 : index
    %23 = vector.load %arg5[%c0_9, %c0_10] : memref<128x128xbf16, #tpu.memory_space<vmem>>, vector<128x128xbf16>
    %24 = arith.truncf %22 : vector<8x128xf32> to vector<8x128xbf16>
    %cst_11 = arith.constant dense<0.000000e+00> : vector<8x128xf32>
    %25 = tpu.matmul %24, %23, %cst_11 {dimension_numbers = #tpu.dot_dimension_numbers<[1], [0], [0], [1], [0, 0, 1, 1], [], []>} : vector<8x128xbf16>, vector<128x128xbf16>, vector<8x128xf32> -> vector<8x128xf32>
    %c0_12 = arith.constant 0 : index
    %c0_13 = arith.constant 0 : index
    %26 = vector.load %arg6[%c0_12, %c0_13] : memref<1x128xf32, #tpu.memory_space<vmem>>, vector<1x128xf32>
    %27 = vector.broadcast %26 : vector<1x128xf32> to vector<8x128xf32>
    %28 = arith.addf %25, %27 : vector<8x128xf32>
    %c0_14 = arith.constant 0 : index
    %c0_15 = arith.constant 0 : index
    %29 = vector.load %arg2[%c0_14, %c0_15] : memref<8x16xf32, #tpu.memory_space<vmem>>, vector<8x16xf32>
    %c0_16 = arith.constant 0 : index
    %c0_17 = arith.constant 0 : index
    %30 = vector.load %arg9[%c0_16, %c0_17] : memref<16x128xbf16, #tpu.memory_space<vmem>>, vector<16x128xbf16>
    %31 = arith.truncf %29 : vector<8x16xf32> to vector<8x16xbf16>
    %cst_18 = arith.constant dense<0.000000e+00> : vector<8x128xf32>
    %32 = tpu.matmul %31, %30, %cst_18 {dimension_numbers = #tpu.dot_dimension_numbers<[1], [0], [0], [1], [0, 0, 1, 1], [], []>} : vector<8x16xbf16>, vector<16x128xbf16>, vector<8x128xf32> -> vector<8x128xf32>
    %33 = arith.addf %32, %22 : vector<8x128xf32>
    %c0_19 = arith.constant 0 : index
    %c0_20 = arith.constant 0 : index
    %34 = vector.load %arg7[%c0_19, %c0_20] : memref<1x128xf32, #tpu.memory_space<vmem>>, vector<1x128xf32>
    %c0_21 = arith.constant 0 : index
    %c0_22 = arith.constant 0 : index
    %35 = vector.load %arg8[%c0_21, %c0_22] : memref<1x128xf32, #tpu.memory_space<vmem>>, vector<1x128xf32>
    %cst_23 = arith.constant dense<0.000000e+00> : vector<8xf32>
    %36 = vector.multi_reduction <add>, %33, %cst_23 [1] : vector<8x128xf32> to vector<8xf32>
    %37 = vector.shape_cast %36 : vector<8xf32> to vector<8x1xf32>
    %cst_24 = arith.constant 1.280000e+02 : f32
    %38 = vector.broadcast %cst_24 : f32 to vector<8x1xf32>
    %39 = arith.divf %37, %38 : vector<8x1xf32>
    %40 = vector.broadcast %39 : vector<8x1xf32> to vector<8x128xf32>
    %41 = arith.subf %33, %40 : vector<8x128xf32>
    %42 = arith.mulf %41, %41 : vector<8x128xf32>
    %cst_25 = arith.constant dense<0.000000e+00> : vector<8xf32>
    %43 = vector.multi_reduction <add>, %42, %cst_25 [1] : vector<8x128xf32> to vector<8xf32>
    %44 = vector.shape_cast %43 : vector<8xf32> to vector<8x1xf32>
    %cst_26 = arith.constant 1.280000e+02 : f32
    %45 = vector.broadcast %cst_26 : f32 to vector<8x1xf32>
    %46 = arith.divf %44, %45 : vector<8x1xf32>
    %cst_27 = arith.constant 9.99999974E-6 : f32
    %47 = vector.broadcast %cst_27 : f32 to vector<8x1xf32>
    %48 = arith.addf %46, %47 : vector<8x1xf32>
    %49 = math.rsqrt %48 : vector<8x1xf32>
    %50 = vector.broadcast %49 : vector<8x1xf32> to vector<8x128xf32>
    %51 = arith.mulf %41, %50 : vector<8x128xf32>
    %52 = vector.broadcast %34 : vector<1x128xf32> to vector<8x128xf32>
    %53 = arith.mulf %51, %52 : vector<8x128xf32>
    %54 = vector.broadcast %35 : vector<1x128xf32> to vector<8x128xf32>
    %55 = arith.addf %53, %54 : vector<8x128xf32>
    %c0_28 = arith.constant 0 : index
    %c0_29 = arith.constant 0 : index
    %56 = vector.load %arg10[%c0_28, %c0_29] : memref<128x256xbf16, #tpu.memory_space<vmem>>, vector<128x256xbf16>
    %c0_30 = arith.constant 0 : index
    %c0_31 = arith.constant 0 : index
    %57 = vector.load %arg11[%c0_30, %c0_31] : memref<1x256xf32, #tpu.memory_space<vmem>>, vector<1x256xf32>
    %c0_32 = arith.constant 0 : index
    %c0_33 = arith.constant 0 : index
    %58 = vector.load %arg12[%c0_32, %c0_33] : memref<256x128xbf16, #tpu.memory_space<vmem>>, vector<256x128xbf16>
    %c0_34 = arith.constant 0 : index
    %c0_35 = arith.constant 0 : index
    %59 = vector.load %arg13[%c0_34, %c0_35] : memref<1x128xf32, #tpu.memory_space<vmem>>, vector<1x128xf32>
    %60 = arith.truncf %55 : vector<8x128xf32> to vector<8x128xbf16>
    %cst_36 = arith.constant dense<0.000000e+00> : vector<8x256xf32>
    %61 = tpu.matmul %60, %56, %cst_36 {dimension_numbers = #tpu.dot_dimension_numbers<[1], [0], [0], [1], [0, 0, 1, 1], [], []>} : vector<8x128xbf16>, vector<128x256xbf16>, vector<8x256xf32> -> vector<8x256xf32>
    %62 = vector.broadcast %57 : vector<1x256xf32> to vector<8x256xf32>
    %63 = arith.addf %61, %62 : vector<8x256xf32>
    %cst_37 = arith.constant 5.000000e-01 : f32
    %64 = vector.broadcast %cst_37 : f32 to vector<8x256xf32>
    %65 = arith.mulf %64, %63 : vector<8x256xf32>
    %cst_38 = arith.constant 0.707106769 : f32
    %66 = vector.broadcast %cst_38 : f32 to vector<8x256xf32>
    %67 = arith.mulf %63, %66 : vector<8x256xf32>
    %68 = math.erf %67 : vector<8x256xf32>
    %cst_39 = arith.constant 1.000000e+00 : f32
    %69 = vector.broadcast %cst_39 : f32 to vector<8x256xf32>
    %70 = arith.addf %69, %68 : vector<8x256xf32>
    %71 = arith.mulf %65, %70 : vector<8x256xf32>
    %72 = arith.truncf %71 : vector<8x256xf32> to vector<8x256xbf16>
    %cst_40 = arith.constant dense<0.000000e+00> : vector<8x128xf32>
    %73 = tpu.matmul %72, %58, %cst_40 {dimension_numbers = #tpu.dot_dimension_numbers<[1], [0], [0], [1], [0, 0, 1, 1], [], []>} : vector<8x256xbf16>, vector<256x128xbf16>, vector<8x128xf32> -> vector<8x128xf32>
    %74 = vector.broadcast %59 : vector<1x128xf32> to vector<8x128xf32>
    %75 = arith.addf %73, %74 : vector<8x128xf32>
    %76 = arith.addf %75, %33 : vector<8x128xf32>
    %77 = arith.mulf %28, %76 : vector<8x128xf32>
    %78 = arith.addf %77, %0 : vector<8x128xf32>
    %c0_41 = arith.constant 0 : index
    %c0_42 = arith.constant 0 : index
    %79 = vector.load %arg3[%c0_41, %c0_42] : memref<1x128xf32, #tpu.memory_space<vmem>>, vector<1x128xf32>
    %c0_43 = arith.constant 0 : index
    %c0_44 = arith.constant 0 : index
    %80 = vector.load %arg4[%c0_43, %c0_44] : memref<1x128xf32, #tpu.memory_space<vmem>>, vector<1x128xf32>
    %cst_45 = arith.constant dense<0.000000e+00> : vector<8xf32>
    %81 = vector.multi_reduction <add>, %78, %cst_45 [1] : vector<8x128xf32> to vector<8xf32>
    %82 = vector.shape_cast %81 : vector<8xf32> to vector<8x1xf32>
    %cst_46 = arith.constant 1.280000e+02 : f32
    %83 = vector.broadcast %cst_46 : f32 to vector<8x1xf32>
    %84 = arith.divf %82, %83 : vector<8x1xf32>
    %85 = vector.broadcast %84 : vector<8x1xf32> to vector<8x128xf32>
    %86 = arith.subf %78, %85 : vector<8x128xf32>
    %87 = arith.mulf %86, %86 : vector<8x128xf32>
    %cst_47 = arith.constant dense<0.000000e+00> : vector<8xf32>
    %88 = vector.multi_reduction <add>, %87, %cst_47 [1] : vector<8x128xf32> to vector<8xf32>
    %89 = vector.shape_cast %88 : vector<8xf32> to vector<8x1xf32>
    %cst_48 = arith.constant 1.280000e+02 : f32
    %90 = vector.broadcast %cst_48 : f32 to vector<8x1xf32>
    %91 = arith.divf %89, %90 : vector<8x1xf32>
    %cst_49 = arith.constant 9.99999974E-6 : f32
    %92 = vector.broadcast %cst_49 : f32 to vector<8x1xf32>
    %93 = arith.addf %91, %92 : vector<8x1xf32>
    %94 = math.rsqrt %93 : vector<8x1xf32>
    %95 = vector.broadcast %94 : vector<8x1xf32> to vector<8x128xf32>
    %96 = arith.mulf %86, %95 : vector<8x128xf32>
    %97 = vector.broadcast %79 : vector<1x128xf32> to vector<8x128xf32>
    %98 = arith.mulf %96, %97 : vector<8x128xf32>
    %99 = vector.broadcast %80 : vector<1x128xf32> to vector<8x128xf32>
    %100 = arith.addf %98, %99 : vector<8x128xf32>
    %c0_50 = arith.constant 0 : index
    %c0_51 = arith.constant 0 : index
    %101 = vector.load %arg14[%c0_50, %c0_51] : memref<128x256xbf16, #tpu.memory_space<vmem>>, vector<128x256xbf16>
    %c0_52 = arith.constant 0 : index
    %c0_53 = arith.constant 0 : index
    %102 = vector.load %arg15[%c0_52, %c0_53] : memref<1x256xf32, #tpu.memory_space<vmem>>, vector<1x256xf32>
    %c0_54 = arith.constant 0 : index
    %c0_55 = arith.constant 0 : index
    %103 = vector.load %arg16[%c0_54, %c0_55] : memref<256x128xbf16, #tpu.memory_space<vmem>>, vector<256x128xbf16>
    %c0_56 = arith.constant 0 : index
    %c0_57 = arith.constant 0 : index
    %104 = vector.load %arg17[%c0_56, %c0_57] : memref<1x128xf32, #tpu.memory_space<vmem>>, vector<1x128xf32>
    %105 = arith.truncf %100 : vector<8x128xf32> to vector<8x128xbf16>
    %cst_58 = arith.constant dense<0.000000e+00> : vector<8x256xf32>
    %106 = tpu.matmul %105, %101, %cst_58 {dimension_numbers = #tpu.dot_dimension_numbers<[1], [0], [0], [1], [0, 0, 1, 1], [], []>} : vector<8x128xbf16>, vector<128x256xbf16>, vector<8x256xf32> -> vector<8x256xf32>
    %107 = vector.broadcast %102 : vector<1x256xf32> to vector<8x256xf32>
    %108 = arith.addf %106, %107 : vector<8x256xf32>
    %cst_59 = arith.constant 5.000000e-01 : f32
    %109 = vector.broadcast %cst_59 : f32 to vector<8x256xf32>
    %110 = arith.mulf %109, %108 : vector<8x256xf32>
    %cst_60 = arith.constant 0.707106769 : f32
    %111 = vector.broadcast %cst_60 : f32 to vector<8x256xf32>
    %112 = arith.mulf %108, %111 : vector<8x256xf32>
    %113 = math.erf %112 : vector<8x256xf32>
    %cst_61 = arith.constant 1.000000e+00 : f32
    %114 = vector.broadcast %cst_61 : f32 to vector<8x256xf32>
    %115 = arith.addf %114, %113 : vector<8x256xf32>
    %116 = arith.mulf %110, %115 : vector<8x256xf32>
    %117 = arith.truncf %116 : vector<8x256xf32> to vector<8x256xbf16>
    %cst_62 = arith.constant dense<0.000000e+00> : vector<8x128xf32>
    %118 = tpu.matmul %117, %103, %cst_62 {dimension_numbers = #tpu.dot_dimension_numbers<[1], [0], [0], [1], [0, 0, 1, 1], [], []>} : vector<8x256xbf16>, vector<256x128xbf16>, vector<8x128xf32> -> vector<8x128xf32>
    %119 = vector.broadcast %104 : vector<1x128xf32> to vector<8x128xf32>
    %120 = arith.addf %118, %119 : vector<8x128xf32>
    %121 = arith.addf %120, %78 : vector<8x128xf32>
    %c0_63 = arith.constant 0 : index
    %c0_64 = arith.constant 0 : index
    %122 = vector.load %arg18[%c0_63, %c0_64] : memref<8x128xf32, #tpu.memory_space<vmem>>, vector<8x128xf32>
    tpu.vector_store %arg18[%c0_63, %c0_64], %121 {strides = array<i32>} : memref<8x128xf32, #tpu.memory_space<vmem>>, vector<8x128xf32>,
    return
  }
  func.func @transform_0(%arg0: i32) -> (i32, i32) {
    %c0_i32 = arith.constant 0 : i32
    %c0_i32_0 = arith.constant 0 : i32
    return %arg0, %c0_i32 : i32, i32
  }
  func.func @transform_1(%arg0: i32) -> (i32, i32) {
    %c0_i32 = arith.constant 0 : i32
    %c0_i32_0 = arith.constant 0 : i32
    return %arg0, %c0_i32 : i32, i32
  }
  func.func @transform_2(%arg0: i32) -> (i32, i32) {
    %c0_i32 = arith.constant 0 : i32
    %c0_i32_0 = arith.constant 0 : i32
    %c0_i32_1 = arith.constant 0 : i32
    return %c0_i32, %c0_i32_0 : i32, i32
  }
  func.func @transform_3(%arg0: i32) -> (i32, i32) {
    %c0_i32 = arith.constant 0 : i32
    %c0_i32_0 = arith.constant 0 : i32
    %c0_i32_1 = arith.constant 0 : i32
    return %c0_i32, %c0_i32_0 : i32, i32
  }
  func.func @transform_4(%arg0: i32) -> (i32, i32) {
    %c0_i32 = arith.constant 0 : i32
    %c0_i32_0 = arith.constant 0 : i32
    %c0_i32_1 = arith.constant 0 : i32
    return %c0_i32, %c0_i32_0 : i32, i32
  }
  func.func @transform_5(%arg0: i32) -> (i32, i32) {
    %c0_i32 = arith.constant 0 : i32
    %c0_i32_0 = arith.constant 0 : i32
    %c0_i32_1 = arith.constant 0 : i32
    return %c0_i32, %c0_i32_0 : i32, i32
  }
  func.func @transform_6(%arg0: i32) -> (i32, i32) {
    %c0_i32 = arith.constant 0 : i32
    %c0_i32_0 = arith.constant 0 : i32
    %c0_i32_1 = arith.constant 0 : i32
    return %c0_i32, %c0_i32_0 : i32, i32
  }
  func.func @transform_7(%arg0: i32) -> (i32, i32) {
    %c0_i32 = arith.constant 0 : i32
    %c0_i32_0 = arith.constant 0 : i32
    %c0_i32_1 = arith.constant 0 : i32
    return %c0_i32, %c0_i32_0 : i32, i32
  }
  func.func @transform_8(%arg0: i32) -> (i32, i32) {
    %c0_i32 = arith.constant 0 : i32
    %c0_i32_0 = arith.constant 0 : i32
    %c0_i32_1 = arith.constant 0 : i32
    return %c0_i32, %c0_i32_0 : i32, i32
  }
  func.func @transform_9(%arg0: i32) -> (i32, i32) {
    %c0_i32 = arith.constant 0 : i32
    %c0_i32_0 = arith.constant 0 : i32
    %c0_i32_1 = arith.constant 0 : i32
    return %c0_i32, %c0_i32_0 : i32, i32
  }
  func.func @transform_10(%arg0: i32) -> (i32, i32) {
    %c0_i32 = arith.constant 0 : i32
    %c0_i32_0 = arith.constant 0 : i32
    %c0_i32_1 = arith.constant 0 : i32
    return %c0_i32, %c0_i32_0 : i32, i32
  }
  func.func @transform_11(%arg0: i32) -> (i32, i32) {
    %c0_i32 = arith.constant 0 : i32
    %c0_i32_0 = arith.constant 0 : i32
    %c0_i32_1 = arith.constant 0 : i32
    return %c0_i32, %c0_i32_0 : i32, i32
  }
  func.func @transform_12(%arg0: i32) -> (i32, i32) {
    %c0_i32 = arith.constant 0 : i32
    %c0_i32_0 = arith.constant 0 : i32
    %c0_i32_1 = arith.constant 0 : i32
    return %c0_i32, %c0_i32_0 : i32, i32
  }
  func.func @transform_13(%arg0: i32) -> (i32, i32) {
    %c0_i32 = arith.constant 0 : i32
    %c0_i32_0 = arith.constant 0 : i32
    %c0_i32_1 = arith.constant 0 : i32
    return %c0_i32, %c0_i32_0 : i32, i32
  }
  func.func @transform_14(%arg0: i32) -> (i32, i32) {
    %c0_i32 = arith.constant 0 : i32
    %c0_i32_0 = arith.constant 0 : i32
    %c0_i32_1 = arith.constant 0 : i32
    return %c0_i32, %c0_i32_0 : i32, i32
  }
  func.func @transform_15(%arg0: i32) -> (i32, i32) {
    %c0_i32 = arith.constant 0 : i32
    %c0_i32_0 = arith.constant 0 : i32
    %c0_i32_1 = arith.constant 0 : i32
    return %c0_i32, %c0_i32_0 : i32, i32
  }
  func.func @transform_16(%arg0: i32) -> (i32, i32) {
    %c0_i32 = arith.constant 0 : i32
    %c0_i32_0 = arith.constant 0 : i32
    %c0_i32_1 = arith.constant 0 : i32
    return %c0_i32, %c0_i32_0 : i32, i32
  }
  func.func @transform_17(%arg0: i32) -> (i32, i32) {
    %c0_i32 = arith.constant 0 : i32
    %c0_i32_0 = arith.constant 0 : i32
    return %arg0, %c0_i32 : i32, i32
  }
}

</mosaic_0001>

<llo_original>
// kernel: _lambda_.4
$region0: #{_lambda_.4}
  #allocation0 [shape = 'u32[]', space=smem, size = 0x4, offset = 0x4, fixed_abs, tag = 'smem constant byte address 0x4 - core index']
  #allocation1 [shape = 'u32[72,128]{1,0:T(1,128)}', space=vmem, size = 0x9000, scoped, tag = 'internal scratch']
  %s0 = inlined_call_operand.hbm [shape: f32[16,128], index: 0, kind: input, shape index: {}]
  %s1 = inlined_call_operand.vmem [shape: f32[1,128], index: 1, kind: input, shape index: {}, may-alias: {1,3}]
  %s2 = inlined_call_operand.vmem [shape: f32[1,128], index: 2, kind: input, shape index: {}, may-alias: {2,4}]
  %s3 = inlined_call_operand.vmem [shape: f32[1,128], index: 3, kind: input, shape index: {}, may-alias: {1,3}]
  %s4 = inlined_call_operand.vmem [shape: f32[1,128], index: 4, kind: input, shape index: {}, may-alias: {2,4}]
  %s5 = inlined_call_operand.hbm [shape: bf16[128,16], index: 5, kind: input, shape index: {}]
  %s6 = inlined_call_operand.vmem [shape: f32[16,16], index: 6, kind: output, shape index: {}]
  %s7 = sld [smem:[#allocation0]]
  $region65: #{_lambda_.4} parent=0
    _
  %s9 = ssub.s32 1, %s7
  %s10 = scalar_select 0, %s9, %s7
  $region1: #{_lambda_.4} parent=0
    #allocation2 [shape = 'u8[8192]{0}', space=vmem, size = 0x2000, scoped, tag = 'input window, operand 0']
    #allocation3 [shape = 's32[2]{0}', space=sflag, size = 0x8, scoped, tag = 'scoped memory for _lambda_.4']
    #allocation4 [shape = 'u8[32768]{0}', space=vmem, size = 0x8000, scoped, tag = 'input window, operand 5, single buffered']
    #allocation5 [shape = 's32[1]{0}', space=sflag, size = 0x4, scoped, tag = 'scoped memory for _lambda_.4']
    %11 = vsyncpa [#allocation3], 0
    %s12 = scalar_lea.sflag [#allocation3], 1
    %13 = vsyncpa %s12, 0
    %14 = vsyncpa [#allocation5], 0
    loop: start=0, step=1, limit=4
    $region2: #{_lambda_.4} parent=1 // loop_pre_header
      _
    $region3: #{_lambda_.4} parent=1 // loop_header
      %s16 = sphi 0, %s20
      %p17 = scmp.ge.s32.totalorder %s16, 4
      %s26 = sphi 0, %s28
      %s29 = sphi 0, %s26
      %s30 = sphi 0, %s29
      %s46 = sphi 0, %s30
      %s50 = sphi 0, %s50
      %s52 = sphi 0, %s50
      %s53 = sphi 0, %s52
      %s67 = sphi 0, %s53
      %s71 = sphi 0, %s71
      %s73 = sphi 0, %s71
      %s74 = sphi 0, %s73
      %s88 = sphi 0, %s74
      %s92 = sphi 0, %s92
      %s94 = sphi 0, %s92
      %s95 = sphi 0, %s94
      %s109 = sphi 0, %s95
      %s113 = sphi 0, %s113
      %s115 = sphi 0, %s113
      %s116 = sphi 0, %s115
      %s130 = sphi 0, %s116
      %s134 = sphi 0, %s134
      %s136 = sphi 0, %s134
      %s137 = sphi 0, %s136
      %s151 = sphi 0, %s137
      %s157 = sphi 0, %s159
      %s160 = sphi 0, %s157
      %s161 = sphi 0, %s160
      %s177 = sphi 0, %s161
    $region4: #{_lambda_.4} parent=1 // loop_header_branch
      %19 = sbr.rel (%p17) target = $region8
    $region5: #{_lambda_.4} parent=1 // loop_body
      %s21 = ssub.s32 %s16, 1
      %s22 = ssub.s32 %s16, 2
      %s23 = sadd.s32 %s16, 1
      %s24 = ssub.s32 %s16, %s23
      %p25 = scmp.eq.s32.totalorder %s24, 0
      %s27 = sadd.s32 %s26, 1
      %s28 = scalar_select %p25, %s26, %s27
      %p31 = pneg %p25
      %p32 = scmp.eq.s32.totalorder %s16, 1
      %p33 = por %p31, %p32
      %p34 = scmp.ne.s32.totalorder %s26, %s29
      %p35 = scmp.eq.s32.totalorder %s16, 0
      %p36 = por %p34, %p35
      %p37 = scmp.ne.s32.totalorder %s26, %s29
      %p38 = scmp.eq.s32.totalorder %s21, 1
      %p39 = por %p37, %p38
      %p40 = scmp.ne.s32.totalorder %s29, %s30
      %p41 = scmp.eq.s32.totalorder %s21, 0
      %p42 = por %p40, %p41
      %p43 = scmp.ne.s32.totalorder %s29, %s30
      %p44 = scmp.eq.s32.totalorder %s22, 1
      %p45 = por %p43, %p44
      %p47 = scmp.ne.s32.totalorder %s30, %s46
      %p48 = scmp.eq.s32.totalorder %s22, 0
      %p49 = por %p47, %p48
      %s51 = sadd.s32 %s50, 1
      %p54 = scmp.eq.s32.totalorder %s16, 1
      %p55 = scmp.ne.s32.totalorder %s50, %s52
      %p56 = scmp.eq.s32.totalorder %s16, 0
      %p57 = por %p55, %p56
      %p58 = scmp.ne.s32.totalorder %s50, %s52
      %p59 = scmp.eq.s32.totalorder %s21, 1
      %p60 = por %p58, %p59
      %p61 = scmp.ne.s32.totalorder %s52, %s53
      %p62 = scmp.eq.s32.totalorder %s21, 0
      %p63 = por %p61, %p62
      %p64 = scmp.ne.s32.totalorder %s52, %s53
      %p65 = scmp.eq.s32.totalorder %s22, 1
      %p66 = por %p64, %p65
      %p68 = scmp.ne.s32.totalorder %s53, %s67
      %p69 = scmp.eq.s32.totalorder %s22, 0
      %p70 = por %p68, %p69
      %s72 = sadd.s32 %s71, 1
      %p75 = scmp.eq.s32.totalorder %s16, 1
      %p76 = scmp.ne.s32.totalorder %s71, %s73
      %p77 = scmp.eq.s32.totalorder %s16, 0
      %p78 = por %p76, %p77
      %p79 = scmp.ne.s32.totalorder %s71, %s73
      %p80 = scmp.eq.s32.totalorder %s21, 1
      %p81 = por %p79, %p80
      %p82 = scmp.ne.s32.totalorder %s73, %s74
      %p83 = scmp.eq.s32.totalorder %s21, 0
      %p84 = por %p82, %p83
      %p85 = scmp.ne.s32.totalorder %s73, %s74
      %p86 = scmp.eq.s32.totalorder %s22, 1
      %p87 = por %p85, %p86
      %p89 = scmp.ne.s32.totalorder %s74, %s88
      %p90 = scmp.eq.s32.totalorder %s22, 0
      %p91 = por %p89, %p90
      %s93 = sadd.s32 %s92, 1
      %p96 = scmp.eq.s32.totalorder %s16, 1
      %p97 = scmp.ne.s32.totalorder %s92, %s94
      %p98 = scmp.eq.s32.totalorder %s16, 0
      %p99 = por %p97, %p98
      %p100 = scmp.ne.s32.totalorder %s92, %s94
      %p101 = scmp.eq.s32.totalorder %s21, 1
      %p102 = por %p100, %p101
      %p103 = scmp.ne.s32.totalorder %s94, %s95
      %p104 = scmp.eq.s32.totalorder %s21, 0
      %p105 = por %p103, %p104
      %p106 = scmp.ne.s32.totalorder %s94, %s95
      %p107 = scmp.eq.s32.totalorder %s22, 1
      %p108 = por %p106, %p107
      %p110 = scmp.ne.s32.totalorder %s95, %s109
      %p111 = scmp.eq.s32.totalorder %s22, 0
      %p112 = por %p110, %p111
      %s114 = sadd.s32 %s113, 1
      %p117 = scmp.eq.s32.totalorder %s16, 1
      %p118 = scmp.ne.s32.totalorder %s113, %s115
      %p119 = scmp.eq.s32.totalorder %s16, 0
      %p120 = por %p118, %p119
      %p121 = scmp.ne.s32.totalorder %s113, %s115
      %p122 = scmp.eq.s32.totalorder %s21, 1
      %p123 = por %p121, %p122
      %p124 = scmp.ne.s32.totalorder %s115, %s116
      %p125 = scmp.eq.s32.totalorder %s21, 0
      %p126 = por %p124, %p125
      %p127 = scmp.ne.s32.totalorder %s115, %s116
      %p128 = scmp.eq.s32.totalorder %s22, 1
      %p129 = por %p127, %p128
      %p131 = scmp.ne.s32.totalorder %s116, %s130
      %p132 = scmp.eq.s32.totalorder %s22, 0
      %p133 = por %p131, %p132
      %s135 = sadd.s32 %s134, 1
      %p138 = scmp.eq.s32.totalorder %s16, 1
      %p139 = scmp.ne.s32.totalorder %s134, %s136
      %p140 = scmp.eq.s32.totalorder %s16, 0
      %p141 = por %p139, %p140
      %p142 = scmp.ne.s32.totalorder %s134, %s136
      %p143 = scmp.eq.s32.totalorder %s21, 1
      %p144 = por %p142, %p143
      %p145 = scmp.ne.s32.totalorder %s136, %s137
      %p146 = scmp.eq.s32.totalorder %s21, 0
      %p147 = por %p145, %p146
      %p148 = scmp.ne.s32.totalorder %s136, %s137
      %p149 = scmp.eq.s32.totalorder %s22, 1
      %p150 = por %p148, %p149
      %p152 = scmp.ne.s32.totalorder %s137, %s151
      %p153 = scmp.eq.s32.totalorder %s22, 0
      %p154 = por %p152, %p153
      %s155 = ssub.s32 %s16, %s23
      %p156 = scmp.eq.s32.totalorder %s155, 0
      %s158 = sadd.s32 %s157, 1
      %s159 = scalar_select %p156, %s157, %s158
      %p162 = pneg %p156
      %p163 = scmp.eq.s32.totalorder %s16, 1
      %p164 = por %p162, %p163
      %p165 = scmp.ne.s32.totalorder %s157, %s160
      %p166 = scmp.eq.s32.totalorder %s16, 0
      %p167 = por %p165, %p166
      %p168 = scmp.ne.s32.totalorder %s157, %s160
      %p169 = scmp.eq.s32.totalorder %s21, 1
      %p170 = por %p168, %p169
      %p171 = scmp.ne.s32.totalorder %s160, %s161
      %p172 = scmp.eq.s32.totalorder %s21, 0
      %p173 = por %p171, %p172
      %p174 = scmp.ne.s32.totalorder %s160, %s161
      %p175 = scmp.eq.s32.totalorder %s22, 1
      %p176 = por %p174, %p175
      %p178 = scmp.ne.s32.totalorder %s161, %s177
      %p179 = scmp.eq.s32.totalorder %s22, 0
      %p180 = por %p178, %p179
      %p181 = scmp.le.s32.totalorder 1, %s16
      %p182 = scmp.lt.s32.totalorder %s16, 3
      %p183 = pnand %p181, %p182
      %p184 = pneg %p183
      // Predicated region
      $region9: #{_lambda_.4} parent=5 // pred_check
        _
      $region10: #{_lambda_.4} parent=5 // pred_check_branch
        %186 = sbr.rel (%p183) target = $region12
      $region11: #{_lambda_.4} parent=5 // pred_region
        %s187 = ssub.s32 %s16, 1
        // Predicated region
        $region13: #{_lambda_.4} parent=11 // pred_check
          %p188 = pneg %p63
        $region14: #{_lambda_.4} parent=11 // pred_check_branch
          %190 = sbr.rel (%p188) target = $region16
        $region15: #{_lambda_.4} parent=11 // pred_region
          _
        $region16: #{_lambda_.4} parent=11 // pred_fallthru
          _
        // Predicated region
        $region17: #{_lambda_.4} parent=11 // pred_check
          %p191 = pneg %p84
        $region18: #{_lambda_.4} parent=11 // pred_check_branch
          %193 = sbr.rel (%p191) target = $region20
        $region19: #{_lambda_.4} parent=11 // pred_region
          _
        $region20: #{_lambda_.4} parent=11 // pred_fallthru
          _
        // Predicated region
        $region21: #{_lambda_.4} parent=11 // pred_check
          %p194 = pneg %p105
        $region22: #{_lambda_.4} parent=11 // pred_check_branch
          %196 = sbr.rel (%p194) target = $region24
        $region23: #{_lambda_.4} parent=11 // pred_region
          _
        $region24: #{_lambda_.4} parent=11 // pred_fallthru
          _
        // Predicated region
        $region25: #{_lambda_.4} parent=11 // pred_check
          %p197 = pneg %p126
        $region26: #{_lambda_.4} parent=11 // pred_check_branch
          %199 = sbr.rel (%p197) target = $region28
        $region27: #{_lambda_.4} parent=11 // pred_region
          _
        $region28: #{_lambda_.4} parent=11 // pred_fallthru
          _
        // Predicated region
        $region29: #{_lambda_.4} parent=11 // pred_check
          %p200 = pneg %p147
        $region30: #{_lambda_.4} parent=11 // pred_check_branch
          %202 = sbr.rel (%p200) target = $region32
        $region31: #{_lambda_.4} parent=11 // pred_region
          %204 = vsyncadd [#allocation5], 0
          %s205 = sshll.u32 %s5, 4
          %s206 = int_to_ptr.hbm [resolvable:$true] %s205
          %s207 = sshll.u32 [#allocation4], 4
          %s208 = int_to_ptr.vmem [resolvable:$true] %s207
          %213 = dma.hbm_to_vmem [thread:$0]  %s206, 1024, %s208, [#allocation5], 64, 64, 4
        $region32: #{_lambda_.4} parent=11 // pred_fallthru
          _
      $region12: #{_lambda_.4} parent=5 // pred_fallthru
        _
      %p214 = scmp.lt.s32.totalorder %s16, 2
      // Predicated region
      $region33: #{_lambda_.4} parent=5 // pred_check
        %p215 = pneg %p214
      $region34: #{_lambda_.4} parent=5 // pred_check_branch
        %217 = sbr.rel (%p215) target = $region36
      $region35: #{_lambda_.4} parent=5 // pred_region
        // Predicated region
        $region37: #{_lambda_.4} parent=35 // pred_check
          %p218 = pneg %p36
        $region38: #{_lambda_.4} parent=35 // pred_check_branch
          %220 = sbr.rel (%p218) target = $region40
        $region39: #{_lambda_.4} parent=35 // pred_region
          %s221 = sand.u32 %s26, 1
          %s222 = scalar_lea.sflag [#allocation3], %s221
          %s223 = sand.u32 %s26, 1
          %s224 = smul.addr %s223, 8
          %s225 = scalar_lea.vmem [#allocation2], %s224
          %227 = vsyncadd %s222, 0
          %s228 = smul.addr %s16, 8
          %s229 = scalar_lea.hbm %s0, %s228
          %s231 = sshll.u32 %s229, 4
          %s232 = int_to_ptr.hbm [resolvable:$true] %s231
          %s233 = sshll.u32 %s225, 4
          %s234 = int_to_ptr.vmem [resolvable:$true] %s233
          %236 = dma.hbm_to_vmem [thread:$0]  %s232, 128, %s234, %s222
        $region40: #{_lambda_.4} parent=35 // pred_fallthru
          _
      $region36: #{_lambda_.4} parent=5 // pred_fallthru
        _
      %p237 = scmp.le.s32.totalorder 1, %s16
      %p238 = scmp.lt.s32.totalorder %s16, 3
      %p239 = pnand %p237, %p238
      %p240 = pneg %p239
      // Predicated region
      $region41: #{_lambda_.4} parent=5 // pred_check
        _
      $region42: #{_lambda_.4} parent=5 // pred_check_branch
        %242 = sbr.rel (%p239) target = $region44
      $region43: #{_lambda_.4} parent=5 // pred_region
        %s243 = ssub.s32 %s16, 1
        %s244 = sand.u32 %s29, 1
        %s245 = scalar_lea.sflag [#allocation3], %s244
        %s246 = sand.u32 %s29, 1
        %s247 = smul.addr %s246, 8
        %s248 = scalar_lea.vmem [#allocation2], %s247
        // Predicated region
        $region45: #{_lambda_.4} parent=43 // pred_check
          %p249 = pneg %p42
        $region46: #{_lambda_.4} parent=43 // pred_check_branch
          %251 = sbr.rel (%p249) target = $region48
        $region47: #{_lambda_.4} parent=43 // pred_region
          %253 = dma.done %s245, 128
        $region48: #{_lambda_.4} parent=43 // pred_fallthru
          _
        // Predicated region
        $region49: #{_lambda_.4} parent=43 // pred_check
          %p254 = pneg %p147
        $region50: #{_lambda_.4} parent=43 // pred_check_branch
          %256 = sbr.rel (%p254) target = $region52
        $region51: #{_lambda_.4} parent=43 // pred_region
          %258 = dma.done [#allocation5], 1024
        $region52: #{_lambda_.4} parent=43 // pred_fallthru
          _
        %s259 = sand.u32 %s29, 1
        %s260 = scalar_lea.sflag [#allocation3], %s259
        %s261 = sand.u32 %s29, 1
        %s262 = smul.addr %s261, 8
        %s263 = scalar_lea.vmem [#allocation2], %s262
        %p264 = pneg %p42
        %p265 = pneg %p39
        %p266 = pneg %p63
        %p267 = pneg %p60
        %p268 = pneg %p84
        %p269 = pneg %p81
        %p270 = pneg %p105
        %p271 = pneg %p102
        %p272 = pneg %p126
        %p273 = pneg %p123
        %p274 = pneg %p147
        %p275 = pneg %p144
        %p276 = pneg %p173
        %p277 = pneg %p170
        %p278 = scmp.lt.s32.totalorder %s21, 1
        %s279 = scalar_select %p278, %s21, 1
        %s280 = smul.addr %s279, 8
        %s281 = scalar_lea.vmem %s6, %s280
        %p282 = scmp.lt.s32.totalorder %s21, 1
        %s283 = scalar_select %p282, %s21, 1
        %s284 = smul.addr %s283, 8
        %s285 = scalar_lea.vmem %s6, %s284
        %v286 = vld [vmem:[%s248] sm:$0xff]
        %v287 = vld [vmem:[%s1] sm:$0x1]
        %v288 = vld [vmem:[%s2] sm:$0x1]
        %289 = vadd.xlane.f32.xlu0 %v286
        %v290 = vpop.xlane.xlu0 %289
        %v291 = vrcp.pop 128.0
        %v292 = vmul.f32 128.0, %v291
        %v293 = vsub.f32 1.0, %v292
        %v294 = vmul.f32 %v291, %v293
        %v295 = vadd.f32 %v291, %v294
        %vm296 = vweird.f32 %v291
        %v297 = vsel %vm296, %v291, %v295
        %v298 = vmul.f32 %v290, %v297
        %v299 = vsub.f32 %v286, %v298
        %v300 = vmul.f32 %v299, %v299
        %301 = vadd.xlane.f32.xlu0 %v300
        %v302 = vpop.xlane.xlu0 %301
        %v303 = vmul.f32 %v302, %v297
        %v304 = vadd.f32 %v303, 1e-05
        %v305 = vrsqrt.pop %v304
        %v306 = vmul.f32 %v305, %v304
        %v307 = vmul.f32 %v306, %v305
        %v308 = vmul.f32 0.5, %v307
        %v309 = vsub.f32 1.5, %v308
        %v310 = vmul.f32 %v305, %v309
        %vm311 = vweird.f32 %v304
        %vm312 = vweird.f32 %v305
        %vm313 = vmor %vm311, %vm312
        %v314 = vsel %vm313, %v305, %v310
        %v315 = vmul.f32 %v299, %v314
        %v317 = vperm.slane %v287, 0
        %v319 = vmul.f32 %v315, %v317
        %v321 = vperm.slane %v288, 0
        %v323 = vadd.f32 %v319, %v321
        %v324 = vld [vmem:[%s3] sm:$0x1]
        %v325 = vld [vmem:[%s4] sm:$0x1]
        %326 = vadd.xlane.f32.xlu0 %v323
        %v327 = vpop.xlane.xlu0 %326
        %v328 = vmul.f32 %v327, %v297
        %v329 = vsub.f32 %v323, %v328
        %v330 = vmul.f32 %v329, %v329
        %331 = vadd.xlane.f32.xlu0 %v330
        %v332 = vpop.xlane.xlu0 %331
        %v333 = vmul.f32 %v332, %v297
        %v334 = vadd.f32 %v333, 1e-05
        %v335 = vrsqrt.pop %v334
        %v336 = vmul.f32 %v335, %v334
        %v337 = vmul.f32 %v336, %v335
        %v338 = vmul.f32 0.5, %v337
        %v339 = vsub.f32 1.5, %v338
        %v340 = vmul.f32 %v335, %v339
        %vm341 = vweird.f32 %v334
        %vm342 = vweird.f32 %v335
        %vm343 = vmor %vm341, %vm342
        %v344 = vsel %vm343, %v335, %v340
        %v345 = vmul.f32 %v329, %v344
        %v347 = vperm.slane %v324, 0
        %v349 = vmul.f32 %v345, %v347
        %v351 = vperm.slane %v325, 0
        %v353 = vadd.f32 %v349, %v351
        %v354 = vld [vmem:[#allocation4] sm:$0xf]
        %v355 = vld [vmem:[#allocation4 + $0x4] sm:$0xf]
        %v356 = vld [vmem:[#allocation4 + $0x8] sm:$0xf]
        %v357 = vld [vmem:[#allocation4 + $0xc] sm:$0xf]
        %v358 = vld [vmem:[#allocation4 + $0x10] sm:$0xf]
        %v359 = vld [vmem:[#allocation4 + $0x14] sm:$0xf]
        %v360 = vld [vmem:[#allocation4 + $0x18] sm:$0xf]
        %v361 = vld [vmem:[#allocation4 + $0x1c] sm:$0xf]
        %v362 = vld [vmem:[#allocation4 + $0x20] sm:$0xf]
        %v363 = vld [vmem:[#allocation4 + $0x24] sm:$0xf]
        %v364 = vld [vmem:[#allocation4 + $0x28] sm:$0xf]
        %v365 = vld [vmem:[#allocation4 + $0x2c] sm:$0xf]
        %v366 = vld [vmem:[#allocation4 + $0x30] sm:$0xf]
        %v367 = vld [vmem:[#allocation4 + $0x34] sm:$0xf]
        %v368 = vld [vmem:[#allocation4 + $0x38] sm:$0xf]
        %v369 = vld [vmem:[#allocation4 + $0x3c] sm:$0xf]
        %v370 = vpack.c.bf16 %v353, %v353
        %v387 = vunpack.c.l.b16 %v354
        %v388 = vunpack.c.l.b16 %v355
        %v389 = vunpack.c.l.b16 %v356
        %v390 = vunpack.c.l.b16 %v357
        %v391 = vunpack.c.l.b16 %v358
        %v392 = vunpack.c.l.b16 %v359
        %v393 = vunpack.c.l.b16 %v360
        %v394 = vunpack.c.l.b16 %v361
        %v395 = vunpack.c.l.b16 %v362
        %v396 = vunpack.c.l.b16 %v363
        %v397 = vunpack.c.l.b16 %v364
        %v398 = vunpack.c.l.b16 %v365
        %v399 = vunpack.c.l.b16 %v366
        %v400 = vunpack.c.l.b16 %v367
        %v401 = vunpack.c.l.b16 %v368
        %v402 = vunpack.c.l.b16 %v369
        %v403 = vpack.c.b16 %v388, %v387
        %v404 = vpack.c.b16 %v390, %v389
        %v405 = vpack.c.b16 %v392, %v391
        %v406 = vpack.c.b16 %v394, %v393
        %v407 = vpack.c.b16 %v396, %v395
        %v408 = vpack.c.b16 %v398, %v397
        %v409 = vpack.c.b16 %v400, %v399
        %v410 = vpack.c.b16 %v402, %v401
        %419 = vmatpush.bf16.msra.mxu0 %v410
        %420 = vmatpush.bf16.msra.mxu0 %v409
        %421 = vmatpush.bf16.msra.mxu0 %v408
        %422 = vmatpush.bf16.msra.mxu0 %v407
        %423 = vmatpush.bf16.msra.mxu0 %v406
        %424 = vmatpush.bf16.msra.mxu0 %v405
        %425 = vmatpush.bf16.msra.mxu0 %v404
        %426 = vmatpush.bf16.msra.mxu0 %v403
        %427 = vmatmul.bf16.gmra.mxu0 %v370
        %v428 = vpop.f32.mrf.mxu0
        %v429 = vadd.f32 0.0, %v428
        %v430 = vpop.f32.mrf.mxu0
        %431 = vdwg.mxu0
        %vm432 = vcmask 130048
        %433 = vst.msk [vmem:[%s285] sm:$0xff] %vm432, %v429
        %p434 = scmp.lt.s32.totalorder %s21, 1
        %s435 = scalar_select %p434, %s21, 1
        %s436 = smul.addr %s435, 8
        %s437 = scalar_lea.vmem %s6, %s436
        // Predicated region
        $region53: #{_lambda_.4} parent=43 // pred_check
          %p438 = pneg %p170
        $region54: #{_lambda_.4} parent=43 // pred_check_branch
          %440 = sbr.rel (%p438) target = $region56
        $region55: #{_lambda_.4} parent=43 // pred_region
          _
        $region56: #{_lambda_.4} parent=43 // pred_fallthru
          _
      $region44: #{_lambda_.4} parent=5 // pred_fallthru
        _
      %p441 = scmp.le.s32.totalorder 2, %s16
      // Predicated region
      $region57: #{_lambda_.4} parent=5 // pred_check
        %p442 = pneg %p441
      $region58: #{_lambda_.4} parent=5 // pred_check_branch
        %444 = sbr.rel (%p442) target = $region60
      $region59: #{_lambda_.4} parent=5 // pred_region
        %s445 = ssub.s32 %s16, 2
        // Predicated region
        $region61: #{_lambda_.4} parent=59 // pred_check
          %p446 = pneg %p176
        $region62: #{_lambda_.4} parent=59 // pred_check_branch
          %448 = sbr.rel (%p446) target = $region64
        $region63: #{_lambda_.4} parent=59 // pred_region
          %p449 = scmp.lt.s32.totalorder %s22, 1
          %s450 = scalar_select %p449, %s22, 1
          %s451 = smul.addr %s450, 8
          %s452 = scalar_lea.vmem %s6, %s451
        $region64: #{_lambda_.4} parent=59 // pred_fallthru
          _
      $region60: #{_lambda_.4} parent=5 // pred_fallthru
        _
    $region6: #{_lambda_.4} parent=1 // loop_footer
      %s20 = sadd.s32 1, %s16
    $region7: #{_lambda_.4} parent=1 // loop_footer_branch
      %15 = sbr.rel target = $region3
    $region8: #{_lambda_.4} parent=1 // loop_exit
      _
    %453 = vsyncpa [#allocation3], 1
    %s454 = scalar_lea.sflag [#allocation3], 1
    %455 = vsyncpa %s454, 1
    %456 = vsyncpa [#allocation5], 1

// kernel: _lambda_.6
$region0: #{_lambda_.6}
  #allocation0 [shape = 'u32[]', space=smem, size = 0x4, offset = 0x4, fixed_abs, tag = 'smem constant byte address 0x4 - core index']
  #allocation1 [shape = 'u32[72,128]{1,0:T(1,128)}', space=vmem, size = 0x9000, scoped, tag = 'internal scratch']
  %s0 = inlined_call_operand.vmem [shape: f32[16,128], index: 0, kind: input, shape index: {}]
  %s1 = inlined_call_operand.vmem [shape: f32[1,128], index: 1, kind: input, shape index: {}, may-alias: {1,3}]
  %s2 = inlined_call_operand.vmem [shape: f32[1,128], index: 2, kind: input, shape index: {}, may-alias: {2,4}]
  %s3 = inlined_call_operand.vmem [shape: f32[1,128], index: 3, kind: input, shape index: {}, may-alias: {1,3}]
  %s4 = inlined_call_operand.vmem [shape: f32[1,128], index: 4, kind: input, shape index: {}, may-alias: {2,4}]
  %s5 = inlined_call_operand.vmem [shape: bf16[128,16], index: 5, kind: input, shape index: {}]
  %s6 = inlined_call_operand.vmem [shape: f32[16,16], index: 6, kind: output, shape index: {}]
  %s7 = sld [smem:[#allocation0]]
  $region57: #{_lambda_.6} parent=0
    _
  %s9 = ssub.s32 1, %s7
  %s10 = scalar_select 0, %s9, %s7
  loop: start=0, step=1, limit=4
  $region2: #{_lambda_.6} parent=0 // loop_pre_header
    _
  $region3: #{_lambda_.6} parent=0 // loop_header
    %s12 = sphi 0, %s16
    %p13 = scmp.ge.s32.totalorder %s12, 4
    %s22 = sphi 0, %s24
    %s25 = sphi 0, %s22
    %s26 = sphi 0, %s25
    %s42 = sphi 0, %s26
    %s46 = sphi 0, %s46
    %s48 = sphi 0, %s46
    %s49 = sphi 0, %s48
    %s63 = sphi 0, %s49
    %s67 = sphi 0, %s67
    %s69 = sphi 0, %s67
    %s70 = sphi 0, %s69
    %s84 = sphi 0, %s70
    %s88 = sphi 0, %s88
    %s90 = sphi 0, %s88
    %s91 = sphi 0, %s90
    %s105 = sphi 0, %s91
    %s109 = sphi 0, %s109
    %s111 = sphi 0, %s109
    %s112 = sphi 0, %s111
    %s126 = sphi 0, %s112
    %s130 = sphi 0, %s130
    %s132 = sphi 0, %s130
    %s133 = sphi 0, %s132
    %s147 = sphi 0, %s133
    %s153 = sphi 0, %s155
    %s156 = sphi 0, %s153
    %s157 = sphi 0, %s156
    %s173 = sphi 0, %s157
  $region4: #{_lambda_.6} parent=0 // loop_header_branch
    %15 = sbr.rel (%p13) target = $region8
  $region5: #{_lambda_.6} parent=0 // loop_body
    %s17 = ssub.s32 %s12, 1
    %s18 = ssub.s32 %s12, 2
    %s19 = sadd.s32 %s12, 1
    %s20 = ssub.s32 %s12, %s19
    %p21 = scmp.eq.s32.totalorder %s20, 0
    %s23 = sadd.s32 %s22, 1
    %s24 = scalar_select %p21, %s22, %s23
    %p27 = pneg %p21
    %p28 = scmp.eq.s32.totalorder %s12, 1
    %p29 = por %p27, %p28
    %p30 = scmp.ne.s32.totalorder %s22, %s25
    %p31 = scmp.eq.s32.totalorder %s12, 0
    %p32 = por %p30, %p31
    %p33 = scmp.ne.s32.totalorder %s22, %s25
    %p34 = scmp.eq.s32.totalorder %s17, 1
    %p35 = por %p33, %p34
    %p36 = scmp.ne.s32.totalorder %s25, %s26
    %p37 = scmp.eq.s32.totalorder %s17, 0
    %p38 = por %p36, %p37
    %p39 = scmp.ne.s32.totalorder %s25, %s26
    %p40 = scmp.eq.s32.totalorder %s18, 1
    %p41 = por %p39, %p40
    %p43 = scmp.ne.s32.totalorder %s26, %s42
    %p44 = scmp.eq.s32.totalorder %s18, 0
    %p45 = por %p43, %p44
    %s47 = sadd.s32 %s46, 1
    %p50 = scmp.eq.s32.totalorder %s12, 1
    %p51 = scmp.ne.s32.totalorder %s46, %s48
    %p52 = scmp.eq.s32.totalorder %s12, 0
    %p53 = por %p51, %p52
    %p54 = scmp.ne.s32.totalorder %s46, %s48
    %p55 = scmp.eq.s32.totalorder %s17, 1
    %p56 = por %p54, %p55
    %p57 = scmp.ne.s32.totalorder %s48, %s49
    %p58 = scmp.eq.s32.totalorder %s17, 0
    %p59 = por %p57, %p58
    %p60 = scmp.ne.s32.totalorder %s48, %s49
    %p61 = scmp.eq.s32.totalorder %s18, 1
    %p62 = por %p60, %p61
    %p64 = scmp.ne.s32.totalorder %s49, %s63
    %p65 = scmp.eq.s32.totalorder %s18, 0
    %p66 = por %p64, %p65
    %s68 = sadd.s32 %s67, 1
    %p71 = scmp.eq.s32.totalorder %s12, 1
    %p72 = scmp.ne.s32.totalorder %s67, %s69
    %p73 = scmp.eq.s32.totalorder %s12, 0
    %p74 = por %p72, %p73
    %p75 = scmp.ne.s32.totalorder %s67, %s69
    %p76 = scmp.eq.s32.totalorder %s17, 1
    %p77 = por %p75, %p76
    %p78 = scmp.ne.s32.totalorder %s69, %s70
    %p79 = scmp.eq.s32.totalorder %s17, 0
    %p80 = por %p78, %p79
    %p81 = scmp.ne.s32.totalorder %s69, %s70
    %p82 = scmp.eq.s32.totalorder %s18, 1
    %p83 = por %p81, %p82
    %p85 = scmp.ne.s32.totalorder %s70, %s84
    %p86 = scmp.eq.s32.totalorder %s18, 0
    %p87 = por %p85, %p86
    %s89 = sadd.s32 %s88, 1
    %p92 = scmp.eq.s32.totalorder %s12, 1
    %p93 = scmp.ne.s32.totalorder %s88, %s90
    %p94 = scmp.eq.s32.totalorder %s12, 0
    %p95 = por %p93, %p94
    %p96 = scmp.ne.s32.totalorder %s88, %s90
    %p97 = scmp.eq.s32.totalorder %s17, 1
    %p98 = por %p96, %p97
    %p99 = scmp.ne.s32.totalorder %s90, %s91
    %p100 = scmp.eq.s32.totalorder %s17, 0
    %p101 = por %p99, %p100
    %p102 = scmp.ne.s32.totalorder %s90, %s91
    %p103 = scmp.eq.s32.totalorder %s18, 1
    %p104 = por %p102, %p103
    %p106 = scmp.ne.s32.totalorder %s91, %s105
    %p107 = scmp.eq.s32.totalorder %s18, 0
    %p108 = por %p106, %p107
    %s110 = sadd.s32 %s109, 1
    %p113 = scmp.eq.s32.totalorder %s12, 1
    %p114 = scmp.ne.s32.totalorder %s109, %s111
    %p115 = scmp.eq.s32.totalorder %s12, 0
    %p116 = por %p114, %p115
    %p117 = scmp.ne.s32.totalorder %s109, %s111
    %p118 = scmp.eq.s32.totalorder %s17, 1
    %p119 = por %p117, %p118
    %p120 = scmp.ne.s32.totalorder %s111, %s112
    %p121 = scmp.eq.s32.totalorder %s17, 0
    %p122 = por %p120, %p121
    %p123 = scmp.ne.s32.totalorder %s111, %s112
    %p124 = scmp.eq.s32.totalorder %s18, 1
    %p125 = por %p123, %p124
    %p127 = scmp.ne.s32.totalorder %s112, %s126
    %p128 = scmp.eq.s32.totalorder %s18, 0
    %p129 = por %p127, %p128
    %s131 = sadd.s32 %s130, 1
    %p134 = scmp.eq.s32.totalorder %s12, 1
    %p135 = scmp.ne.s32.totalorder %s130, %s132
    %p136 = scmp.eq.s32.totalorder %s12, 0
    %p137 = por %p135, %p136
    %p138 = scmp.ne.s32.totalorder %s130, %s132
    %p139 = scmp.eq.s32.totalorder %s17, 1
    %p140 = por %p138, %p139
    %p141 = scmp.ne.s32.totalorder %s132, %s133
    %p142 = scmp.eq.s32.totalorder %s17, 0
    %p143 = por %p141, %p142
    %p144 = scmp.ne.s32.totalorder %s132, %s133
    %p145 = scmp.eq.s32.totalorder %s18, 1
    %p146 = por %p144, %p145
    %p148 = scmp.ne.s32.totalorder %s133, %s147
    %p149 = scmp.eq.s32.totalorder %s18, 0
    %p150 = por %p148, %p149
    %s151 = ssub.s32 %s12, %s19
    %p152 = scmp.eq.s32.totalorder %s151, 0
    %s154 = sadd.s32 %s153, 1
    %s155 = scalar_select %p152, %s153, %s154
    %p158 = pneg %p152
    %p159 = scmp.eq.s32.totalorder %s12, 1
    %p160 = por %p158, %p159
    %p161 = scmp.ne.s32.totalorder %s153, %s156
    %p162 = scmp.eq.s32.totalorder %s12, 0
    %p163 = por %p161, %p162
    %p164 = scmp.ne.s32.totalorder %s153, %s156
    %p165 = scmp.eq.s32.totalorder %s17, 1
    %p166 = por %p164, %p165
    %p167 = scmp.ne.s32.totalorder %s156, %s157
    %p168 = scmp.eq.s32.totalorder %s17, 0
    %p169 = por %p167, %p168
    %p170 = scmp.ne.s32.totalorder %s156, %s157
    %p171 = scmp.eq.s32.totalorder %s18, 1
    %p172 = por %p170, %p171
    %p174 = scmp.ne.s32.totalorder %s157, %s173
    %p175 = scmp.eq.s32.totalorder %s18, 0
    %p176 = por %p174, %p175
    %p177 = scmp.le.s32.totalorder 1, %s12
    %p178 = scmp.lt.s32.totalorder %s12, 3
    %p179 = pnand %p177, %p178
    %p180 = pneg %p179
    // Predicated region
    $region9: #{_lambda_.6} parent=5 // pred_check
      _
    $region10: #{_lambda_.6} parent=5 // pred_check_branch
      %182 = sbr.rel (%p179) target = $region12
    $region11: #{_lambda_.6} parent=5 // pred_region
      %s183 = ssub.s32 %s12, 1
      // Predicated region
      $region13: #{_lambda_.6} parent=11 // pred_check
        %p184 = pneg %p59
      $region14: #{_lambda_.6} parent=11 // pred_check_branch
        %186 = sbr.rel (%p184) target = $region16
      $region15: #{_lambda_.6} parent=11 // pred_region
        _
      $region16: #{_lambda_.6} parent=11 // pred_fallthru
        _
      // Predicated region
      $region17: #{_lambda_.6} parent=11 // pred_check
        %p187 = pneg %p80
      $region18: #{_lambda_.6} parent=11 // pred_check_branch
        %189 = sbr.rel (%p187) target = $region20
      $region19: #{_lambda_.6} parent=11 // pred_region
        _
      $region20: #{_lambda_.6} parent=11 // pred_fallthru
        _
      // Predicated region
      $region21: #{_lambda_.6} parent=11 // pred_check
        %p190 = pneg %p101
      $region22: #{_lambda_.6} parent=11 // pred_check_branch
        %192 = sbr.rel (%p190) target = $region24
      $region23: #{_lambda_.6} parent=11 // pred_region
        _
      $region24: #{_lambda_.6} parent=11 // pred_fallthru
        _
      // Predicated region
      $region25: #{_lambda_.6} parent=11 // pred_check
        %p193 = pneg %p122
      $region26: #{_lambda_.6} parent=11 // pred_check_branch
        %195 = sbr.rel (%p193) target = $region28
      $region27: #{_lambda_.6} parent=11 // pred_region
        _
      $region28: #{_lambda_.6} parent=11 // pred_fallthru
        _
      // Predicated region
      $region29: #{_lambda_.6} parent=11 // pred_check
        %p196 = pneg %p143
      $region30: #{_lambda_.6} parent=11 // pred_check_branch
        %198 = sbr.rel (%p196) target = $region32
      $region31: #{_lambda_.6} parent=11 // pred_region
        _
      $region32: #{_lambda_.6} parent=11 // pred_fallthru
        _
    $region12: #{_lambda_.6} parent=5 // pred_fallthru
      _
    %p199 = scmp.lt.s32.totalorder %s12, 2
    // Predicated region
    $region33: #{_lambda_.6} parent=5 // pred_check
      %p200 = pneg %p199
    $region34: #{_lambda_.6} parent=5 // pred_check_branch
      %202 = sbr.rel (%p200) target = $region36
    $region35: #{_lambda_.6} parent=5 // pred_region
      // Predicated region
      $region37: #{_lambda_.6} parent=35 // pred_check
        %p203 = pneg %p32
      $region38: #{_lambda_.6} parent=35 // pred_check_branch
        %205 = sbr.rel (%p203) target = $region40
      $region39: #{_lambda_.6} parent=35 // pred_region
        %p206 = scmp.lt.s32.totalorder %s12, 1
        %s207 = scalar_select %p206, %s12, 1
        %s208 = smul.addr %s207, 8
        %s209 = scalar_lea.vmem %s0, %s208
      $region40: #{_lambda_.6} parent=35 // pred_fallthru
        _
    $region36: #{_lambda_.6} parent=5 // pred_fallthru
      _
    %p210 = scmp.le.s32.totalorder 1, %s12
    %p211 = scmp.lt.s32.totalorder %s12, 3
    %p212 = pnand %p210, %p211
    %p213 = pneg %p212
    // Predicated region
    $region41: #{_lambda_.6} parent=5 // pred_check
      _
    $region42: #{_lambda_.6} parent=5 // pred_check_branch
      %215 = sbr.rel (%p212) target = $region44
    $region43: #{_lambda_.6} parent=5 // pred_region
      %s216 = ssub.s32 %s12, 1
      %p217 = scmp.lt.s32.totalorder %s17, 1
      %s218 = scalar_select %p217, %s17, 1
      %s219 = smul.addr %s218, 8
      %s220 = scalar_lea.vmem %s0, %s219
      %p221 = pneg %p38
      %p222 = pneg %p35
      %p223 = pneg %p59
      %p224 = pneg %p56
      %p225 = pneg %p80
      %p226 = pneg %p77
      %p227 = pneg %p101
      %p228 = pneg %p98
      %p229 = pneg %p122
      %p230 = pneg %p119
      %p231 = pneg %p143
      %p232 = pneg %p140
      %p233 = pneg %p169
      %p234 = pneg %p166
      %p235 = scmp.lt.s32.totalorder %s17, 1
      %s236 = scalar_select %p235, %s17, 1
      %s237 = smul.addr %s236, 8
      %s238 = scalar_lea.vmem %s6, %s237
      %p239 = scmp.lt.s32.totalorder %s17, 1
      %s240 = scalar_select %p239, %s17, 1
      %s241 = smul.addr %s240, 8
      %s242 = scalar_lea.vmem %s0, %s241
      %p243 = scmp.lt.s32.totalorder %s17, 1
      %s244 = scalar_select %p243, %s17, 1
      %s245 = smul.addr %s244, 8
      %s246 = scalar_lea.vmem %s6, %s245
      %v247 = vld [vmem:[%s242] sm:$0xff]
      %v248 = vld [vmem:[%s1] sm:$0x1]
      %v249 = vld [vmem:[%s2] sm:$0x1]
      %250 = vadd.xlane.f32.xlu0 %v247
      %v251 = vpop.xlane.xlu0 %250
      %v252 = vrcp.pop 128.0
      %v253 = vmul.f32 128.0, %v252
      %v254 = vsub.f32 1.0, %v253
      %v255 = vmul.f32 %v252, %v254
      %v256 = vadd.f32 %v252, %v255
      %vm257 = vweird.f32 %v252
      %v258 = vsel %vm257, %v252, %v256
      %v259 = vmul.f32 %v251, %v258
      %v260 = vsub.f32 %v247, %v259
      %v261 = vmul.f32 %v260, %v260
      %262 = vadd.xlane.f32.xlu0 %v261
      %v263 = vpop.xlane.xlu0 %262
      %v264 = vmul.f32 %v263, %v258
      %v265 = vadd.f32 %v264, 1e-05
      %v266 = vrsqrt.pop %v265
      %v267 = vmul.f32 %v266, %v265
      %v268 = vmul.f32 %v267, %v266
      %v269 = vmul.f32 0.5, %v268
      %v270 = vsub.f32 1.5, %v269
      %v271 = vmul.f32 %v266, %v270
      %vm272 = vweird.f32 %v265
      %vm273 = vweird.f32 %v266
      %vm274 = vmor %vm272, %vm273
      %v275 = vsel %vm274, %v266, %v271
      %v276 = vmul.f32 %v260, %v275
      %v278 = vperm.slane %v248, 0
      %v280 = vmul.f32 %v276, %v278
      %v282 = vperm.slane %v249, 0
      %v284 = vadd.f32 %v280, %v282
      %v285 = vld [vmem:[%s3] sm:$0x1]
      %v286 = vld [vmem:[%s4] sm:$0x1]
      %287 = vadd.xlane.f32.xlu0 %v284
      %v288 = vpop.xlane.xlu0 %287
      %v289 = vmul.f32 %v288, %v258
      %v290 = vsub.f32 %v284, %v289
      %v291 = vmul.f32 %v290, %v290
      %292 = vadd.xlane.f32.xlu0 %v291
      %v293 = vpop.xlane.xlu0 %292
      %v294 = vmul.f32 %v293, %v258
      %v295 = vadd.f32 %v294, 1e-05
      %v296 = vrsqrt.pop %v295
      %v297 = vmul.f32 %v296, %v295
      %v298 = vmul.f32 %v297, %v296
      %v299 = vmul.f32 0.5, %v298
      %v300 = vsub.f32 1.5, %v299
      %v301 = vmul.f32 %v296, %v300
      %vm302 = vweird.f32 %v295
      %vm303 = vweird.f32 %v296
      %vm304 = vmor %vm302, %vm303
      %v305 = vsel %vm304, %v296, %v301
      %v306 = vmul.f32 %v290, %v305
      %v308 = vperm.slane %v285, 0
      %v310 = vmul.f32 %v306, %v308
      %v312 = vperm.slane %v286, 0
      %v314 = vadd.f32 %v310, %v312
      %v315 = vld [vmem:[%s5] sm:$0xf]
      %v316 = vld [vmem:[%s5 + $0x4] sm:$0xf]
      %v317 = vld [vmem:[%s5 + $0x8] sm:$0xf]
      %v318 = vld [vmem:[%s5 + $0xc] sm:$0xf]
      %v319 = vld [vmem:[%s5 + $0x10] sm:$0xf]
      %v320 = vld [vmem:[%s5 + $0x14] sm:$0xf]
      %v321 = vld [vmem:[%s5 + $0x18] sm:$0xf]
      %v322 = vld [vmem:[%s5 + $0x1c] sm:$0xf]
      %v323 = vld [vmem:[%s5 + $0x20] sm:$0xf]
      %v324 = vld [vmem:[%s5 + $0x24] sm:$0xf]
      %v325 = vld [vmem:[%s5 + $0x28] sm:$0xf]
      %v326 = vld [vmem:[%s5 + $0x2c] sm:$0xf]
      %v327 = vld [vmem:[%s5 + $0x30] sm:$0xf]
      %v328 = vld [vmem:[%s5 + $0x34] sm:$0xf]
      %v329 = vld [vmem:[%s5 + $0x38] sm:$0xf]
      %v330 = vld [vmem:[%s5 + $0x3c] sm:$0xf]
      %v331 = vpack.c.bf16 %v314, %v314
      %v348 = vunpack.c.l.b16 %v315
      %v349 = vunpack.c.l.b16 %v316
      %v350 = vunpack.c.l.b16 %v317
      %v351 = vunpack.c.l.b16 %v318
      %v352 = vunpack.c.l.b16 %v319
      %v353 = vunpack.c.l.b16 %v320
      %v354 = vunpack.c.l.b16 %v321
      %v355 = vunpack.c.l.b16 %v322
      %v356 = vunpack.c.l.b16 %v323
      %v357 = vunpack.c.l.b16 %v324
      %v358 = vunpack.c.l.b16 %v325
      %v359 = vunpack.c.l.b16 %v326
      %v360 = vunpack.c.l.b16 %v327
      %v361 = vunpack.c.l.b16 %v328
      %v362 = vunpack.c.l.b16 %v329
      %v363 = vunpack.c.l.b16 %v330
      %v364 = vpack.c.b16 %v349, %v348
      %v365 = vpack.c.b16 %v351, %v350
      %v366 = vpack.c.b16 %v353, %v352
      %v367 = vpack.c.b16 %v355, %v354
      %v368 = vpack.c.b16 %v357, %v356
      %v369 = vpack.c.b16 %v359, %v358
      %v370 = vpack.c.b16 %v361, %v360
      %v371 = vpack.c.b16 %v363, %v362
      %380 = vmatpush.bf16.msra.mxu0 %v371
      %381 = vmatpush.bf16.msra.mxu0 %v370
      %382 = vmatpush.bf16.msra.mxu0 %v369
      %383 = vmatpush.bf16.msra.mxu0 %v368
      %384 = vmatpush.bf16.msra.mxu0 %v367
      %385 = vmatpush.bf16.msra.mxu0 %v366
      %386 = vmatpush.bf16.msra.mxu0 %v365
      %387 = vmatpush.bf16.msra.mxu0 %v364
      %388 = vmatmul.bf16.gmra.mxu0 %v331
      %v389 = vpop.f32.mrf.mxu0
      %v390 = vadd.f32 0.0, %v389
      %v391 = vpop.f32.mrf.mxu0
      %392 = vdwg.mxu0
      %vm393 = vcmask 130048
      %394 = vst.msk [vmem:[%s246] sm:$0xff] %vm393, %v390
      %p395 = scmp.lt.s32.totalorder %s17, 1
      %s396 = scalar_select %p395, %s17, 1
      %s397 = smul.addr %s396, 8
      %s398 = scalar_lea.vmem %s6, %s397
      // Predicated region
      $region45: #{_lambda_.6} parent=43 // pred_check
        %p399 = pneg %p166
      $region46: #{_lambda_.6} parent=43 // pred_check_branch
        %401 = sbr.rel (%p399) target = $region48
      $region47: #{_lambda_.6} parent=43 // pred_region
        _
      $region48: #{_lambda_.6} parent=43 // pred_fallthru
        _
    $region44: #{_lambda_.6} parent=5 // pred_fallthru
      _
    %p402 = scmp.le.s32.totalorder 2, %s12
    // Predicated region
    $region49: #{_lambda_.6} parent=5 // pred_check
      %p403 = pneg %p402
    $region50: #{_lambda_.6} parent=5 // pred_check_branch
      %405 = sbr.rel (%p403) target = $region52
    $region51: #{_lambda_.6} parent=5 // pred_region
      %s406 = ssub.s32 %s12, 2
      // Predicated region
      $region53: #{_lambda_.6} parent=51 // pred_check
        %p407 = pneg %p172
      $region54: #{_lambda_.6} parent=51 // pred_check_branch
        %409 = sbr.rel (%p407) target = $region56
      $region55: #{_lambda_.6} parent=51 // pred_region
        %p410 = scmp.lt.s32.totalorder %s18, 1
        %s411 = scalar_select %p410, %s18, 1
        %s412 = smul.addr %s411, 8
        %s413 = scalar_lea.vmem %s6, %s412
      $region56: #{_lambda_.6} parent=51 // pred_fallthru
        _
    $region52: #{_lambda_.6} parent=5 // pred_fallthru
      _
  $region6: #{_lambda_.6} parent=0 // loop_footer
    %s16 = sadd.s32 1, %s12
  $region7: #{_lambda_.6} parent=0 // loop_footer_branch
    %11 = sbr.rel target = $region3
  $region8: #{_lambda_.6} parent=0 // loop_exit
    _

// kernel: _lambda_.7
$region0: #{_lambda_.7}
  #allocation0 [shape = 'u32[]', space=smem, size = 0x4, offset = 0x4, fixed_abs, tag = 'smem constant byte address 0x4 - core index']
  #allocation1 [shape = 'u32[72,128]{1,0:T(1,128)}', space=vmem, size = 0x9000, scoped, tag = 'internal scratch']
  %s0 = inlined_call_operand.vmem [shape: f32[16,128], index: 0, kind: input, shape index: {}]
  %s1 = inlined_call_operand.vmem [shape: f32[16,16], index: 1, kind: input, shape index: {}]
  %s2 = inlined_call_operand.vmem [shape: f32[1,128], index: 2, kind: input, shape index: {}, may-alias: {2,6}]
  %s3 = inlined_call_operand.vmem [shape: f32[1,128], index: 3, kind: input, shape index: {}, may-alias: {3,7,16}]
  %s4 = inlined_call_operand.vmem [shape: bf16[128,128], index: 4, kind: input, shape index: {}]
  %s5 = inlined_call_operand.vmem [shape: f32[1,128], index: 5, kind: input, shape index: {}]
  %s6 = inlined_call_operand.vmem [shape: f32[1,128], index: 6, kind: input, shape index: {}, may-alias: {2,6}]
  %s7 = inlined_call_operand.vmem [shape: f32[1,128], index: 7, kind: input, shape index: {}, may-alias: {3,7,16}]
  %s8 = inlined_call_operand.vmem [shape: bf16[16,128], index: 8, kind: input, shape index: {}]
  %s9 = inlined_call_operand.hbm [shape: bf16[128,256], index: 9, kind: input, shape index: {}]
  %s10 = inlined_call_operand.vmem [shape: f32[1,256], index: 10, kind: input, shape index: {}]
  %s11 = inlined_call_operand.hbm [shape: bf16[256,128], index: 11, kind: input, shape index: {}]
  %s12 = inlined_call_operand.vmem [shape: f32[1,128], index: 12, kind: input, shape index: {}]
  %s13 = inlined_call_operand.hbm [shape: bf16[128,256], index: 13, kind: input, shape index: {}]
  %s14 = inlined_call_operand.vmem [shape: f32[1,256], index: 14, kind: input, shape index: {}]
  %s15 = inlined_call_operand.hbm [shape: bf16[256,128], index: 15, kind: input, shape index: {}]
  %s16 = inlined_call_operand.vmem [shape: f32[1,128], index: 16, kind: input, shape index: {}, may-alias: {3,7,16}]
  %s17 = inlined_call_operand.hbm [shape: f32[16,128], index: 17, kind: output, shape index: {}]
  %s18 = sld [smem:[#allocation0]]
  $region117: #{_lambda_.7} parent=0
    _
  %s20 = ssub.s32 1, %s18
  %s21 = scalar_select 0, %s20, %s18
  $region1: #{_lambda_.7} parent=0
    #allocation2 [shape = 'u8[65536]{0}', space=vmem, size = 0x10000, scoped, tag = 'input window, operand 9, single buffered']
    #allocation3 [shape = 's32[2]{0}', space=sflag, size = 0x8, scoped, tag = 'scoped memory for _lambda_.7']
    #allocation4 [shape = 's32[2]{0}', space=sflag, size = 0x8, scoped, tag = 'scoped memory for _lambda_.7']
    #allocation5 [shape = 'u8[65536]{0}', space=vmem, size = 0x10000, scoped, tag = 'input window, operand 11, single buffered']
    #allocation6 [shape = 's32[1]{0}', space=sflag, size = 0x4, scoped, tag = 'scoped memory for _lambda_.7']
    #allocation7 [shape = 'u8[65536]{0}', space=vmem, size = 0x10000, scoped, tag = 'input window, operand 13, single buffered']
    #allocation8 [shape = 'u8[65536]{0}', space=vmem, size = 0x10000, scoped, tag = 'input window, operand 15, single buffered']
    #allocation9 [shape = 's32[1]{0}', space=sflag, size = 0x4, scoped, tag = 'scoped memory for _lambda_.7']
    #allocation10 [shape = 'u8[8192]{0}', space=vmem, size = 0x2000, scoped, tag = 'output window, operand 0']
    %22 = vsyncpa [#allocation3], 0
    %23 = vsyncpa [#allocation6], 0
    %24 = vsyncpa [#allocation9], 0
    %25 = vsyncpa [#allocation4], 0
    %s26 = scalar_lea.sflag [#allocation4], 1
    %27 = vsyncpa %s26, 0
    loop: start=0, step=1, limit=4
    $region2: #{_lambda_.7} parent=1 // loop_pre_header
      _
    $region3: #{_lambda_.7} parent=1 // loop_header
      %s29 = sphi 0, %s33
      %p30 = scmp.ge.s32.totalorder %s29, 4
      %s39 = sphi 0, %s41
      %s42 = sphi 0, %s39
      %s43 = sphi 0, %s42
      %s59 = sphi 0, %s43
      %s65 = sphi 0, %s67
      %s68 = sphi 0, %s65
      %s69 = sphi 0, %s68
      %s85 = sphi 0, %s69
      %s89 = sphi 0, %s89
      %s91 = sphi 0, %s89
      %s92 = sphi 0, %s91
      %s106 = sphi 0, %s92
      %s110 = sphi 0, %s110
      %s112 = sphi 0, %s110
      %s113 = sphi 0, %s112
      %s127 = sphi 0, %s113
      %s131 = sphi 0, %s131
      %s133 = sphi 0, %s131
      %s134 = sphi 0, %s133
      %s148 = sphi 0, %s134
      %s152 = sphi 0, %s152
      %s154 = sphi 0, %s152
      %s155 = sphi 0, %s154
      %s169 = sphi 0, %s155
      %s173 = sphi 0, %s173
      %s175 = sphi 0, %s173
      %s176 = sphi 0, %s175
      %s190 = sphi 0, %s176
      %s194 = sphi 0, %s194
      %s196 = sphi 0, %s194
      %s197 = sphi 0, %s196
      %s211 = sphi 0, %s197
      %s215 = sphi 0, %s215
      %s217 = sphi 0, %s215
      %s218 = sphi 0, %s217
      %s232 = sphi 0, %s218
      %s236 = sphi 0, %s236
      %s238 = sphi 0, %s236
      %s239 = sphi 0, %s238
      %s253 = sphi 0, %s239
      %s257 = sphi 0, %s257
      %s259 = sphi 0, %s257
      %s260 = sphi 0, %s259
      %s274 = sphi 0, %s260
      %s278 = sphi 0, %s278
      %s280 = sphi 0, %s278
      %s281 = sphi 0, %s280
      %s295 = sphi 0, %s281
      %s299 = sphi 0, %s299
      %s301 = sphi 0, %s299
      %s302 = sphi 0, %s301
      %s316 = sphi 0, %s302
      %s320 = sphi 0, %s320
      %s322 = sphi 0, %s320
      %s323 = sphi 0, %s322
      %s337 = sphi 0, %s323
      %s341 = sphi 0, %s341
      %s343 = sphi 0, %s341
      %s344 = sphi 0, %s343
      %s358 = sphi 0, %s344
      %s362 = sphi 0, %s362
      %s364 = sphi 0, %s362
      %s365 = sphi 0, %s364
      %s379 = sphi 0, %s365
      %s383 = sphi 0, %s383
      %s385 = sphi 0, %s383
      %s386 = sphi 0, %s385
      %s400 = sphi 0, %s386
      %s406 = sphi 0, %s408
      %s409 = sphi 0, %s406
      %s410 = sphi 0, %s409
      %s426 = sphi 0, %s410
    $region4: #{_lambda_.7} parent=1 // loop_header_branch
      %32 = sbr.rel (%p30) target = $region8
    $region5: #{_lambda_.7} parent=1 // loop_body
      %s34 = ssub.s32 %s29, 1
      %s35 = ssub.s32 %s29, 2
      %s36 = sadd.s32 %s29, 1
      %s37 = ssub.s32 %s29, %s36
      %p38 = scmp.eq.s32.totalorder %s37, 0
      %s40 = sadd.s32 %s39, 1
      %s41 = scalar_select %p38, %s39, %s40
      %p44 = pneg %p38
      %p45 = scmp.eq.s32.totalorder %s29, 1
      %p46 = por %p44, %p45
      %p47 = scmp.ne.s32.totalorder %s39, %s42
      %p48 = scmp.eq.s32.totalorder %s29, 0
      %p49 = por %p47, %p48
      %p50 = scmp.ne.s32.totalorder %s39, %s42
      %p51 = scmp.eq.s32.totalorder %s34, 1
      %p52 = por %p50, %p51
      %p53 = scmp.ne.s32.totalorder %s42, %s43
      %p54 = scmp.eq.s32.totalorder %s34, 0
      %p55 = por %p53, %p54
      %p56 = scmp.ne.s32.totalorder %s42, %s43
      %p57 = scmp.eq.s32.totalorder %s35, 1
      %p58 = por %p56, %p57
      %p60 = scmp.ne.s32.totalorder %s43, %s59
      %p61 = scmp.eq.s32.totalorder %s35, 0
      %p62 = por %p60, %p61
      %s63 = ssub.s32 %s29, %s36
      %p64 = scmp.eq.s32.totalorder %s63, 0
      %s66 = sadd.s32 %s65, 1
      %s67 = scalar_select %p64, %s65, %s66
      %p70 = pneg %p64
      %p71 = scmp.eq.s32.totalorder %s29, 1
      %p72 = por %p70, %p71
      %p73 = scmp.ne.s32.totalorder %s65, %s68
      %p74 = scmp.eq.s32.totalorder %s29, 0
      %p75 = por %p73, %p74
      %p76 = scmp.ne.s32.totalorder %s65, %s68
      %p77 = scmp.eq.s32.totalorder %s34, 1
      %p78 = por %p76, %p77
      %p79 = scmp.ne.s32.totalorder %s68, %s69
      %p80 = scmp.eq.s32.totalorder %s34, 0
      %p81 = por %p79, %p80
      %p82 = scmp.ne.s32.totalorder %s68, %s69
      %p83 = scmp.eq.s32.totalorder %s35, 1
      %p84 = por %p82, %p83
      %p86 = scmp.ne.s32.totalorder %s69, %s85
      %p87 = scmp.eq.s32.totalorder %s35, 0
      %p88 = por %p86, %p87
      %s90 = sadd.s32 %s89, 1
      %p93 = scmp.eq.s32.totalorder %s29, 1
      %p94 = scmp.ne.s32.totalorder %s89, %s91
      %p95 = scmp.eq.s32.totalorder %s29, 0
      %p96 = por %p94, %p95
      %p97 = scmp.ne.s32.totalorder %s89, %s91
      %p98 = scmp.eq.s32.totalorder %s34, 1
      %p99 = por %p97, %p98
      %p100 = scmp.ne.s32.totalorder %s91, %s92
      %p101 = scmp.eq.s32.totalorder %s34, 0
      %p102 = por %p100, %p101
      %p103 = scmp.ne.s32.totalorder %s91, %s92
      %p104 = scmp.eq.s32.totalorder %s35, 1
      %p105 = por %p103, %p104
      %p107 = scmp.ne.s32.totalorder %s92, %s106
      %p108 = scmp.eq.s32.totalorder %s35, 0
      %p109 = por %p107, %p108
      %s111 = sadd.s32 %s110, 1
      %p114 = scmp.eq.s32.totalorder %s29, 1
      %p115 = scmp.ne.s32.totalorder %s110, %s112
      %p116 = scmp.eq.s32.totalorder %s29, 0
      %p117 = por %p115, %p116
      %p118 = scmp.ne.s32.totalorder %s110, %s112
      %p119 = scmp.eq.s32.totalorder %s34, 1
      %p120 = por %p118, %p119
      %p121 = scmp.ne.s32.totalorder %s112, %s113
      %p122 = scmp.eq.s32.totalorder %s34, 0
      %p123 = por %p121, %p122
      %p124 = scmp.ne.s32.totalorder %s112, %s113
      %p125 = scmp.eq.s32.totalorder %s35, 1
      %p126 = por %p124, %p125
      %p128 = scmp.ne.s32.totalorder %s113, %s127
      %p129 = scmp.eq.s32.totalorder %s35, 0
      %p130 = por %p128, %p129
      %s132 = sadd.s32 %s131, 1
      %p135 = scmp.eq.s32.totalorder %s29, 1
      %p136 = scmp.ne.s32.totalorder %s131, %s133
      %p137 = scmp.eq.s32.totalorder %s29, 0
      %p138 = por %p136, %p137
      %p139 = scmp.ne.s32.totalorder %s131, %s133
      %p140 = scmp.eq.s32.totalorder %s34, 1
      %p141 = por %p139, %p140
      %p142 = scmp.ne.s32.totalorder %s133, %s134
      %p143 = scmp.eq.s32.totalorder %s34, 0
      %p144 = por %p142, %p143
      %p145 = scmp.ne.s32.totalorder %s133, %s134
      %p146 = scmp.eq.s32.totalorder %s35, 1
      %p147 = por %p145, %p146
      %p149 = scmp.ne.s32.totalorder %s134, %s148
      %p150 = scmp.eq.s32.totalorder %s35, 0
      %p151 = por %p149, %p150
      %s153 = sadd.s32 %s152, 1
      %p156 = scmp.eq.s32.totalorder %s29, 1
      %p157 = scmp.ne.s32.totalorder %s152, %s154
      %p158 = scmp.eq.s32.totalorder %s29, 0
      %p159 = por %p157, %p158
      %p160 = scmp.ne.s32.totalorder %s152, %s154
      %p161 = scmp.eq.s32.totalorder %s34, 1
      %p162 = por %p160, %p161
      %p163 = scmp.ne.s32.totalorder %s154, %s155
      %p164 = scmp.eq.s32.totalorder %s34, 0
      %p165 = por %p163, %p164
      %p166 = scmp.ne.s32.totalorder %s154, %s155
      %p167 = scmp.eq.s32.totalorder %s35, 1
      %p168 = por %p166, %p167
      %p170 = scmp.ne.s32.totalorder %s155, %s169
      %p171 = scmp.eq.s32.totalorder %s35, 0
      %p172 = por %p170, %p171
      %s174 = sadd.s32 %s173, 1
      %p177 = scmp.eq.s32.totalorder %s29, 1
      %p178 = scmp.ne.s32.totalorder %s173, %s175
      %p179 = scmp.eq.s32.totalorder %s29, 0
      %p180 = por %p178, %p179
      %p181 = scmp.ne.s32.totalorder %s173, %s175
      %p182 = scmp.eq.s32.totalorder %s34, 1
      %p183 = por %p181, %p182
      %p184 = scmp.ne.s32.totalorder %s175, %s176
      %p185 = scmp.eq.s32.totalorder %s34, 0
      %p186 = por %p184, %p185
      %p187 = scmp.ne.s32.totalorder %s175, %s176
      %p188 = scmp.eq.s32.totalorder %s35, 1
      %p189 = por %p187, %p188
      %p191 = scmp.ne.s32.totalorder %s176, %s190
      %p192 = scmp.eq.s32.totalorder %s35, 0
      %p193 = por %p191, %p192
      %s195 = sadd.s32 %s194, 1
      %p198 = scmp.eq.s32.totalorder %s29, 1
      %p199 = scmp.ne.s32.totalorder %s194, %s196
      %p200 = scmp.eq.s32.totalorder %s29, 0
      %p201 = por %p199, %p200
      %p202 = scmp.ne.s32.totalorder %s194, %s196
      %p203 = scmp.eq.s32.totalorder %s34, 1
      %p204 = por %p202, %p203
      %p205 = scmp.ne.s32.totalorder %s196, %s197
      %p206 = scmp.eq.s32.totalorder %s34, 0
      %p207 = por %p205, %p206
      %p208 = scmp.ne.s32.totalorder %s196, %s197
      %p209 = scmp.eq.s32.totalorder %s35, 1
      %p210 = por %p208, %p209
      %p212 = scmp.ne.s32.totalorder %s197, %s211
      %p213 = scmp.eq.s32.totalorder %s35, 0
      %p214 = por %p212, %p213
      %s216 = sadd.s32 %s215, 1
      %p219 = scmp.eq.s32.totalorder %s29, 1
      %p220 = scmp.ne.s32.totalorder %s215, %s217
      %p221 = scmp.eq.s32.totalorder %s29, 0
      %p222 = por %p220, %p221
      %p223 = scmp.ne.s32.totalorder %s215, %s217
      %p224 = scmp.eq.s32.totalorder %s34, 1
      %p225 = por %p223, %p224
      %p226 = scmp.ne.s32.totalorder %s217, %s218
      %p227 = scmp.eq.s32.totalorder %s34, 0
      %p228 = por %p226, %p227
      %p229 = scmp.ne.s32.totalorder %s217, %s218
      %p230 = scmp.eq.s32.totalorder %s35, 1
      %p231 = por %p229, %p230
      %p233 = scmp.ne.s32.totalorder %s218, %s232
      %p234 = scmp.eq.s32.totalorder %s35, 0
      %p235 = por %p233, %p234
      %s237 = sadd.s32 %s236, 1
      %p240 = scmp.eq.s32.totalorder %s29, 1
      %p241 = scmp.ne.s32.totalorder %s236, %s238
      %p242 = scmp.eq.s32.totalorder %s29, 0
      %p243 = por %p241, %p242
      %p244 = scmp.ne.s32.totalorder %s236, %s238
      %p245 = scmp.eq.s32.totalorder %s34, 1
      %p246 = por %p244, %p245
      %p247 = scmp.ne.s32.totalorder %s238, %s239
      %p248 = scmp.eq.s32.totalorder %s34, 0
      %p249 = por %p247, %p248
      %p250 = scmp.ne.s32.totalorder %s238, %s239
      %p251 = scmp.eq.s32.totalorder %s35, 1
      %p252 = por %p250, %p251
      %p254 = scmp.ne.s32.totalorder %s239, %s253
      %p255 = scmp.eq.s32.totalorder %s35, 0
      %p256 = por %p254, %p255
      %s258 = sadd.s32 %s257, 1
      %p261 = scmp.eq.s32.totalorder %s29, 1
      %p262 = scmp.ne.s32.totalorder %s257, %s259
      %p263 = scmp.eq.s32.totalorder %s29, 0
      %p264 = por %p262, %p263
      %p265 = scmp.ne.s32.totalorder %s257, %s259
      %p266 = scmp.eq.s32.totalorder %s34, 1
      %p267 = por %p265, %p266
      %p268 = scmp.ne.s32.totalorder %s259, %s260
      %p269 = scmp.eq.s32.totalorder %s34, 0
      %p270 = por %p268, %p269
      %p271 = scmp.ne.s32.totalorder %s259, %s260
      %p272 = scmp.eq.s32.totalorder %s35, 1
      %p273 = por %p271, %p272
      %p275 = scmp.ne.s32.totalorder %s260, %s274
      %p276 = scmp.eq.s32.totalorder %s35, 0
      %p277 = por %p275, %p276
      %s279 = sadd.s32 %s278, 1
      %p282 = scmp.eq.s32.totalorder %s29, 1
      %p283 = scmp.ne.s32.totalorder %s278, %s280
      %p284 = scmp.eq.s32.totalorder %s29, 0
      %p285 = por %p283, %p284
      %p286 = scmp.ne.s32.totalorder %s278, %s280
      %p287 = scmp.eq.s32.totalorder %s34, 1
      %p288 = por %p286, %p287
      %p289 = scmp.ne.s32.totalorder %s280, %s281
      %p290 = scmp.eq.s32.totalorder %s34, 0
      %p291 = por %p289, %p290
      %p292 = scmp.ne.s32.totalorder %s280, %s281
      %p293 = scmp.eq.s32.totalorder %s35, 1
      %p294 = por %p292, %p293
      %p296 = scmp.ne.s32.totalorder %s281, %s295
      %p297 = scmp.eq.s32.totalorder %s35, 0
      %p298 = por %p296, %p297
      %s300 = sadd.s32 %s299, 1
      %p303 = scmp.eq.s32.totalorder %s29, 1
      %p304 = scmp.ne.s32.totalorder %s299, %s301
      %p305 = scmp.eq.s32.totalorder %s29, 0
      %p306 = por %p304, %p305
      %p307 = scmp.ne.s32.totalorder %s299, %s301
      %p308 = scmp.eq.s32.totalorder %s34, 1
      %p309 = por %p307, %p308
      %p310 = scmp.ne.s32.totalorder %s301, %s302
      %p311 = scmp.eq.s32.totalorder %s34, 0
      %p312 = por %p310, %p311
      %p313 = scmp.ne.s32.totalorder %s301, %s302
      %p314 = scmp.eq.s32.totalorder %s35, 1
      %p315 = por %p313, %p314
      %p317 = scmp.ne.s32.totalorder %s302, %s316
      %p318 = scmp.eq.s32.totalorder %s35, 0
      %p319 = por %p317, %p318
      %s321 = sadd.s32 %s320, 1
      %p324 = scmp.eq.s32.totalorder %s29, 1
      %p325 = scmp.ne.s32.totalorder %s320, %s322
      %p326 = scmp.eq.s32.totalorder %s29, 0
      %p327 = por %p325, %p326
      %p328 = scmp.ne.s32.totalorder %s320, %s322
      %p329 = scmp.eq.s32.totalorder %s34, 1
      %p330 = por %p328, %p329
      %p331 = scmp.ne.s32.totalorder %s322, %s323
      %p332 = scmp.eq.s32.totalorder %s34, 0
      %p333 = por %p331, %p332
      %p334 = scmp.ne.s32.totalorder %s322, %s323
      %p335 = scmp.eq.s32.totalorder %s35, 1
      %p336 = por %p334, %p335
      %p338 = scmp.ne.s32.totalorder %s323, %s337
      %p339 = scmp.eq.s32.totalorder %s35, 0
      %p340 = por %p338, %p339
      %s342 = sadd.s32 %s341, 1
      %p345 = scmp.eq.s32.totalorder %s29, 1
      %p346 = scmp.ne.s32.totalorder %s341, %s343
      %p347 = scmp.eq.s32.totalorder %s29, 0
      %p348 = por %p346, %p347
      %p349 = scmp.ne.s32.totalorder %s341, %s343
      %p350 = scmp.eq.s32.totalorder %s34, 1
      %p351 = por %p349, %p350
      %p352 = scmp.ne.s32.totalorder %s343, %s344
      %p353 = scmp.eq.s32.totalorder %s34, 0
      %p354 = por %p352, %p353
      %p355 = scmp.ne.s32.totalorder %s343, %s344
      %p356 = scmp.eq.s32.totalorder %s35, 1
      %p357 = por %p355, %p356
      %p359 = scmp.ne.s32.totalorder %s344, %s358
      %p360 = scmp.eq.s32.totalorder %s35, 0
      %p361 = por %p359, %p360
      %s363 = sadd.s32 %s362, 1
      %p366 = scmp.eq.s32.totalorder %s29, 1
      %p367 = scmp.ne.s32.totalorder %s362, %s364
      %p368 = scmp.eq.s32.totalorder %s29, 0
      %p369 = por %p367, %p368
      %p370 = scmp.ne.s32.totalorder %s362, %s364
      %p371 = scmp.eq.s32.totalorder %s34, 1
      %p372 = por %p370, %p371
      %p373 = scmp.ne.s32.totalorder %s364, %s365
      %p374 = scmp.eq.s32.totalorder %s34, 0
      %p375 = por %p373, %p374
      %p376 = scmp.ne.s32.totalorder %s364, %s365
      %p377 = scmp.eq.s32.totalorder %s35, 1
      %p378 = por %p376, %p377
      %p380 = scmp.ne.s32.totalorder %s365, %s379
      %p381 = scmp.eq.s32.totalorder %s35, 0
      %p382 = por %p380, %p381
      %s384 = sadd.s32 %s383, 1
      %p387 = scmp.eq.s32.totalorder %s29, 1
      %p388 = scmp.ne.s32.totalorder %s383, %s385
      %p389 = scmp.eq.s32.totalorder %s29, 0
      %p390 = por %p388, %p389
      %p391 = scmp.ne.s32.totalorder %s383, %s385
      %p392 = scmp.eq.s32.totalorder %s34, 1
      %p393 = por %p391, %p392
      %p394 = scmp.ne.s32.totalorder %s385, %s386
      %p395 = scmp.eq.s32.totalorder %s34, 0
      %p396 = por %p394, %p395
      %p397 = scmp.ne.s32.totalorder %s385, %s386
      %p398 = scmp.eq.s32.totalorder %s35, 1
      %p399 = por %p397, %p398
      %p401 = scmp.ne.s32.totalorder %s386, %s400
      %p402 = scmp.eq.s32.totalorder %s35, 0
      %p403 = por %p401, %p402
      %s404 = ssub.s32 %s29, %s36
      %p405 = scmp.eq.s32.totalorder %s404, 0
      %s407 = sadd.s32 %s406, 1
      %s408 = scalar_select %p405, %s406, %s407
      %p411 = pneg %p405
      %p412 = scmp.eq.s32.totalorder %s29, 1
      %p413 = por %p411, %p412
      %p414 = scmp.ne.s32.totalorder %s406, %s409
      %p415 = scmp.eq.s32.totalorder %s29, 0
      %p416 = por %p414, %p415
      %p417 = scmp.ne.s32.totalorder %s406, %s409
      %p418 = scmp.eq.s32.totalorder %s34, 1
      %p419 = por %p417, %p418
      %p420 = scmp.ne.s32.totalorder %s409, %s410
      %p421 = scmp.eq.s32.totalorder %s34, 0
      %p422 = por %p420, %p421
      %p423 = scmp.ne.s32.totalorder %s409, %s410
      %p424 = scmp.eq.s32.totalorder %s35, 1
      %p425 = por %p423, %p424
      %p427 = scmp.ne.s32.totalorder %s410, %s426
      %p428 = scmp.eq.s32.totalorder %s35, 0
      %p429 = por %p427, %p428
      %p430 = scmp.le.s32.totalorder 1, %s29
      %p431 = scmp.lt.s32.totalorder %s29, 3
      %p432 = pnand %p430, %p431
      %p433 = pneg %p432
      // Predicated region
      $region9: #{_lambda_.7} parent=5 // pred_check
        _
      $region10: #{_lambda_.7} parent=5 // pred_check_branch
        %435 = sbr.rel (%p432) target = $region12
      $region11: #{_lambda_.7} parent=5 // pred_region
        %s436 = ssub.s32 %s29, 1
        // Predicated region
        $region13: #{_lambda_.7} parent=11 // pred_check
          %p437 = pneg %p102
        $region14: #{_lambda_.7} parent=11 // pred_check_branch
          %439 = sbr.rel (%p437) target = $region16
        $region15: #{_lambda_.7} parent=11 // pred_region
          _
        $region16: #{_lambda_.7} parent=11 // pred_fallthru
          _
        // Predicated region
        $region17: #{_lambda_.7} parent=11 // pred_check
          %p440 = pneg %p123
        $region18: #{_lambda_.7} parent=11 // pred_check_branch
          %442 = sbr.rel (%p440) target = $region20
        $region19: #{_lambda_.7} parent=11 // pred_region
          _
        $region20: #{_lambda_.7} parent=11 // pred_fallthru
          _
        // Predicated region
        $region21: #{_lambda_.7} parent=11 // pred_check
          %p443 = pneg %p144
        $region22: #{_lambda_.7} parent=11 // pred_check_branch
          %445 = sbr.rel (%p443) target = $region24
        $region23: #{_lambda_.7} parent=11 // pred_region
          _
        $region24: #{_lambda_.7} parent=11 // pred_fallthru
          _
        // Predicated region
        $region25: #{_lambda_.7} parent=11 // pred_check
          %p446 = pneg %p165
        $region26: #{_lambda_.7} parent=11 // pred_check_branch
          %448 = sbr.rel (%p446) target = $region28
        $region27: #{_lambda_.7} parent=11 // pred_region
          _
        $region28: #{_lambda_.7} parent=11 // pred_fallthru
          _
        // Predicated region
        $region29: #{_lambda_.7} parent=11 // pred_check
          %p449 = pneg %p186
        $region30: #{_lambda_.7} parent=11 // pred_check_branch
          %451 = sbr.rel (%p449) target = $region32
        $region31: #{_lambda_.7} parent=11 // pred_region
          _
        $region32: #{_lambda_.7} parent=11 // pred_fallthru
          _
        // Predicated region
        $region33: #{_lambda_.7} parent=11 // pred_check
          %p452 = pneg %p207
        $region34: #{_lambda_.7} parent=11 // pred_check_branch
          %454 = sbr.rel (%p452) target = $region36
        $region35: #{_lambda_.7} parent=11 // pred_region
          _
        $region36: #{_lambda_.7} parent=11 // pred_fallthru
          _
        // Predicated region
        $region37: #{_lambda_.7} parent=11 // pred_check
          %p455 = pneg %p228
        $region38: #{_lambda_.7} parent=11 // pred_check_branch
          %457 = sbr.rel (%p455) target = $region40
        $region39: #{_lambda_.7} parent=11 // pred_region
          _
        $region40: #{_lambda_.7} parent=11 // pred_fallthru
          _
        // Predicated region
        $region41: #{_lambda_.7} parent=11 // pred_check
          %p458 = pneg %p249
        $region42: #{_lambda_.7} parent=11 // pred_check_branch
          %460 = sbr.rel (%p458) target = $region44
        $region43: #{_lambda_.7} parent=11 // pred_region
          %462 = vsyncadd [#allocation3], 0
          %s463 = sshll.u32 %s9, 4
          %s464 = int_to_ptr.hbm [resolvable:$true] %s463
          %s465 = sshll.u32 [#allocation2], 4
          %s466 = int_to_ptr.vmem [resolvable:$true] %s465
          %471 = dma.hbm_to_vmem [thread:$0]  %s464, 2048, %s466, [#allocation3], 128, 128, 8
        $region44: #{_lambda_.7} parent=11 // pred_fallthru
          _
        // Predicated region
        $region45: #{_lambda_.7} parent=11 // pred_check
          %p472 = pneg %p270
        $region46: #{_lambda_.7} parent=11 // pred_check_branch
          %474 = sbr.rel (%p472) target = $region48
        $region47: #{_lambda_.7} parent=11 // pred_region
          _
        $region48: #{_lambda_.7} parent=11 // pred_fallthru
          _
        // Predicated region
        $region49: #{_lambda_.7} parent=11 // pred_check
          %p475 = pneg %p291
        $region50: #{_lambda_.7} parent=11 // pred_check_branch
          %477 = sbr.rel (%p475) target = $region52
        $region51: #{_lambda_.7} parent=11 // pred_region
          %479 = vsyncadd [#allocation6], 0
          %s480 = sshll.u32 %s11, 4
          %s481 = int_to_ptr.hbm [resolvable:$true] %s480
          %s482 = sshll.u32 [#allocation5], 4
          %s483 = int_to_ptr.vmem [resolvable:$true] %s482
          %488 = dma.hbm_to_vmem [thread:$0]  %s481, 2048, %s483, [#allocation6], 64, 64, 4
        $region52: #{_lambda_.7} parent=11 // pred_fallthru
          _
        // Predicated region
        $region53: #{_lambda_.7} parent=11 // pred_check
          %p489 = pneg %p312
        $region54: #{_lambda_.7} parent=11 // pred_check_branch
          %491 = sbr.rel (%p489) target = $region56
        $region55: #{_lambda_.7} parent=11 // pred_region
          _
        $region56: #{_lambda_.7} parent=11 // pred_fallthru
          _
        // Predicated region
        $region57: #{_lambda_.7} parent=11 // pred_check
          %p492 = pneg %p333
        $region58: #{_lambda_.7} parent=11 // pred_check_branch
          %494 = sbr.rel (%p492) target = $region60
        $region59: #{_lambda_.7} parent=11 // pred_region
          %496 = vsyncadd [#allocation6], 0
          %s497 = sshll.u32 %s13, 4
          %s498 = int_to_ptr.hbm [resolvable:$true] %s497
          %s499 = sshll.u32 [#allocation7], 4
          %s500 = int_to_ptr.vmem [resolvable:$true] %s499
          %505 = dma.hbm_to_vmem [thread:$0]  %s498, 2048, %s500, [#allocation6], 128, 128, 8
        $region60: #{_lambda_.7} parent=11 // pred_fallthru
          _
        // Predicated region
        $region61: #{_lambda_.7} parent=11 // pred_check
          %p506 = pneg %p354
        $region62: #{_lambda_.7} parent=11 // pred_check_branch
          %508 = sbr.rel (%p506) target = $region64
        $region63: #{_lambda_.7} parent=11 // pred_region
          _
        $region64: #{_lambda_.7} parent=11 // pred_fallthru
          _
        // Predicated region
        $region65: #{_lambda_.7} parent=11 // pred_check
          %p509 = pneg %p375
        $region66: #{_lambda_.7} parent=11 // pred_check_branch
          %511 = sbr.rel (%p509) target = $region68
        $region67: #{_lambda_.7} parent=11 // pred_region
          %513 = vsyncadd [#allocation9], 0
          %s514 = sshll.u32 %s15, 4
          %s515 = int_to_ptr.hbm [resolvable:$true] %s514
          %s516 = sshll.u32 [#allocation8], 4
          %s517 = int_to_ptr.vmem [resolvable:$true] %s516
          %522 = dma.hbm_to_vmem [thread:$0]  %s515, 2048, %s517, [#allocation9], 64, 64, 4
        $region68: #{_lambda_.7} parent=11 // pred_fallthru
          _
        // Predicated region
        $region69: #{_lambda_.7} parent=11 // pred_check
          %p523 = pneg %p396
        $region70: #{_lambda_.7} parent=11 // pred_check_branch
          %525 = sbr.rel (%p523) target = $region72
        $region71: #{_lambda_.7} parent=11 // pred_region
          _
        $region72: #{_lambda_.7} parent=11 // pred_fallthru
          _
      $region12: #{_lambda_.7} parent=5 // pred_fallthru
        _
      %p526 = scmp.lt.s32.totalorder %s29, 2
      // Predicated region
      $region73: #{_lambda_.7} parent=5 // pred_check
        %p527 = pneg %p526
      $region74: #{_lambda_.7} parent=5 // pred_check_branch
        %529 = sbr.rel (%p527) target = $region76
      $region75: #{_lambda_.7} parent=5 // pred_region
        // Predicated region
        $region77: #{_lambda_.7} parent=75 // pred_check
          %p530 = pneg %p49
        $region78: #{_lambda_.7} parent=75 // pred_check_branch
          %532 = sbr.rel (%p530) target = $region80
        $region79: #{_lambda_.7} parent=75 // pred_region
          %p533 = scmp.lt.s32.totalorder %s29, 1
          %s534 = scalar_select %p533, %s29, 1
          %s535 = smul.addr %s534, 8
          %s536 = scalar_lea.vmem %s0, %s535
        $region80: #{_lambda_.7} parent=75 // pred_fallthru
          _
        // Predicated region
        $region81: #{_lambda_.7} parent=75 // pred_check
          %p537 = pneg %p75
        $region82: #{_lambda_.7} parent=75 // pred_check_branch
          %539 = sbr.rel (%p537) target = $region84
        $region83: #{_lambda_.7} parent=75 // pred_region
          %p540 = scmp.lt.s32.totalorder %s29, 1
          %s541 = scalar_select %p540, %s29, 1
          %s542 = smul.addr %s541, 8
          %s543 = scalar_lea.vmem %s1, %s542
        $region84: #{_lambda_.7} parent=75 // pred_fallthru
          _
      $region76: #{_lambda_.7} parent=5 // pred_fallthru
        _
      %p544 = scmp.le.s32.totalorder 1, %s29
      %p545 = scmp.lt.s32.totalorder %s29, 3
      %p546 = pnand %p544, %p545
      %p547 = pneg %p546
      // Predicated region
      $region85: #{_lambda_.7} parent=5 // pred_check
        _
      $region86: #{_lambda_.7} parent=5 // pred_check_branch
        %549 = sbr.rel (%p546) target = $region88
      $region87: #{_lambda_.7} parent=5 // pred_region
        %s550 = ssub.s32 %s29, 1
        // Predicated region
        $region89: #{_lambda_.7} parent=87 // pred_check
          %p551 = pneg %p249
        $region90: #{_lambda_.7} parent=87 // pred_check_branch
          %553 = sbr.rel (%p551) target = $region92
        $region91: #{_lambda_.7} parent=87 // pred_region
          %555 = dma.done [#allocation3], 2048
        $region92: #{_lambda_.7} parent=87 // pred_fallthru
          _
        // Predicated region
        $region93: #{_lambda_.7} parent=87 // pred_check
          %p556 = pneg %p291
        $region94: #{_lambda_.7} parent=87 // pred_check_branch
          %558 = sbr.rel (%p556) target = $region96
        $region95: #{_lambda_.7} parent=87 // pred_region
          %560 = dma.done [#allocation6], 2048
        $region96: #{_lambda_.7} parent=87 // pred_fallthru
          _
        // Predicated region
        $region97: #{_lambda_.7} parent=87 // pred_check
          %p561 = pneg %p333
        $region98: #{_lambda_.7} parent=87 // pred_check_branch
          %563 = sbr.rel (%p561) target = $region100
        $region99: #{_lambda_.7} parent=87 // pred_region
          %565 = dma.done [#allocation6], 2048
        $region100: #{_lambda_.7} parent=87 // pred_fallthru
          _
        // Predicated region
        $region101: #{_lambda_.7} parent=87 // pred_check
          %p566 = pneg %p375
        $region102: #{_lambda_.7} parent=87 // pred_check_branch
          %568 = sbr.rel (%p566) target = $region104
        $region103: #{_lambda_.7} parent=87 // pred_region
          %570 = dma.done [#allocation9], 2048
        $region104: #{_lambda_.7} parent=87 // pred_fallthru
          _
        %p571 = scmp.lt.s32.totalorder %s34, 1
        %s572 = scalar_select %p571, %s34, 1
        %s573 = smul.addr %s572, 8
        %s574 = scalar_lea.vmem %s0, %s573
        %p575 = pneg %p55
        %p576 = pneg %p52
        %p577 = scmp.lt.s32.totalorder %s34, 1
        %s578 = scalar_select %p577, %s34, 1
        %s579 = smul.addr %s578, 8
        %s580 = scalar_lea.vmem %s1, %s579
        %p581 = pneg %p81
        %p582 = pneg %p78
        %p583 = pneg %p102
        %p584 = pneg %p99
        %p585 = pneg %p123
        %p586 = pneg %p120
        %p587 = pneg %p144
        %p588 = pneg %p141
        %p589 = pneg %p165
        %p590 = pneg %p162
        %p591 = pneg %p186
        %p592 = pneg %p183
        %p593 = pneg %p207
        %p594 = pneg %p204
        %p595 = pneg %p228
        %p596 = pneg %p225
        %p597 = pneg %p249
        %p598 = pneg %p246
        %p599 = pneg %p270
        %p600 = pneg %p267
        %p601 = pneg %p291
        %p602 = pneg %p288
        %p603 = pneg %p312
        %p604 = pneg %p309
        %p605 = pneg %p333
        %p606 = pneg %p330
        %p607 = pneg %p354
        %p608 = pneg %p351
        %p609 = pneg %p375
        %p610 = pneg %p372
        %p611 = pneg %p396
        %p612 = pneg %p393
        %p613 = pneg %p422
        %p614 = pneg %p419
        %s615 = sand.u32 %s409, 1
        %s616 = scalar_lea.sflag [#allocation4], %s615
        %s617 = sand.u32 %s409, 1
        %s618 = smul.addr %s617, 8
        %s619 = scalar_lea.vmem [#allocation10], %s618
        %p620 = scmp.lt.s32.totalorder %s34, 1
        %s621 = scalar_select %p620, %s34, 1
        %s622 = smul.addr %s621, 8
        %s623 = scalar_lea.vmem %s0, %s622
        %p624 = scmp.lt.s32.totalorder %s34, 1
        %s625 = scalar_select %p624, %s34, 1
        %s626 = smul.addr %s625, 8
        %s627 = scalar_lea.vmem %s1, %s626
        %v629 = vld [vmem:[%s623] sm:$0xff]
        %v630 = vld [vmem:[%s2] sm:$0x1]
        %v631 = vld [vmem:[%s3] sm:$0x1]
        %632 = vadd.xlane.f32.xlu0 %v629
        %v633 = vpop.xlane.xlu0 %632
        %v634 = vrcp.pop 128.0
        %v635 = vmul.f32 128.0, %v634
        %v636 = vsub.f32 1.0, %v635
        %v637 = vmul.f32 %v634, %v636
        %v638 = vadd.f32 %v634, %v637
        %vm639 = vweird.f32 %v634
        %v640 = vsel %vm639, %v634, %v638
        %v641 = vmul.f32 %v633, %v640
        %v642 = vsub.f32 %v629, %v641
        %v643 = vmul.f32 %v642, %v642
        %644 = vadd.xlane.f32.xlu0 %v643
        %v645 = vpop.xlane.xlu0 %644
        %v646 = vmul.f32 %v645, %v640
        %v647 = vadd.f32 %v646, 1e-05
        %v648 = vrsqrt.pop %v647
        %v649 = vmul.f32 %v648, %v647
        %v650 = vmul.f32 %v649, %v648
        %v651 = vmul.f32 0.5, %v650
        %v652 = vsub.f32 1.5, %v651
        %v653 = vmul.f32 %v648, %v652
        %vm654 = vweird.f32 %v647
        %vm655 = vweird.f32 %v648
        %vm656 = vmor %vm654, %vm655
        %v657 = vsel %vm656, %v648, %v653
        %v658 = vmul.f32 %v642, %v657
        %v660 = vperm.slane %v630, 0
        %v662 = vmul.f32 %v658, %v660
        %v664 = vperm.slane %v631, 0
        %v666 = vadd.f32 %v662, %v664
        %v667 = vld [vmem:[%s4] sm:$0xf]
        %v668 = vld [vmem:[%s4 + $0x4] sm:$0xf]
        %v669 = vld [vmem:[%s4 + $0x8] sm:$0xf]
        %v670 = vld [vmem:[%s4 + $0xc] sm:$0xf]
        %v671 = vld [vmem:[%s4 + $0x10] sm:$0xf]
        %v672 = vld [vmem:[%s4 + $0x14] sm:$0xf]
        %v673 = vld [vmem:[%s4 + $0x18] sm:$0xf]
        %v674 = vld [vmem:[%s4 + $0x1c] sm:$0xf]
        %v675 = vld [vmem:[%s4 + $0x20] sm:$0xf]
        %v676 = vld [vmem:[%s4 + $0x24] sm:$0xf]
        %v677 = vld [vmem:[%s4 + $0x28] sm:$0xf]
        %v678 = vld [vmem:[%s4 + $0x2c] sm:$0xf]
        %v679 = vld [vmem:[%s4 + $0x30] sm:$0xf]
        %v680 = vld [vmem:[%s4 + $0x34] sm:$0xf]
        %v681 = vld [vmem:[%s4 + $0x38] sm:$0xf]
        %v682 = vld [vmem:[%s4 + $0x3c] sm:$0xf]
        %v683 = vpack.c.bf16 %v666, %v666
        %v684 = vld [vmem:[%s5] sm:$0x1]
        %v686 = vperm.slane %v684, 0
        %v704 = vunpack.c.l.b16 %v667
        %v705 = vunpack.c.l.b16 %v668
        %v706 = vunpack.c.l.b16 %v669
        %v707 = vunpack.c.l.b16 %v670
        %v708 = vunpack.c.l.b16 %v671
        %v709 = vunpack.c.l.b16 %v672
        %v710 = vunpack.c.l.b16 %v673
        %v711 = vunpack.c.l.b16 %v674
        %v712 = vunpack.c.l.b16 %v675
        %v713 = vunpack.c.l.b16 %v676
        %v714 = vunpack.c.l.b16 %v677
        %v715 = vunpack.c.l.b16 %v678
        %v716 = vunpack.c.l.b16 %v679
        %v717 = vunpack.c.l.b16 %v680
        %v718 = vunpack.c.l.b16 %v681
        %v719 = vunpack.c.l.b16 %v682
        %v720 = vpack.c.b16 %v705, %v704
        %v721 = vpack.c.b16 %v707, %v706
        %v722 = vpack.c.b16 %v709, %v708
        %v723 = vpack.c.b16 %v711, %v710
        %v724 = vpack.c.b16 %v713, %v712
        %v725 = vpack.c.b16 %v715, %v714
        %v726 = vpack.c.b16 %v717, %v716
        %v727 = vpack.c.b16 %v719, %v718
        %736 = vmatpush.bf16.msra.mxu0 %v727
        %737 = vmatpush.bf16.msra.mxu0 %v726
        %738 = vmatpush.bf16.msra.mxu0 %v725
        %739 = vmatpush.bf16.msra.mxu0 %v724
        %740 = vmatpush.bf16.msra.mxu0 %v723
        %741 = vmatpush.bf16.msra.mxu0 %v722
        %742 = vmatpush.bf16.msra.mxu0 %v721
        %743 = vmatpush.bf16.msra.mxu0 %v720
        %744 = vmatmul.bf16.gmra.mxu0 %v683
        %v745 = vpop.f32.mrf.mxu0
        %v746 = vadd.f32 %v686, %v745
        %v747 = vpop.f32.mrf.mxu0
        %748 = vdwg.mxu0
        %v749 = vld [vmem:[%s627] sm:$0xff]
        %v750 = vld [vmem:[%s8] sm:$0xf]
        %v751 = vld [vmem:[%s8 + $0x4] sm:$0xf]
        %v752 = vpack.c.bf16 %v749, %v749
        %v755 = vunpack.c.l.b16 %v750
        %v756 = vunpack.c.l.b16 %v751
        %v757 = vpack.c.b16 %v756, %v755
        %vm759 = vcmask 130048
        %v761 = vsel %vm759, %v752, 0
        %763 = vmatpush.bf16.msra.mxu0 0
        %764 = vmatpush.bf16.msra.mxu0 0
        %765 = vmatpush.bf16.msra.mxu0 0
        %766 = vmatpush.bf16.msra.mxu0 0
        %767 = vmatpush.bf16.msra.mxu0 0
        %768 = vmatpush.bf16.msra.mxu0 0
        %769 = vmatpush.bf16.msra.mxu0 0
        %770 = vmatpush.bf16.msra.mxu0 %v757
        %771 = vmatmul.bf16.gmra.mxu0 %v761
        %v772 = vpop.f32.mrf.mxu0
        %v773 = vadd.f32 %v666, %v772
        %v774 = vpop.f32.mrf.mxu0
        %775 = vdwg.mxu0
        %v776 = vld [vmem:[%s6] sm:$0x1]
        %v777 = vld [vmem:[%s7] sm:$0x1]
        %778 = vadd.xlane.f32.xlu0 %v773
        %v779 = vpop.xlane.xlu0 %778
        %v780 = vmul.f32 %v779, %v640
        %v781 = vsub.f32 %v773, %v780
        %v782 = vmul.f32 %v781, %v781
        %783 = vadd.xlane.f32.xlu0 %v782
        %v784 = vpop.xlane.xlu0 %783
        %v785 = vmul.f32 %v784, %v640
        %v786 = vadd.f32 %v785, 1e-05
        %v787 = vrsqrt.pop %v786
        %v788 = vmul.f32 %v787, %v786
        %v789 = vmul.f32 %v788, %v787
        %v790 = vmul.f32 0.5, %v789
        %v791 = vsub.f32 1.5, %v790
        %v792 = vmul.f32 %v787, %v791
        %vm793 = vweird.f32 %v786
        %vm794 = vweird.f32 %v787
        %vm795 = vmor %vm793, %vm794
        %v796 = vsel %vm795, %v787, %v792
        %v797 = vmul.f32 %v781, %v796
        %v799 = vperm.slane %v776, 0
        %v801 = vmul.f32 %v797, %v799
        %v803 = vperm.slane %v777, 0
        %v805 = vadd.f32 %v801, %v803
        %v806 = vld [vmem:[#allocation2] sm:$0xff]
        %v807 = vld [vmem:[#allocation2 + $0x8] sm:$0xff]
        %v808 = vld [vmem:[#allocation2 + $0x10] sm:$0xff]
        %v809 = vld [vmem:[#allocation2 + $0x18] sm:$0xff]
        %v810 = vld [vmem:[#allocation2 + $0x20] sm:$0xff]
        %v811 = vld [vmem:[#allocation2 + $0x28] sm:$0xff]
        %v812 = vld [vmem:[#allocation2 + $0x30] sm:$0xff]
        %v813 = vld [vmem:[#allocation2 + $0x38] sm:$0xff]
        %v814 = vld [vmem:[#allocation2 + $0x40] sm:$0xff]
        %v815 = vld [vmem:[#allocation2 + $0x48] sm:$0xff]
        %v816 = vld [vmem:[#allocation2 + $0x50] sm:$0xff]
        %v817 = vld [vmem:[#allocation2 + $0x58] sm:$0xff]
        %v818 = vld [vmem:[#allocation2 + $0x60] sm:$0xff]
        %v819 = vld [vmem:[#allocation2 + $0x68] sm:$0xff]
        %v820 = vld [vmem:[#allocation2 + $0x70] sm:$0xff]
        %v821 = vld [vmem:[#allocation2 + $0x78] sm:$0xff]
        %v822 = vld [vmem:[%s10] sm:$0x3]
        %v823 = vld [vmem:[#allocation5] sm:$0xf]
        %v824 = vld [vmem:[#allocation5 + $0x4] sm:$0xf]
        %v825 = vld [vmem:[#allocation5 + $0x8] sm:$0xf]
        %v826 = vld [vmem:[#allocation5 + $0xc] sm:$0xf]
        %v827 = vld [vmem:[#allocation5 + $0x10] sm:$0xf]
        %v828 = vld [vmem:[#allocation5 + $0x14] sm:$0xf]
        %v829 = vld [vmem:[#allocation5 + $0x18] sm:$0xf]
        %v830 = vld [vmem:[#allocation5 + $0x1c] sm:$0xf]
        %v831 = vld [vmem:[#allocation5 + $0x20] sm:$0xf]
        %v832 = vld [vmem:[#allocation5 + $0x24] sm:$0xf]
        %v833 = vld [vmem:[#allocation5 + $0x28] sm:$0xf]
        %v834 = vld [vmem:[#allocation5 + $0x2c] sm:$0xf]
        %v835 = vld [vmem:[#allocation5 + $0x30] sm:$0xf]
        %v836 = vld [vmem:[#allocation5 + $0x34] sm:$0xf]
        %v837 = vld [vmem:[#allocation5 + $0x38] sm:$0xf]
        %v838 = vld [vmem:[#allocation5 + $0x3c] sm:$0xf]
        %v839 = vld [vmem:[#allocation5 + $0x40] sm:$0xf]
        %v840 = vld [vmem:[#allocation5 + $0x44] sm:$0xf]
        %v841 = vld [vmem:[#allocation5 + $0x48] sm:$0xf]
        %v842 = vld [vmem:[#allocation5 + $0x4c] sm:$0xf]
        %v843 = vld [vmem:[#allocation5 + $0x50] sm:$0xf]
        %v844 = vld [vmem:[#allocation5 + $0x54] sm:$0xf]
        %v845 = vld [vmem:[#allocation5 + $0x58] sm:$0xf]
        %v846 = vld [vmem:[#allocation5 + $0x5c] sm:$0xf]
        %v847 = vld [vmem:[#allocation5 + $0x60] sm:$0xf]
        %v848 = vld [vmem:[#allocation5 + $0x64] sm:$0xf]
        %v849 = vld [vmem:[#allocation5 + $0x68] sm:$0xf]
        %v850 = vld [vmem:[#allocation5 + $0x6c] sm:$0xf]
        %v851 = vld [vmem:[#allocation5 + $0x70] sm:$0xf]
        %v852 = vld [vmem:[#allocation5 + $0x74] sm:$0xf]
        %v853 = vld [vmem:[#allocation5 + $0x78] sm:$0xf]
        %v854 = vld [vmem:[#allocation5 + $0x7c] sm:$0xf]
        %v855 = vld [vmem:[%s12] sm:$0x1]
        %v856 = vpack.c.bf16 %v805, %v805
        %v858 = vperm.slane %v822, 0
        %v859 = vperm.slane %v822, 1
        %v878 = vunpack.c.l.b16 %v806
        %v879 = vunpack.c.h.b16 %v806
        %v880 = vunpack.c.l.b16 %v807
        %v881 = vunpack.c.h.b16 %v807
        %v882 = vunpack.c.l.b16 %v808
        %v883 = vunpack.c.h.b16 %v808
        %v884 = vunpack.c.l.b16 %v809
        %v885 = vunpack.c.h.b16 %v809
        %v886 = vunpack.c.l.b16 %v810
        %v887 = vunpack.c.h.b16 %v810
        %v888 = vunpack.c.l.b16 %v811
        %v889 = vunpack.c.h.b16 %v811
        %v890 = vunpack.c.l.b16 %v812
        %v891 = vunpack.c.h.b16 %v812
        %v892 = vunpack.c.l.b16 %v813
        %v893 = vunpack.c.h.b16 %v813
        %v894 = vunpack.c.l.b16 %v814
        %v895 = vunpack.c.h.b16 %v814
        %v896 = vunpack.c.l.b16 %v815
        %v897 = vunpack.c.h.b16 %v815
        %v898 = vunpack.c.l.b16 %v816
        %v899 = vunpack.c.h.b16 %v816
        %v900 = vunpack.c.l.b16 %v817
        %v901 = vunpack.c.h.b16 %v817
        %v902 = vunpack.c.l.b16 %v818
        %v903 = vunpack.c.h.b16 %v818
        %v904 = vunpack.c.l.b16 %v819
        %v905 = vunpack.c.h.b16 %v819
        %v906 = vunpack.c.l.b16 %v820
        %v907 = vunpack.c.h.b16 %v820
        %v908 = vunpack.c.l.b16 %v821
        %v909 = vunpack.c.h.b16 %v821
        %v910 = vpack.c.b16 %v880, %v878
        %v911 = vpack.c.b16 %v881, %v879
        %v912 = vpack.c.b16 %v884, %v882
        %v913 = vpack.c.b16 %v885, %v883
        %v914 = vpack.c.b16 %v888, %v886
        %v915 = vpack.c.b16 %v889, %v887
        %v916 = vpack.c.b16 %v892, %v890
        %v917 = vpack.c.b16 %v893, %v891
        %v918 = vpack.c.b16 %v896, %v894
        %v919 = vpack.c.b16 %v897, %v895
        %v920 = vpack.c.b16 %v900, %v898
        %v921 = vpack.c.b16 %v901, %v899
        %v922 = vpack.c.b16 %v904, %v902
        %v923 = vpack.c.b16 %v905, %v903
        %v924 = vpack.c.b16 %v908, %v906
        %v925 = vpack.c.b16 %v909, %v907
        %942 = vmatpush.bf16.msra.mxu0 %v924
        %943 = vmatpush.bf16.msra.mxu0 %v922
        %944 = vmatpush.bf16.msra.mxu0 %v920
        %945 = vmatpush.bf16.msra.mxu0 %v918
        %946 = vmatpush.bf16.msra.mxu0 %v916
        %947 = vmatpush.bf16.msra.mxu0 %v914
        %948 = vmatpush.bf16.msra.mxu0 %v912
        %949 = vmatpush.bf16.msra.mxu0 %v910
        %950 = vmatmul.bf16.gmra.mxu0 %v856
        %v951 = vpop.f32.mrf.mxu0
        %v952 = vadd.f32 %v858, %v951
        %v953 = vpop.f32.mrf.mxu0
        %954 = vdwg.mxu0
        %955 = vmatpush.bf16.msra.mxu0 %v925
        %956 = vmatpush.bf16.msra.mxu0 %v923
        %957 = vmatpush.bf16.msra.mxu0 %v921
        %958 = vmatpush.bf16.msra.mxu0 %v919
        %959 = vmatpush.bf16.msra.mxu0 %v917
        %960 = vmatpush.bf16.msra.mxu0 %v915
        %961 = vmatpush.bf16.msra.mxu0 %v913
        %962 = vmatpush.bf16.msra.mxu0 %v911
        %963 = vmatmul.bf16.gmra.mxu0 %v856
        %v964 = vpop.f32.mrf.mxu0
        %v965 = vadd.f32 %v859, %v964
        %v966 = vpop.f32.mrf.mxu0
        %967 = vdwg.mxu0
        %v968 = vmul.f32 %v952, 0.5
        %v969 = vmul.f32 %v965, 0.5
        %v970 = vmul.f32 %v952, 0.70710677
        %v971 = vmul.f32 %v965, 0.70710677
        %v972 = vmul.f32 %v970, %v970
        %v973 = vmin.f32 16.0, %v972
        %v974 = vmul.f32 %v973, 2.1237322e-06
        %v975 = vadd.f32 %v974, 0.00028619796
        %v976 = vmul.f32 %v973, %v975
        %v977 = vadd.f32 %v976, 0.0036580483
        %v978 = vmul.f32 %v973, %v977
        %v979 = vadd.f32 %v978, 0.05243302
        %v980 = vmul.f32 %v973, %v979
        %v981 = vadd.f32 %v980, 0.18741608
        %v982 = vmul.f32 %v973, %v981
        %v983 = vadd.f32 %v982, 1.1283791
        %v984 = vmul.f32 %v970, %v983
        %v985 = vmul.f32 %v973, 3.8918573e-05
        %v986 = vadd.f32 %v985, 0.001143296
        %v987 = vmul.f32 %v973, %v986
        %v988 = vadd.f32 %v987, 0.014752088
        %v989 = vmul.f32 %v973, %v988
        %v990 = vadd.f32 %v989, 0.112945676
        %v991 = vmul.f32 %v973, %v990
        %v992 = vadd.f32 %v991, 0.4994258
        %v993 = vmul.f32 %v973, %v992
        %v994 = vadd.f32 %v993, 1.0
        %v995 = vrcp.pop %v994
        %v996 = vmul.f32 %v994, %v995
        %v997 = vsub.f32 1.0, %v996
        %v998 = vmul.f32 %v995, %v997
        %v999 = vadd.f32 %v995, %v998
        %vm1000 = vweird.f32 %v994
        %vm1001 = vweird.f32 %v995
        %vm1002 = vmor %vm1000, %vm1001
        %v1003 = vsel %vm1002, %v995, %v999
        %v1004 = vand.u32 2147483647, %v994
        %vm1005 = vcmp.eq.f32.partialorder %v1004, 8.507059e+37
        %v1006 = vand.u32 %v994, 2147483648
        %v1007 = vor.u32 1.1754944e-38, %v1006
        %v1008 = vsel %vm1005, %v1007, %v1003
        %v1009 = vmul.f32 %v984, %v1008
        %v1010 = vmin.f32 %v1009, 1.0
        %v1011 = vmax.f32 %v1010, -1.0
        %v1012 = vmul.f32 %v971, %v971
        %v1013 = vmin.f32 16.0, %v1012
        %v1014 = vmul.f32 %v1013, 2.1237322e-06
        %v1015 = vadd.f32 %v1014, 0.00028619796
        %v1016 = vmul.f32 %v1013, %v1015
        %v1017 = vadd.f32 %v1016, 0.0036580483
        %v1018 = vmul.f32 %v1013, %v1017
        %v1019 = vadd.f32 %v1018, 0.05243302
        %v1020 = vmul.f32 %v1013, %v1019
        %v1021 = vadd.f32 %v1020, 0.18741608
        %v1022 = vmul.f32 %v1013, %v1021
        %v1023 = vadd.f32 %v1022, 1.1283791
        %v1024 = vmul.f32 %v971, %v1023
        %v1025 = vmul.f32 %v1013, 3.8918573e-05
        %v1026 = vadd.f32 %v1025, 0.001143296
        %v1027 = vmul.f32 %v1013, %v1026
        %v1028 = vadd.f32 %v1027, 0.014752088
        %v1029 = vmul.f32 %v1013, %v1028
        %v1030 = vadd.f32 %v1029, 0.112945676
        %v1031 = vmul.f32 %v1013, %v1030
        %v1032 = vadd.f32 %v1031, 0.4994258
        %v1033 = vmul.f32 %v1013, %v1032
        %v1034 = vadd.f32 %v1033, 1.0
        %v1035 = vrcp.pop %v1034
        %v1036 = vmul.f32 %v1034, %v1035
        %v1037 = vsub.f32 1.0, %v1036
        %v1038 = vmul.f32 %v1035, %v1037
        %v1039 = vadd.f32 %v1035, %v1038
        %vm1040 = vweird.f32 %v1034
        %vm1041 = vweird.f32 %v1035
        %vm1042 = vmor %vm1040, %vm1041
        %v1043 = vsel %vm1042, %v1035, %v1039
        %v1044 = vand.u32 2147483647, %v1034
        %vm1045 = vcmp.eq.f32.partialorder %v1044, 8.507059e+37
        %v1046 = vand.u32 %v1034, 2147483648
        %v1047 = vor.u32 1.1754944e-38, %v1046
        %v1048 = vsel %vm1045, %v1047, %v1043
        %v1049 = vmul.f32 %v1024, %v1048
        %v1050 = vmin.f32 %v1049, 1.0
        %v1051 = vmax.f32 %v1050, -1.0
        %v1052 = vadd.f32 %v1011, 1.0
        %v1053 = vadd.f32 %v1051, 1.0
        %v1054 = vmul.f32 %v968, %v1052
        %v1055 = vmul.f32 %v969, %v1053
        %v1056 = vpack.c.bf16 %v1054, %v1054
        %v1057 = vpack.c.bf16 %v1055, %v1055
        %v1059 = vperm.slane %v855, 0
        %v1093 = vunpack.c.l.b16 %v823
        %v1094 = vunpack.c.l.b16 %v824
        %v1095 = vunpack.c.l.b16 %v825
        %v1096 = vunpack.c.l.b16 %v826
        %v1097 = vunpack.c.l.b16 %v827
        %v1098 = vunpack.c.l.b16 %v828
        %v1099 = vunpack.c.l.b16 %v829
        %v1100 = vunpack.c.l.b16 %v830
        %v1101 = vunpack.c.l.b16 %v831
        %v1102 = vunpack.c.l.b16 %v832
        %v1103 = vunpack.c.l.b16 %v833
        %v1104 = vunpack.c.l.b16 %v834
        %v1105 = vunpack.c.l.b16 %v835
        %v1106 = vunpack.c.l.b16 %v836
        %v1107 = vunpack.c.l.b16 %v837
        %v1108 = vunpack.c.l.b16 %v838
        %v1109 = vunpack.c.l.b16 %v839
        %v1110 = vunpack.c.l.b16 %v840
        %v1111 = vunpack.c.l.b16 %v841
        %v1112 = vunpack.c.l.b16 %v842
        %v1113 = vunpack.c.l.b16 %v843
        %v1114 = vunpack.c.l.b16 %v844
        %v1115 = vunpack.c.l.b16 %v845
        %v1116 = vunpack.c.l.b16 %v846
        %v1117 = vunpack.c.l.b16 %v847
        %v1118 = vunpack.c.l.b16 %v848
        %v1119 = vunpack.c.l.b16 %v849
        %v1120 = vunpack.c.l.b16 %v850
        %v1121 = vunpack.c.l.b16 %v851
        %v1122 = vunpack.c.l.b16 %v852
        %v1123 = vunpack.c.l.b16 %v853
        %v1124 = vunpack.c.l.b16 %v854
        %v1125 = vpack.c.b16 %v1094, %v1093
        %v1126 = vpack.c.b16 %v1096, %v1095
        %v1127 = vpack.c.b16 %v1098, %v1097
        %v1128 = vpack.c.b16 %v1100, %v1099
        %v1129 = vpack.c.b16 %v1102, %v1101
        %v1130 = vpack.c.b16 %v1104, %v1103
        %v1131 = vpack.c.b16 %v1106, %v1105
        %v1132 = vpack.c.b16 %v1108, %v1107
        %v1133 = vpack.c.b16 %v1110, %v1109
        %v1134 = vpack.c.b16 %v1112, %v1111
        %v1135 = vpack.c.b16 %v1114, %v1113
        %v1136 = vpack.c.b16 %v1116, %v1115
        %v1137 = vpack.c.b16 %v1118, %v1117
        %v1138 = vpack.c.b16 %v1120, %v1119
        %v1139 = vpack.c.b16 %v1122, %v1121
        %v1140 = vpack.c.b16 %v1124, %v1123
        %1157 = vmatpush.bf16.msra.mxu0 %v1132
        %1158 = vmatpush.bf16.msra.mxu0 %v1131
        %1159 = vmatpush.bf16.msra.mxu0 %v1130
        %1160 = vmatpush.bf16.msra.mxu0 %v1129
        %1161 = vmatpush.bf16.msra.mxu0 %v1128
        %1162 = vmatpush.bf16.msra.mxu0 %v1127
        %1163 = vmatpush.bf16.msra.mxu0 %v1126
        %1164 = vmatpush.bf16.msra.mxu0 %v1125
        %1165 = vmatmul.bf16.gmra.mxu0 %v1056
        %v1166 = vpop.f32.mrf.mxu0
        %v1167 = vadd.f32 %v1059, %v1166
        %v1168 = vpop.f32.mrf.mxu0
        %1169 = vdwg.mxu0
        %1170 = vmatpush.bf16.msra.mxu0 %v1140
        %1171 = vmatpush.bf16.msra.mxu0 %v1139
        %1172 = vmatpush.bf16.msra.mxu0 %v1138
        %1173 = vmatpush.bf16.msra.mxu0 %v1137
        %1174 = vmatpush.bf16.msra.mxu0 %v1136
        %1175 = vmatpush.bf16.msra.mxu0 %v1135
        %1176 = vmatpush.bf16.msra.mxu0 %v1134
        %1177 = vmatpush.bf16.msra.mxu0 %v1133
        %1178 = vmatmul.bf16.gmra.mxu0 %v1057
        %v1179 = vpop.f32.mrf.mxu0
        %v1180 = vadd.f32 %v1167, %v1179
        %v1181 = vpop.f32.mrf.mxu0
        %1182 = vdwg.mxu0
        %v1183 = vadd.f32 %v1180, %v773
        %v1184 = vmul.f32 %v746, %v1183
        %v1185 = vadd.f32 %v1184, %v629
        %1186 = vadd.xlane.f32.xlu0 %v1185
        %v1187 = vpop.xlane.xlu0 %1186
        %v1188 = vmul.f32 %v1187, %v640
        %v1189 = vsub.f32 %v1185, %v1188
        %v1190 = vmul.f32 %v1189, %v1189
        %1191 = vadd.xlane.f32.xlu0 %v1190
        %v1192 = vpop.xlane.xlu0 %1191
        %v1193 = vmul.f32 %v1192, %v640
        %v1194 = vadd.f32 %v1193, 1e-05
        %v1195 = vrsqrt.pop %v1194
        %v1196 = vmul.f32 %v1195, %v1194
        %v1197 = vmul.f32 %v1196, %v1195
        %v1198 = vmul.f32 0.5, %v1197
        %v1199 = vsub.f32 1.5, %v1198
        %v1200 = vmul.f32 %v1195, %v1199
        %vm1201 = vweird.f32 %v1194
        %vm1202 = vweird.f32 %v1195
        %vm1203 = vmor %vm1201, %vm1202
        %v1204 = vsel %vm1203, %v1195, %v1200
        %v1205 = vmul.f32 %v1189, %v1204
        %v1206 = vmul.f32 %v1205, %v660
        %v1207 = vadd.f32 %v1206, %v664
        %v1208 = vld [vmem:[#allocation7] sm:$0xff]
        %v1209 = vld [vmem:[#allocation7 + $0x8] sm:$0xff]
        %v1210 = vld [vmem:[#allocation7 + $0x10] sm:$0xff]
        %v1211 = vld [vmem:[#allocation7 + $0x18] sm:$0xff]
        %v1212 = vld [vmem:[#allocation7 + $0x20] sm:$0xff]
        %v1213 = vld [vmem:[#allocation7 + $0x28] sm:$0xff]
        %v1214 = vld [vmem:[#allocation7 + $0x30] sm:$0xff]
        %v1215 = vld [vmem:[#allocation7 + $0x38] sm:$0xff]
        %v1216 = vld [vmem:[#allocation7 + $0x40] sm:$0xff]
        %v1217 = vld [vmem:[#allocation7 + $0x48] sm:$0xff]
        %v1218 = vld [vmem:[#allocation7 + $0x50] sm:$0xff]
        %v1219 = vld [vmem:[#allocation7 + $0x58] sm:$0xff]
        %v1220 = vld [vmem:[#allocation7 + $0x60] sm:$0xff]
        %v1221 = vld [vmem:[#allocation7 + $0x68] sm:$0xff]
        %v1222 = vld [vmem:[#allocation7 + $0x70] sm:$0xff]
        %v1223 = vld [vmem:[#allocation7 + $0x78] sm:$0xff]
        %v1224 = vld [vmem:[%s14] sm:$0x3]
        %v1225 = vld [vmem:[#allocation8] sm:$0xf]
        %v1226 = vld [vmem:[#allocation8 + $0x4] sm:$0xf]
        %v1227 = vld [vmem:[#allocation8 + $0x8] sm:$0xf]
        %v1228 = vld [vmem:[#allocation8 + $0xc] sm:$0xf]
        %v1229 = vld [vmem:[#allocation8 + $0x10] sm:$0xf]
        %v1230 = vld [vmem:[#allocation8 + $0x14] sm:$0xf]
        %v1231 = vld [vmem:[#allocation8 + $0x18] sm:$0xf]
        %v1232 = vld [vmem:[#allocation8 + $0x1c] sm:$0xf]
        %v1233 = vld [vmem:[#allocation8 + $0x20] sm:$0xf]
        %v1234 = vld [vmem:[#allocation8 + $0x24] sm:$0xf]
        %v1235 = vld [vmem:[#allocation8 + $0x28] sm:$0xf]
        %v1236 = vld [vmem:[#allocation8 + $0x2c] sm:$0xf]
        %v1237 = vld [vmem:[#allocation8 + $0x30] sm:$0xf]
        %v1238 = vld [vmem:[#allocation8 + $0x34] sm:$0xf]
        %v1239 = vld [vmem:[#allocation8 + $0x38] sm:$0xf]
        %v1240 = vld [vmem:[#allocation8 + $0x3c] sm:$0xf]
        %v1241 = vld [vmem:[#allocation8 + $0x40] sm:$0xf]
        %v1242 = vld [vmem:[#allocation8 + $0x44] sm:$0xf]
        %v1243 = vld [vmem:[#allocation8 + $0x48] sm:$0xf]
        %v1244 = vld [vmem:[#allocation8 + $0x4c] sm:$0xf]
        %v1245 = vld [vmem:[#allocation8 + $0x50] sm:$0xf]
        %v1246 = vld [vmem:[#allocation8 + $0x54] sm:$0xf]
        %v1247 = vld [vmem:[#allocation8 + $0x58] sm:$0xf]
        %v1248 = vld [vmem:[#allocation8 + $0x5c] sm:$0xf]
        %v1249 = vld [vmem:[#allocation8 + $0x60] sm:$0xf]
        %v1250 = vld [vmem:[#allocation8 + $0x64] sm:$0xf]
        %v1251 = vld [vmem:[#allocation8 + $0x68] sm:$0xf]
        %v1252 = vld [vmem:[#allocation8 + $0x6c] sm:$0xf]
        %v1253 = vld [vmem:[#allocation8 + $0x70] sm:$0xf]
        %v1254 = vld [vmem:[#allocation8 + $0x74] sm:$0xf]
        %v1255 = vld [vmem:[#allocation8 + $0x78] sm:$0xf]
        %v1256 = vld [vmem:[#allocation8 + $0x7c] sm:$0xf]
        %v1257 = vld [vmem:[%s16] sm:$0x1]
        %v1258 = vpack.c.bf16 %v1207, %v1207
        %v1260 = vperm.slane %v1224, 0
        %v1261 = vperm.slane %v1224, 1
        %v1280 = vunpack.c.l.b16 %v1208
        %v1281 = vunpack.c.h.b16 %v1208
        %v1282 = vunpack.c.l.b16 %v1209
        %v1283 = vunpack.c.h.b16 %v1209
        %v1284 = vunpack.c.l.b16 %v1210
        %v1285 = vunpack.c.h.b16 %v1210
        %v1286 = vunpack.c.l.b16 %v1211
        %v1287 = vunpack.c.h.b16 %v1211
        %v1288 = vunpack.c.l.b16 %v1212
        %v1289 = vunpack.c.h.b16 %v1212
        %v1290 = vunpack.c.l.b16 %v1213
        %v1291 = vunpack.c.h.b16 %v1213
        %v1292 = vunpack.c.l.b16 %v1214
        %v1293 = vunpack.c.h.b16 %v1214
        %v1294 = vunpack.c.l.b16 %v1215
        %v1295 = vunpack.c.h.b16 %v1215
        %v1296 = vunpack.c.l.b16 %v1216
        %v1297 = vunpack.c.h.b16 %v1216
        %v1298 = vunpack.c.l.b16 %v1217
        %v1299 = vunpack.c.h.b16 %v1217
        %v1300 = vunpack.c.l.b16 %v1218
        %v1301 = vunpack.c.h.b16 %v1218
        %v1302 = vunpack.c.l.b16 %v1219
        %v1303 = vunpack.c.h.b16 %v1219
        %v1304 = vunpack.c.l.b16 %v1220
        %v1305 = vunpack.c.h.b16 %v1220
        %v1306 = vunpack.c.l.b16 %v1221
        %v1307 = vunpack.c.h.b16 %v1221
        %v1308 = vunpack.c.l.b16 %v1222
        %v1309 = vunpack.c.h.b16 %v1222
        %v1310 = vunpack.c.l.b16 %v1223
        %v1311 = vunpack.c.h.b16 %v1223
        %v1312 = vpack.c.b16 %v1282, %v1280
        %v1313 = vpack.c.b16 %v1283, %v1281
        %v1314 = vpack.c.b16 %v1286, %v1284
        %v1315 = vpack.c.b16 %v1287, %v1285
        %v1316 = vpack.c.b16 %v1290, %v1288
        %v1317 = vpack.c.b16 %v1291, %v1289
        %v1318 = vpack.c.b16 %v1294, %v1292
        %v1319 = vpack.c.b16 %v1295, %v1293
        %v1320 = vpack.c.b16 %v1298, %v1296
        %v1321 = vpack.c.b16 %v1299, %v1297
        %v1322 = vpack.c.b16 %v1302, %v1300
        %v1323 = vpack.c.b16 %v1303, %v1301
        %v1324 = vpack.c.b16 %v1306, %v1304
        %v1325 = vpack.c.b16 %v1307, %v1305
        %v1326 = vpack.c.b16 %v1310, %v1308
        %v1327 = vpack.c.b16 %v1311, %v1309
        %1344 = vmatpush.bf16.msra.mxu0 %v1326
        %1345 = vmatpush.bf16.msra.mxu0 %v1324
        %1346 = vmatpush.bf16.msra.mxu0 %v1322
        %1347 = vmatpush.bf16.msra.mxu0 %v1320
        %1348 = vmatpush.bf16.msra.mxu0 %v1318
        %1349 = vmatpush.bf16.msra.mxu0 %v1316
        %1350 = vmatpush.bf16.msra.mxu0 %v1314
        %1351 = vmatpush.bf16.msra.mxu0 %v1312
        %1352 = vmatmul.bf16.gmra.mxu0 %v1258
        %v1353 = vpop.f32.mrf.mxu0
        %v1354 = vadd.f32 %v1260, %v1353
        %v1355 = vpop.f32.mrf.mxu0
        %1356 = vdwg.mxu0
        %1357 = vmatpush.bf16.msra.mxu0 %v1327
        %1358 = vmatpush.bf16.msra.mxu0 %v1325
        %1359 = vmatpush.bf16.msra.mxu0 %v1323
        %1360 = vmatpush.bf16.msra.mxu0 %v1321
        %1361 = vmatpush.bf16.msra.mxu0 %v1319
        %1362 = vmatpush.bf16.msra.mxu0 %v1317
        %1363 = vmatpush.bf16.msra.mxu0 %v1315
        %1364 = vmatpush.bf16.msra.mxu0 %v1313
        %1365 = vmatmul.bf16.gmra.mxu0 %v1258
        %v1366 = vpop.f32.mrf.mxu0
        %v1367 = vadd.f32 %v1261, %v1366
        %v1368 = vpop.f32.mrf.mxu0
        %1369 = vdwg.mxu0
        %v1370 = vmul.f32 %v1354, 0.5
        %v1371 = vmul.f32 %v1367, 0.5
        %v1372 = vmul.f32 %v1354, 0.70710677
        %v1373 = vmul.f32 %v1367, 0.70710677
        %v1374 = vmul.f32 %v1372, %v1372
        %v1375 = vmin.f32 16.0, %v1374
        %v1376 = vmul.f32 %v1375, 2.1237322e-06
        %v1377 = vadd.f32 %v1376, 0.00028619796
        %v1378 = vmul.f32 %v1375, %v1377
        %v1379 = vadd.f32 %v1378, 0.0036580483
        %v1380 = vmul.f32 %v1375, %v1379
        %v1381 = vadd.f32 %v1380, 0.05243302
        %v1382 = vmul.f32 %v1375, %v1381
        %v1383 = vadd.f32 %v1382, 0.18741608
        %v1384 = vmul.f32 %v1375, %v1383
        %v1385 = vadd.f32 %v1384, 1.1283791
        %v1386 = vmul.f32 %v1372, %v1385
        %v1387 = vmul.f32 %v1375, 3.8918573e-05
        %v1388 = vadd.f32 %v1387, 0.001143296
        %v1389 = vmul.f32 %v1375, %v1388
        %v1390 = vadd.f32 %v1389, 0.014752088
        %v1391 = vmul.f32 %v1375, %v1390
        %v1392 = vadd.f32 %v1391, 0.112945676
        %v1393 = vmul.f32 %v1375, %v1392
        %v1394 = vadd.f32 %v1393, 0.4994258
        %v1395 = vmul.f32 %v1375, %v1394
        %v1396 = vadd.f32 %v1395, 1.0
        %v1397 = vrcp.pop %v1396
        %v1398 = vmul.f32 %v1396, %v1397
        %v1399 = vsub.f32 1.0, %v1398
        %v1400 = vmul.f32 %v1397, %v1399
        %v1401 = vadd.f32 %v1397, %v1400
        %vm1402 = vweird.f32 %v1396
        %vm1403 = vweird.f32 %v1397
        %vm1404 = vmor %vm1402, %vm1403
        %v1405 = vsel %vm1404, %v1397, %v1401
        %v1406 = vand.u32 2147483647, %v1396
        %vm1407 = vcmp.eq.f32.partialorder %v1406, 8.507059e+37
        %v1408 = vand.u32 %v1396, 2147483648
        %v1409 = vor.u32 1.1754944e-38, %v1408
        %v1410 = vsel %vm1407, %v1409, %v1405
        %v1411 = vmul.f32 %v1386, %v1410
        %v1412 = vmin.f32 %v1411, 1.0
        %v1413 = vmax.f32 %v1412, -1.0
        %v1414 = vmul.f32 %v1373, %v1373
        %v1415 = vmin.f32 16.0, %v1414
        %v1416 = vmul.f32 %v1415, 2.1237322e-06
        %v1417 = vadd.f32 %v1416, 0.00028619796
        %v1418 = vmul.f32 %v1415, %v1417
        %v1419 = vadd.f32 %v1418, 0.0036580483
        %v1420 = vmul.f32 %v1415, %v1419
        %v1421 = vadd.f32 %v1420, 0.05243302
        %v1422 = vmul.f32 %v1415, %v1421
        %v1423 = vadd.f32 %v1422, 0.18741608
        %v1424 = vmul.f32 %v1415, %v1423
        %v1425 = vadd.f32 %v1424, 1.1283791
        %v1426 = vmul.f32 %v1373, %v1425
        %v1427 = vmul.f32 %v1415, 3.8918573e-05
        %v1428 = vadd.f32 %v1427, 0.001143296
        %v1429 = vmul.f32 %v1415, %v1428
        %v1430 = vadd.f32 %v1429, 0.014752088
        %v1431 = vmul.f32 %v1415, %v1430
        %v1432 = vadd.f32 %v1431, 0.112945676
        %v1433 = vmul.f32 %v1415, %v1432
        %v1434 = vadd.f32 %v1433, 0.4994258
        %v1435 = vmul.f32 %v1415, %v1434
        %v1436 = vadd.f32 %v1435, 1.0
        %v1437 = vrcp.pop %v1436
        %v1438 = vmul.f32 %v1436, %v1437
        %v1439 = vsub.f32 1.0, %v1438
        %v1440 = vmul.f32 %v1437, %v1439
        %v1441 = vadd.f32 %v1437, %v1440
        %vm1442 = vweird.f32 %v1436
        %vm1443 = vweird.f32 %v1437
        %vm1444 = vmor %vm1442, %vm1443
        %v1445 = vsel %vm1444, %v1437, %v1441
        %v1446 = vand.u32 2147483647, %v1436
        %vm1447 = vcmp.eq.f32.partialorder %v1446, 8.507059e+37
        %v1448 = vand.u32 %v1436, 2147483648
        %v1449 = vor.u32 1.1754944e-38, %v1448
        %v1450 = vsel %vm1447, %v1449, %v1445
        %v1451 = vmul.f32 %v1426, %v1450
        %v1452 = vmin.f32 %v1451, 1.0
        %v1453 = vmax.f32 %v1452, -1.0
        %v1454 = vadd.f32 %v1413, 1.0
        %v1455 = vadd.f32 %v1453, 1.0
        %v1456 = vmul.f32 %v1370, %v1454
        %v1457 = vmul.f32 %v1371, %v1455
        %v1458 = vpack.c.bf16 %v1456, %v1456
        %v1459 = vpack.c.bf16 %v1457, %v1457
        %v1461 = vperm.slane %v1257, 0
        %v1495 = vunpack.c.l.b16 %v1225
        %v1496 = vunpack.c.l.b16 %v1226
        %v1497 = vunpack.c.l.b16 %v1227
        %v1498 = vunpack.c.l.b16 %v1228
        %v1499 = vunpack.c.l.b16 %v1229
        %v1500 = vunpack.c.l.b16 %v1230
        %v1501 = vunpack.c.l.b16 %v1231
        %v1502 = vunpack.c.l.b16 %v1232
        %v1503 = vunpack.c.l.b16 %v1233
        %v1504 = vunpack.c.l.b16 %v1234
        %v1505 = vunpack.c.l.b16 %v1235
        %v1506 = vunpack.c.l.b16 %v1236
        %v1507 = vunpack.c.l.b16 %v1237
        %v1508 = vunpack.c.l.b16 %v1238
        %v1509 = vunpack.c.l.b16 %v1239
        %v1510 = vunpack.c.l.b16 %v1240
        %v1511 = vunpack.c.l.b16 %v1241
        %v1512 = vunpack.c.l.b16 %v1242
        %v1513 = vunpack.c.l.b16 %v1243
        %v1514 = vunpack.c.l.b16 %v1244
        %v1515 = vunpack.c.l.b16 %v1245
        %v1516 = vunpack.c.l.b16 %v1246
        %v1517 = vunpack.c.l.b16 %v1247
        %v1518 = vunpack.c.l.b16 %v1248
        %v1519 = vunpack.c.l.b16 %v1249
        %v1520 = vunpack.c.l.b16 %v1250
        %v1521 = vunpack.c.l.b16 %v1251
        %v1522 = vunpack.c.l.b16 %v1252
        %v1523 = vunpack.c.l.b16 %v1253
        %v1524 = vunpack.c.l.b16 %v1254
        %v1525 = vunpack.c.l.b16 %v1255
        %v1526 = vunpack.c.l.b16 %v1256
        %v1527 = vpack.c.b16 %v1496, %v1495
        %v1528 = vpack.c.b16 %v1498, %v1497
        %v1529 = vpack.c.b16 %v1500, %v1499
        %v1530 = vpack.c.b16 %v1502, %v1501
        %v1531 = vpack.c.b16 %v1504, %v1503
        %v1532 = vpack.c.b16 %v1506, %v1505
        %v1533 = vpack.c.b16 %v1508, %v1507
        %v1534 = vpack.c.b16 %v1510, %v1509
        %v1535 = vpack.c.b16 %v1512, %v1511
        %v1536 = vpack.c.b16 %v1514, %v1513
        %v1537 = vpack.c.b16 %v1516, %v1515
        %v1538 = vpack.c.b16 %v1518, %v1517
        %v1539 = vpack.c.b16 %v1520, %v1519
        %v1540 = vpack.c.b16 %v1522, %v1521
        %v1541 = vpack.c.b16 %v1524, %v1523
        %v1542 = vpack.c.b16 %v1526, %v1525
        %1559 = vmatpush.bf16.msra.mxu0 %v1534
        %1560 = vmatpush.bf16.msra.mxu0 %v1533
        %1561 = vmatpush.bf16.msra.mxu0 %v1532
        %1562 = vmatpush.bf16.msra.mxu0 %v1531
        %1563 = vmatpush.bf16.msra.mxu0 %v1530
        %1564 = vmatpush.bf16.msra.mxu0 %v1529
        %1565 = vmatpush.bf16.msra.mxu0 %v1528
        %1566 = vmatpush.bf16.msra.mxu0 %v1527
        %1567 = vmatmul.bf16.gmra.mxu0 %v1458
        %v1568 = vpop.f32.mrf.mxu0
        %v1569 = vadd.f32 %v1461, %v1568
        %v1570 = vpop.f32.mrf.mxu0
        %1571 = vdwg.mxu0
        %1572 = vmatpush.bf16.msra.mxu0 %v1542
        %1573 = vmatpush.bf16.msra.mxu0 %v1541
        %1574 = vmatpush.bf16.msra.mxu0 %v1540
        %1575 = vmatpush.bf16.msra.mxu0 %v1539
        %1576 = vmatpush.bf16.msra.mxu0 %v1538
        %1577 = vmatpush.bf16.msra.mxu0 %v1537
        %1578 = vmatpush.bf16.msra.mxu0 %v1536
        %1579 = vmatpush.bf16.msra.mxu0 %v1535
        %1580 = vmatmul.bf16.gmra.mxu0 %v1459
        %v1581 = vpop.f32.mrf.mxu0
        %v1582 = vadd.f32 %v1569, %v1581
        %v1583 = vpop.f32.mrf.mxu0
        %1584 = vdwg.mxu0
        %v1585 = vadd.f32 %v1582, %v1185
        %1586 = vst [vmem:[%s619] sm:$0xff] %v1585
        %s1587 = sand.u32 %s409, 1
        %s1588 = scalar_lea.sflag [#allocation4], %s1587
        %s1589 = sand.u32 %s409, 1
        %s1590 = smul.addr %s1589, 8
        %s1591 = scalar_lea.vmem [#allocation10], %s1590
        // Predicated region
        $region105: #{_lambda_.7} parent=87 // pred_check
          %p1592 = pneg %p419
        $region106: #{_lambda_.7} parent=87 // pred_check_branch
          %1594 = sbr.rel (%p1592) target = $region108
        $region107: #{_lambda_.7} parent=87 // pred_region
          %1596 = vsyncadd %s1588, 0
          %s1597 = smul.addr %s34, 8
          %s1598 = scalar_lea.hbm %s17, %s1597
          %s1600 = sshll.u32 %s1591, 4
          %s1601 = int_to_ptr.vmem [resolvable:$true] %s1600
          %s1602 = sshll.u32 %s1598, 4
          %s1603 = int_to_ptr.hbm [resolvable:$true] %s1602
          %1605 = dma.vmem_to_hbm [thread:$0]  %s1601, 128, %s1603, %s1588
        $region108: #{_lambda_.7} parent=87 // pred_fallthru
          _
      $region88: #{_lambda_.7} parent=5 // pred_fallthru
        _
      %p1606 = scmp.le.s32.totalorder 2, %s29
      // Predicated region
      $region109: #{_lambda_.7} parent=5 // pred_check
        %p1607 = pneg %p1606
      $region110: #{_lambda_.7} parent=5 // pred_check_branch
        %1609 = sbr.rel (%p1607) target = $region112
      $region111: #{_lambda_.7} parent=5 // pred_region
        %s1610 = ssub.s32 %s29, 2
        // Predicated region
        $region113: #{_lambda_.7} parent=111 // pred_check
          %p1611 = pneg %p425
        $region114: #{_lambda_.7} parent=111 // pred_check_branch
          %1613 = sbr.rel (%p1611) target = $region116
        $region115: #{_lambda_.7} parent=111 // pred_region
          %s1614 = sand.u32 %s410, 1
          %s1615 = scalar_lea.sflag [#allocation4], %s1614
          %s1616 = sand.u32 %s410, 1
          %s1617 = smul.addr %s1616, 8
          %s1618 = scalar_lea.vmem [#allocation10], %s1617
          %1620 = dma.done %s1615, 128
        $region116: #{_lambda_.7} parent=111 // pred_fallthru
          _
      $region112: #{_lambda_.7} parent=5 // pred_fallthru
        _
    $region6: #{_lambda_.7} parent=1 // loop_footer
      %s33 = sadd.s32 1, %s29
    $region7: #{_lambda_.7} parent=1 // loop_footer_branch
      %28 = sbr.rel target = $region3
    $region8: #{_lambda_.7} parent=1 // loop_exit
      _
    %1621 = vsyncpa [#allocation3], 1
    %s1622 = scalar_lea.sflag [#allocation3], 1
    %1623 = vsyncpa %s1622, 1
    %1624 = vsyncpa [#allocation6], 1
    %1625 = vsyncpa [#allocation9], 1
    %1626 = vsyncpa [#allocation4], 1
    %s1627 = scalar_lea.sflag [#allocation4], 1
    %1628 = vsyncpa %s1627, 1

// kernel: _lambda_.5
$region0: #{_lambda_.5}
  #allocation0 [shape = 'u32[]', space=smem, size = 0x4, offset = 0x4, fixed_abs, tag = 'smem constant byte address 0x4 - core index']
  #allocation1 [shape = 'u32[72,128]{1,0:T(1,128)}', space=vmem, size = 0x9000, scoped, tag = 'internal scratch']
  %s0 = inlined_call_operand.vmem [shape: f32[16,128], index: 0, kind: input, shape index: {}]
  %s1 = inlined_call_operand.vmem [shape: f32[16,16], index: 1, kind: input, shape index: {}]
  %s2 = inlined_call_operand.vmem [shape: f32[1,128], index: 2, kind: input, shape index: {}, may-alias: {2,6}]
  %s3 = inlined_call_operand.vmem [shape: f32[1,128], index: 3, kind: input, shape index: {}, may-alias: {3,7,16}]
  %s4 = inlined_call_operand.hbm [shape: bf16[128,128], index: 4, kind: input, shape index: {}]
  %s5 = inlined_call_operand.vmem [shape: f32[1,128], index: 5, kind: input, shape index: {}]
  %s6 = inlined_call_operand.vmem [shape: f32[1,128], index: 6, kind: input, shape index: {}, may-alias: {2,6}]
  %s7 = inlined_call_operand.vmem [shape: f32[1,128], index: 7, kind: input, shape index: {}, may-alias: {3,7,16}]
  %s8 = inlined_call_operand.vmem [shape: bf16[16,128], index: 8, kind: input, shape index: {}]
  %s9 = inlined_call_operand.hbm [shape: bf16[128,256], index: 9, kind: input, shape index: {}]
  %s10 = inlined_call_operand.vmem [shape: f32[1,256], index: 10, kind: input, shape index: {}]
  %s11 = inlined_call_operand.hbm [shape: bf16[256,128], index: 11, kind: input, shape index: {}]
  %s12 = inlined_call_operand.vmem [shape: f32[1,128], index: 12, kind: input, shape index: {}]
  %s13 = inlined_call_operand.hbm [shape: bf16[128,256], index: 13, kind: input, shape index: {}]
  %s14 = inlined_call_operand.vmem [shape: f32[1,256], index: 14, kind: input, shape index: {}]
  %s15 = inlined_call_operand.hbm [shape: bf16[256,128], index: 15, kind: input, shape index: {}]
  %s16 = inlined_call_operand.vmem [shape: f32[1,128], index: 16, kind: input, shape index: {}, may-alias: {3,7,16}]
  %s17 = inlined_call_operand.vmem [shape: f32[16,128], index: 17, kind: output, shape index: {}]
  %s18 = sld [smem:[#allocation0]]
  $region121: #{_lambda_.5} parent=0
    _
  %s20 = ssub.s32 1, %s18
  %s21 = scalar_select 0, %s20, %s18
  $region1: #{_lambda_.5} parent=0
    #allocation2 [shape = 'u8[32768]{0}', space=vmem, size = 0x8000, scoped, tag = 'input window, operand 4, single buffered']
    #allocation3 [shape = 's32[2]{0}', space=sflag, size = 0x8, scoped, tag = 'scoped memory for _lambda_.5']
    #allocation4 [shape = 'u8[65536]{0}', space=vmem, size = 0x10000, scoped, tag = 'input window, operand 9, single buffered']
    #allocation5 [shape = 's32[1]{0}', space=sflag, size = 0x4, scoped, tag = 'scoped memory for _lambda_.5']
    #allocation6 [shape = 'u8[65536]{0}', space=vmem, size = 0x10000, scoped, tag = 'input window, operand 11, single buffered']
    #allocation7 [shape = 'u8[65536]{0}', space=vmem, size = 0x10000, scoped, tag = 'input window, operand 13, single buffered']
    #allocation8 [shape = 's32[1]{0}', space=sflag, size = 0x4, scoped, tag = 'scoped memory for _lambda_.5']
    #allocation9 [shape = 'u8[65536]{0}', space=vmem, size = 0x10000, scoped, tag = 'input window, operand 15, single buffered']
    %22 = vsyncpa [#allocation3], 0
    %23 = vsyncpa [#allocation5], 0
    %24 = vsyncpa [#allocation8], 0
    loop: start=0, step=1, limit=4
    $region2: #{_lambda_.5} parent=1 // loop_pre_header
      _
    $region3: #{_lambda_.5} parent=1 // loop_header
      %s26 = sphi 0, %s30
      %p27 = scmp.ge.s32.totalorder %s26, 4
      %s36 = sphi 0, %s38
      %s39 = sphi 0, %s36
      %s40 = sphi 0, %s39
      %s56 = sphi 0, %s40
      %s62 = sphi 0, %s64
      %s65 = sphi 0, %s62
      %s66 = sphi 0, %s65
      %s82 = sphi 0, %s66
      %s86 = sphi 0, %s86
      %s88 = sphi 0, %s86
      %s89 = sphi 0, %s88
      %s103 = sphi 0, %s89
      %s107 = sphi 0, %s107
      %s109 = sphi 0, %s107
      %s110 = sphi 0, %s109
      %s124 = sphi 0, %s110
      %s128 = sphi 0, %s128
      %s130 = sphi 0, %s128
      %s131 = sphi 0, %s130
      %s145 = sphi 0, %s131
      %s149 = sphi 0, %s149
      %s151 = sphi 0, %s149
      %s152 = sphi 0, %s151
      %s166 = sphi 0, %s152
      %s170 = sphi 0, %s170
      %s172 = sphi 0, %s170
      %s173 = sphi 0, %s172
      %s187 = sphi 0, %s173
      %s191 = sphi 0, %s191
      %s193 = sphi 0, %s191
      %s194 = sphi 0, %s193
      %s208 = sphi 0, %s194
      %s212 = sphi 0, %s212
      %s214 = sphi 0, %s212
      %s215 = sphi 0, %s214
      %s229 = sphi 0, %s215
      %s233 = sphi 0, %s233
      %s235 = sphi 0, %s233
      %s236 = sphi 0, %s235
      %s250 = sphi 0, %s236
      %s254 = sphi 0, %s254
      %s256 = sphi 0, %s254
      %s257 = sphi 0, %s256
      %s271 = sphi 0, %s257
      %s275 = sphi 0, %s275
      %s277 = sphi 0, %s275
      %s278 = sphi 0, %s277
      %s292 = sphi 0, %s278
      %s296 = sphi 0, %s296
      %s298 = sphi 0, %s296
      %s299 = sphi 0, %s298
      %s313 = sphi 0, %s299
      %s317 = sphi 0, %s317
      %s319 = sphi 0, %s317
      %s320 = sphi 0, %s319
      %s334 = sphi 0, %s320
      %s338 = sphi 0, %s338
      %s340 = sphi 0, %s338
      %s341 = sphi 0, %s340
      %s355 = sphi 0, %s341
      %s359 = sphi 0, %s359
      %s361 = sphi 0, %s359
      %s362 = sphi 0, %s361
      %s376 = sphi 0, %s362
      %s380 = sphi 0, %s380
      %s382 = sphi 0, %s380
      %s383 = sphi 0, %s382
      %s397 = sphi 0, %s383
      %s403 = sphi 0, %s405
      %s406 = sphi 0, %s403
      %s407 = sphi 0, %s406
      %s423 = sphi 0, %s407
    $region4: #{_lambda_.5} parent=1 // loop_header_branch
      %29 = sbr.rel (%p27) target = $region8
    $region5: #{_lambda_.5} parent=1 // loop_body
      %s31 = ssub.s32 %s26, 1
      %s32 = ssub.s32 %s26, 2
      %s33 = sadd.s32 %s26, 1
      %s34 = ssub.s32 %s26, %s33
      %p35 = scmp.eq.s32.totalorder %s34, 0
      %s37 = sadd.s32 %s36, 1
      %s38 = scalar_select %p35, %s36, %s37
      %p41 = pneg %p35
      %p42 = scmp.eq.s32.totalorder %s26, 1
      %p43 = por %p41, %p42
      %p44 = scmp.ne.s32.totalorder %s36, %s39
      %p45 = scmp.eq.s32.totalorder %s26, 0
      %p46 = por %p44, %p45
      %p47 = scmp.ne.s32.totalorder %s36, %s39
      %p48 = scmp.eq.s32.totalorder %s31, 1
      %p49 = por %p47, %p48
      %p50 = scmp.ne.s32.totalorder %s39, %s40
      %p51 = scmp.eq.s32.totalorder %s31, 0
      %p52 = por %p50, %p51
      %p53 = scmp.ne.s32.totalorder %s39, %s40
      %p54 = scmp.eq.s32.totalorder %s32, 1
      %p55 = por %p53, %p54
      %p57 = scmp.ne.s32.totalorder %s40, %s56
      %p58 = scmp.eq.s32.totalorder %s32, 0
      %p59 = por %p57, %p58
      %s60 = ssub.s32 %s26, %s33
      %p61 = scmp.eq.s32.totalorder %s60, 0
      %s63 = sadd.s32 %s62, 1
      %s64 = scalar_select %p61, %s62, %s63
      %p67 = pneg %p61
      %p68 = scmp.eq.s32.totalorder %s26, 1
      %p69 = por %p67, %p68
      %p70 = scmp.ne.s32.totalorder %s62, %s65
      %p71 = scmp.eq.s32.totalorder %s26, 0
      %p72 = por %p70, %p71
      %p73 = scmp.ne.s32.totalorder %s62, %s65
      %p74 = scmp.eq.s32.totalorder %s31, 1
      %p75 = por %p73, %p74
      %p76 = scmp.ne.s32.totalorder %s65, %s66
      %p77 = scmp.eq.s32.totalorder %s31, 0
      %p78 = por %p76, %p77
      %p79 = scmp.ne.s32.totalorder %s65, %s66
      %p80 = scmp.eq.s32.totalorder %s32, 1
      %p81 = por %p79, %p80
      %p83 = scmp.ne.s32.totalorder %s66, %s82
      %p84 = scmp.eq.s32.totalorder %s32, 0
      %p85 = por %p83, %p84
      %s87 = sadd.s32 %s86, 1
      %p90 = scmp.eq.s32.totalorder %s26, 1
      %p91 = scmp.ne.s32.totalorder %s86, %s88
      %p92 = scmp.eq.s32.totalorder %s26, 0
      %p93 = por %p91, %p92
      %p94 = scmp.ne.s32.totalorder %s86, %s88
      %p95 = scmp.eq.s32.totalorder %s31, 1
      %p96 = por %p94, %p95
      %p97 = scmp.ne.s32.totalorder %s88, %s89
      %p98 = scmp.eq.s32.totalorder %s31, 0
      %p99 = por %p97, %p98
      %p100 = scmp.ne.s32.totalorder %s88, %s89
      %p101 = scmp.eq.s32.totalorder %s32, 1
      %p102 = por %p100, %p101
      %p104 = scmp.ne.s32.totalorder %s89, %s103
      %p105 = scmp.eq.s32.totalorder %s32, 0
      %p106 = por %p104, %p105
      %s108 = sadd.s32 %s107, 1
      %p111 = scmp.eq.s32.totalorder %s26, 1
      %p112 = scmp.ne.s32.totalorder %s107, %s109
      %p113 = scmp.eq.s32.totalorder %s26, 0
      %p114 = por %p112, %p113
      %p115 = scmp.ne.s32.totalorder %s107, %s109
      %p116 = scmp.eq.s32.totalorder %s31, 1
      %p117 = por %p115, %p116
      %p118 = scmp.ne.s32.totalorder %s109, %s110
      %p119 = scmp.eq.s32.totalorder %s31, 0
      %p120 = por %p118, %p119
      %p121 = scmp.ne.s32.totalorder %s109, %s110
      %p122 = scmp.eq.s32.totalorder %s32, 1
      %p123 = por %p121, %p122
      %p125 = scmp.ne.s32.totalorder %s110, %s124
      %p126 = scmp.eq.s32.totalorder %s32, 0
      %p127 = por %p125, %p126
      %s129 = sadd.s32 %s128, 1
      %p132 = scmp.eq.s32.totalorder %s26, 1
      %p133 = scmp.ne.s32.totalorder %s128, %s130
      %p134 = scmp.eq.s32.totalorder %s26, 0
      %p135 = por %p133, %p134
      %p136 = scmp.ne.s32.totalorder %s128, %s130
      %p137 = scmp.eq.s32.totalorder %s31, 1
      %p138 = por %p136, %p137
      %p139 = scmp.ne.s32.totalorder %s130, %s131
      %p140 = scmp.eq.s32.totalorder %s31, 0
      %p141 = por %p139, %p140
      %p142 = scmp.ne.s32.totalorder %s130, %s131
      %p143 = scmp.eq.s32.totalorder %s32, 1
      %p144 = por %p142, %p143
      %p146 = scmp.ne.s32.totalorder %s131, %s145
      %p147 = scmp.eq.s32.totalorder %s32, 0
      %p148 = por %p146, %p147
      %s150 = sadd.s32 %s149, 1
      %p153 = scmp.eq.s32.totalorder %s26, 1
      %p154 = scmp.ne.s32.totalorder %s149, %s151
      %p155 = scmp.eq.s32.totalorder %s26, 0
      %p156 = por %p154, %p155
      %p157 = scmp.ne.s32.totalorder %s149, %s151
      %p158 = scmp.eq.s32.totalorder %s31, 1
      %p159 = por %p157, %p158
      %p160 = scmp.ne.s32.totalorder %s151, %s152
      %p161 = scmp.eq.s32.totalorder %s31, 0
      %p162 = por %p160, %p161
      %p163 = scmp.ne.s32.totalorder %s151, %s152
      %p164 = scmp.eq.s32.totalorder %s32, 1
      %p165 = por %p163, %p164
      %p167 = scmp.ne.s32.totalorder %s152, %s166
      %p168 = scmp.eq.s32.totalorder %s32, 0
      %p169 = por %p167, %p168
      %s171 = sadd.s32 %s170, 1
      %p174 = scmp.eq.s32.totalorder %s26, 1
      %p175 = scmp.ne.s32.totalorder %s170, %s172
      %p176 = scmp.eq.s32.totalorder %s26, 0
      %p177 = por %p175, %p176
      %p178 = scmp.ne.s32.totalorder %s170, %s172
      %p179 = scmp.eq.s32.totalorder %s31, 1
      %p180 = por %p178, %p179
      %p181 = scmp.ne.s32.totalorder %s172, %s173
      %p182 = scmp.eq.s32.totalorder %s31, 0
      %p183 = por %p181, %p182
      %p184 = scmp.ne.s32.totalorder %s172, %s173
      %p185 = scmp.eq.s32.totalorder %s32, 1
      %p186 = por %p184, %p185
      %p188 = scmp.ne.s32.totalorder %s173, %s187
      %p189 = scmp.eq.s32.totalorder %s32, 0
      %p190 = por %p188, %p189
      %s192 = sadd.s32 %s191, 1
      %p195 = scmp.eq.s32.totalorder %s26, 1
      %p196 = scmp.ne.s32.totalorder %s191, %s193
      %p197 = scmp.eq.s32.totalorder %s26, 0
      %p198 = por %p196, %p197
      %p199 = scmp.ne.s32.totalorder %s191, %s193
      %p200 = scmp.eq.s32.totalorder %s31, 1
      %p201 = por %p199, %p200
      %p202 = scmp.ne.s32.totalorder %s193, %s194
      %p203 = scmp.eq.s32.totalorder %s31, 0
      %p204 = por %p202, %p203
      %p205 = scmp.ne.s32.totalorder %s193, %s194
      %p206 = scmp.eq.s32.totalorder %s32, 1
      %p207 = por %p205, %p206
      %p209 = scmp.ne.s32.totalorder %s194, %s208
      %p210 = scmp.eq.s32.totalorder %s32, 0
      %p211 = por %p209, %p210
      %s213 = sadd.s32 %s212, 1
      %p216 = scmp.eq.s32.totalorder %s26, 1
      %p217 = scmp.ne.s32.totalorder %s212, %s214
      %p218 = scmp.eq.s32.totalorder %s26, 0
      %p219 = por %p217, %p218
      %p220 = scmp.ne.s32.totalorder %s212, %s214
      %p221 = scmp.eq.s32.totalorder %s31, 1
      %p222 = por %p220, %p221
      %p223 = scmp.ne.s32.totalorder %s214, %s215
      %p224 = scmp.eq.s32.totalorder %s31, 0
      %p225 = por %p223, %p224
      %p226 = scmp.ne.s32.totalorder %s214, %s215
      %p227 = scmp.eq.s32.totalorder %s32, 1
      %p228 = por %p226, %p227
      %p230 = scmp.ne.s32.totalorder %s215, %s229
      %p231 = scmp.eq.s32.totalorder %s32, 0
      %p232 = por %p230, %p231
      %s234 = sadd.s32 %s233, 1
      %p237 = scmp.eq.s32.totalorder %s26, 1
      %p238 = scmp.ne.s32.totalorder %s233, %s235
      %p239 = scmp.eq.s32.totalorder %s26, 0
      %p240 = por %p238, %p239
      %p241 = scmp.ne.s32.totalorder %s233, %s235
      %p242 = scmp.eq.s32.totalorder %s31, 1
      %p243 = por %p241, %p242
      %p244 = scmp.ne.s32.totalorder %s235, %s236
      %p245 = scmp.eq.s32.totalorder %s31, 0
      %p246 = por %p244, %p245
      %p247 = scmp.ne.s32.totalorder %s235, %s236
      %p248 = scmp.eq.s32.totalorder %s32, 1
      %p249 = por %p247, %p248
      %p251 = scmp.ne.s32.totalorder %s236, %s250
      %p252 = scmp.eq.s32.totalorder %s32, 0
      %p253 = por %p251, %p252
      %s255 = sadd.s32 %s254, 1
      %p258 = scmp.eq.s32.totalorder %s26, 1
      %p259 = scmp.ne.s32.totalorder %s254, %s256
      %p260 = scmp.eq.s32.totalorder %s26, 0
      %p261 = por %p259, %p260
      %p262 = scmp.ne.s32.totalorder %s254, %s256
      %p263 = scmp.eq.s32.totalorder %s31, 1
      %p264 = por %p262, %p263
      %p265 = scmp.ne.s32.totalorder %s256, %s257
      %p266 = scmp.eq.s32.totalorder %s31, 0
      %p267 = por %p265, %p266
      %p268 = scmp.ne.s32.totalorder %s256, %s257
      %p269 = scmp.eq.s32.totalorder %s32, 1
      %p270 = por %p268, %p269
      %p272 = scmp.ne.s32.totalorder %s257, %s271
      %p273 = scmp.eq.s32.totalorder %s32, 0
      %p274 = por %p272, %p273
      %s276 = sadd.s32 %s275, 1
      %p279 = scmp.eq.s32.totalorder %s26, 1
      %p280 = scmp.ne.s32.totalorder %s275, %s277
      %p281 = scmp.eq.s32.totalorder %s26, 0
      %p282 = por %p280, %p281
      %p283 = scmp.ne.s32.totalorder %s275, %s277
      %p284 = scmp.eq.s32.totalorder %s31, 1
      %p285 = por %p283, %p284
      %p286 = scmp.ne.s32.totalorder %s277, %s278
      %p287 = scmp.eq.s32.totalorder %s31, 0
      %p288 = por %p286, %p287
      %p289 = scmp.ne.s32.totalorder %s277, %s278
      %p290 = scmp.eq.s32.totalorder %s32, 1
      %p291 = por %p289, %p290
      %p293 = scmp.ne.s32.totalorder %s278, %s292
      %p294 = scmp.eq.s32.totalorder %s32, 0
      %p295 = por %p293, %p294
      %s297 = sadd.s32 %s296, 1
      %p300 = scmp.eq.s32.totalorder %s26, 1
      %p301 = scmp.ne.s32.totalorder %s296, %s298
      %p302 = scmp.eq.s32.totalorder %s26, 0
      %p303 = por %p301, %p302
      %p304 = scmp.ne.s32.totalorder %s296, %s298
      %p305 = scmp.eq.s32.totalorder %s31, 1
      %p306 = por %p304, %p305
      %p307 = scmp.ne.s32.totalorder %s298, %s299
      %p308 = scmp.eq.s32.totalorder %s31, 0
      %p309 = por %p307, %p308
      %p310 = scmp.ne.s32.totalorder %s298, %s299
      %p311 = scmp.eq.s32.totalorder %s32, 1
      %p312 = por %p310, %p311
      %p314 = scmp.ne.s32.totalorder %s299, %s313
      %p315 = scmp.eq.s32.totalorder %s32, 0
      %p316 = por %p314, %p315
      %s318 = sadd.s32 %s317, 1
      %p321 = scmp.eq.s32.totalorder %s26, 1
      %p322 = scmp.ne.s32.totalorder %s317, %s319
      %p323 = scmp.eq.s32.totalorder %s26, 0
      %p324 = por %p322, %p323
      %p325 = scmp.ne.s32.totalorder %s317, %s319
      %p326 = scmp.eq.s32.totalorder %s31, 1
      %p327 = por %p325, %p326
      %p328 = scmp.ne.s32.totalorder %s319, %s320
      %p329 = scmp.eq.s32.totalorder %s31, 0
      %p330 = por %p328, %p329
      %p331 = scmp.ne.s32.totalorder %s319, %s320
      %p332 = scmp.eq.s32.totalorder %s32, 1
      %p333 = por %p331, %p332
      %p335 = scmp.ne.s32.totalorder %s320, %s334
      %p336 = scmp.eq.s32.totalorder %s32, 0
      %p337 = por %p335, %p336
      %s339 = sadd.s32 %s338, 1
      %p342 = scmp.eq.s32.totalorder %s26, 1
      %p343 = scmp.ne.s32.totalorder %s338, %s340
      %p344 = scmp.eq.s32.totalorder %s26, 0
      %p345 = por %p343, %p344
      %p346 = scmp.ne.s32.totalorder %s338, %s340
      %p347 = scmp.eq.s32.totalorder %s31, 1
      %p348 = por %p346, %p347
      %p349 = scmp.ne.s32.totalorder %s340, %s341
      %p350 = scmp.eq.s32.totalorder %s31, 0
      %p351 = por %p349, %p350
      %p352 = scmp.ne.s32.totalorder %s340, %s341
      %p353 = scmp.eq.s32.totalorder %s32, 1
      %p354 = por %p352, %p353
      %p356 = scmp.ne.s32.totalorder %s341, %s355
      %p357 = scmp.eq.s32.totalorder %s32, 0
      %p358 = por %p356, %p357
      %s360 = sadd.s32 %s359, 1
      %p363 = scmp.eq.s32.totalorder %s26, 1
      %p364 = scmp.ne.s32.totalorder %s359, %s361
      %p365 = scmp.eq.s32.totalorder %s26, 0
      %p366 = por %p364, %p365
      %p367 = scmp.ne.s32.totalorder %s359, %s361
      %p368 = scmp.eq.s32.totalorder %s31, 1
      %p369 = por %p367, %p368
      %p370 = scmp.ne.s32.totalorder %s361, %s362
      %p371 = scmp.eq.s32.totalorder %s31, 0
      %p372 = por %p370, %p371
      %p373 = scmp.ne.s32.totalorder %s361, %s362
      %p374 = scmp.eq.s32.totalorder %s32, 1
      %p375 = por %p373, %p374
      %p377 = scmp.ne.s32.totalorder %s362, %s376
      %p378 = scmp.eq.s32.totalorder %s32, 0
      %p379 = por %p377, %p378
      %s381 = sadd.s32 %s380, 1
      %p384 = scmp.eq.s32.totalorder %s26, 1
      %p385 = scmp.ne.s32.totalorder %s380, %s382
      %p386 = scmp.eq.s32.totalorder %s26, 0
      %p387 = por %p385, %p386
      %p388 = scmp.ne.s32.totalorder %s380, %s382
      %p389 = scmp.eq.s32.totalorder %s31, 1
      %p390 = por %p388, %p389
      %p391 = scmp.ne.s32.totalorder %s382, %s383
      %p392 = scmp.eq.s32.totalorder %s31, 0
      %p393 = por %p391, %p392
      %p394 = scmp.ne.s32.totalorder %s382, %s383
      %p395 = scmp.eq.s32.totalorder %s32, 1
      %p396 = por %p394, %p395
      %p398 = scmp.ne.s32.totalorder %s383, %s397
      %p399 = scmp.eq.s32.totalorder %s32, 0
      %p400 = por %p398, %p399
      %s401 = ssub.s32 %s26, %s33
      %p402 = scmp.eq.s32.totalorder %s401, 0
      %s404 = sadd.s32 %s403, 1
      %s405 = scalar_select %p402, %s403, %s404
      %p408 = pneg %p402
      %p409 = scmp.eq.s32.totalorder %s26, 1
      %p410 = por %p408, %p409
      %p411 = scmp.ne.s32.totalorder %s403, %s406
      %p412 = scmp.eq.s32.totalorder %s26, 0
      %p413 = por %p411, %p412
      %p414 = scmp.ne.s32.totalorder %s403, %s406
      %p415 = scmp.eq.s32.totalorder %s31, 1
      %p416 = por %p414, %p415
      %p417 = scmp.ne.s32.totalorder %s406, %s407
      %p418 = scmp.eq.s32.totalorder %s31, 0
      %p419 = por %p417, %p418
      %p420 = scmp.ne.s32.totalorder %s406, %s407
      %p421 = scmp.eq.s32.totalorder %s32, 1
      %p422 = por %p420, %p421
      %p424 = scmp.ne.s32.totalorder %s407, %s423
      %p425 = scmp.eq.s32.totalorder %s32, 0
      %p426 = por %p424, %p425
      %p427 = scmp.le.s32.totalorder 1, %s26
      %p428 = scmp.lt.s32.totalorder %s26, 3
      %p429 = pnand %p427, %p428
      %p430 = pneg %p429
      // Predicated region
      $region9: #{_lambda_.5} parent=5 // pred_check
        _
      $region10: #{_lambda_.5} parent=5 // pred_check_branch
        %432 = sbr.rel (%p429) target = $region12
      $region11: #{_lambda_.5} parent=5 // pred_region
        %s433 = ssub.s32 %s26, 1
        // Predicated region
        $region13: #{_lambda_.5} parent=11 // pred_check
          %p434 = pneg %p99
        $region14: #{_lambda_.5} parent=11 // pred_check_branch
          %436 = sbr.rel (%p434) target = $region16
        $region15: #{_lambda_.5} parent=11 // pred_region
          _
        $region16: #{_lambda_.5} parent=11 // pred_fallthru
          _
        // Predicated region
        $region17: #{_lambda_.5} parent=11 // pred_check
          %p437 = pneg %p120
        $region18: #{_lambda_.5} parent=11 // pred_check_branch
          %439 = sbr.rel (%p437) target = $region20
        $region19: #{_lambda_.5} parent=11 // pred_region
          _
        $region20: #{_lambda_.5} parent=11 // pred_fallthru
          _
        // Predicated region
        $region21: #{_lambda_.5} parent=11 // pred_check
          %p440 = pneg %p141
        $region22: #{_lambda_.5} parent=11 // pred_check_branch
          %442 = sbr.rel (%p440) target = $region24
        $region23: #{_lambda_.5} parent=11 // pred_region
          %444 = vsyncadd [#allocation3], 0
          %s445 = sshll.u32 %s4, 4
          %s446 = int_to_ptr.hbm [resolvable:$true] %s445
          %s447 = sshll.u32 [#allocation2], 4
          %s448 = int_to_ptr.vmem [resolvable:$true] %s447
          %453 = dma.hbm_to_vmem [thread:$0]  %s446, 1024, %s448, [#allocation3], 64, 64, 4
        $region24: #{_lambda_.5} parent=11 // pred_fallthru
          _
        // Predicated region
        $region25: #{_lambda_.5} parent=11 // pred_check
          %p454 = pneg %p162
        $region26: #{_lambda_.5} parent=11 // pred_check_branch
          %456 = sbr.rel (%p454) target = $region28
        $region27: #{_lambda_.5} parent=11 // pred_region
          _
        $region28: #{_lambda_.5} parent=11 // pred_fallthru
          _
        // Predicated region
        $region29: #{_lambda_.5} parent=11 // pred_check
          %p457 = pneg %p183
        $region30: #{_lambda_.5} parent=11 // pred_check_branch
          %459 = sbr.rel (%p457) target = $region32
        $region31: #{_lambda_.5} parent=11 // pred_region
          _
        $region32: #{_lambda_.5} parent=11 // pred_fallthru
          _
        // Predicated region
        $region33: #{_lambda_.5} parent=11 // pred_check
          %p460 = pneg %p204
        $region34: #{_lambda_.5} parent=11 // pred_check_branch
          %462 = sbr.rel (%p460) target = $region36
        $region35: #{_lambda_.5} parent=11 // pred_region
          _
        $region36: #{_lambda_.5} parent=11 // pred_fallthru
          _
        // Predicated region
        $region37: #{_lambda_.5} parent=11 // pred_check
          %p463 = pneg %p225
        $region38: #{_lambda_.5} parent=11 // pred_check_branch
          %465 = sbr.rel (%p463) target = $region40
        $region39: #{_lambda_.5} parent=11 // pred_region
          _
        $region40: #{_lambda_.5} parent=11 // pred_fallthru
          _
        // Predicated region
        $region41: #{_lambda_.5} parent=11 // pred_check
          %p466 = pneg %p246
        $region42: #{_lambda_.5} parent=11 // pred_check_branch
          %468 = sbr.rel (%p466) target = $region44
        $region43: #{_lambda_.5} parent=11 // pred_region
          %470 = vsyncadd [#allocation5], 0
          %s471 = sshll.u32 %s9, 4
          %s472 = int_to_ptr.hbm [resolvable:$true] %s471
          %s473 = sshll.u32 [#allocation4], 4
          %s474 = int_to_ptr.vmem [resolvable:$true] %s473
          %479 = dma.hbm_to_vmem [thread:$0]  %s472, 2048, %s474, [#allocation5], 128, 128, 8
        $region44: #{_lambda_.5} parent=11 // pred_fallthru
          _
        // Predicated region
        $region45: #{_lambda_.5} parent=11 // pred_check
          %p480 = pneg %p267
        $region46: #{_lambda_.5} parent=11 // pred_check_branch
          %482 = sbr.rel (%p480) target = $region48
        $region47: #{_lambda_.5} parent=11 // pred_region
          _
        $region48: #{_lambda_.5} parent=11 // pred_fallthru
          _
        // Predicated region
        $region49: #{_lambda_.5} parent=11 // pred_check
          %p483 = pneg %p288
        $region50: #{_lambda_.5} parent=11 // pred_check_branch
          %485 = sbr.rel (%p483) target = $region52
        $region51: #{_lambda_.5} parent=11 // pred_region
          %487 = vsyncadd [#allocation5], 0
          %s488 = sshll.u32 %s11, 4
          %s489 = int_to_ptr.hbm [resolvable:$true] %s488
          %s490 = sshll.u32 [#allocation6], 4
          %s491 = int_to_ptr.vmem [resolvable:$true] %s490
          %496 = dma.hbm_to_vmem [thread:$0]  %s489, 2048, %s491, [#allocation5], 64, 64, 4
        $region52: #{_lambda_.5} parent=11 // pred_fallthru
          _
        // Predicated region
        $region53: #{_lambda_.5} parent=11 // pred_check
          %p497 = pneg %p309
        $region54: #{_lambda_.5} parent=11 // pred_check_branch
          %499 = sbr.rel (%p497) target = $region56
        $region55: #{_lambda_.5} parent=11 // pred_region
          _
        $region56: #{_lambda_.5} parent=11 // pred_fallthru
          _
        // Predicated region
        $region57: #{_lambda_.5} parent=11 // pred_check
          %p500 = pneg %p330
        $region58: #{_lambda_.5} parent=11 // pred_check_branch
          %502 = sbr.rel (%p500) target = $region60
        $region59: #{_lambda_.5} parent=11 // pred_region
          %504 = vsyncadd [#allocation8], 0
          %s505 = sshll.u32 %s13, 4
          %s506 = int_to_ptr.hbm [resolvable:$true] %s505
          %s507 = sshll.u32 [#allocation7], 4
          %s508 = int_to_ptr.vmem [resolvable:$true] %s507
          %513 = dma.hbm_to_vmem [thread:$0]  %s506, 2048, %s508, [#allocation8], 128, 128, 8
        $region60: #{_lambda_.5} parent=11 // pred_fallthru
          _
        // Predicated region
        $region61: #{_lambda_.5} parent=11 // pred_check
          %p514 = pneg %p351
        $region62: #{_lambda_.5} parent=11 // pred_check_branch
          %516 = sbr.rel (%p514) target = $region64
        $region63: #{_lambda_.5} parent=11 // pred_region
          _
        $region64: #{_lambda_.5} parent=11 // pred_fallthru
          _
        // Predicated region
        $region65: #{_lambda_.5} parent=11 // pred_check
          %p517 = pneg %p372
        $region66: #{_lambda_.5} parent=11 // pred_check_branch
          %519 = sbr.rel (%p517) target = $region68
        $region67: #{_lambda_.5} parent=11 // pred_region
          %521 = vsyncadd [#allocation8], 0
          %s522 = sshll.u32 %s15, 4
          %s523 = int_to_ptr.hbm [resolvable:$true] %s522
          %s524 = sshll.u32 [#allocation9], 4
          %s525 = int_to_ptr.vmem [resolvable:$true] %s524
          %530 = dma.hbm_to_vmem [thread:$0]  %s523, 2048, %s525, [#allocation8], 64, 64, 4
        $region68: #{_lambda_.5} parent=11 // pred_fallthru
          _
        // Predicated region
        $region69: #{_lambda_.5} parent=11 // pred_check
          %p531 = pneg %p393
        $region70: #{_lambda_.5} parent=11 // pred_check_branch
          %533 = sbr.rel (%p531) target = $region72
        $region71: #{_lambda_.5} parent=11 // pred_region
          _
        $region72: #{_lambda_.5} parent=11 // pred_fallthru
          _
      $region12: #{_lambda_.5} parent=5 // pred_fallthru
        _
      %p534 = scmp.lt.s32.totalorder %s26, 2
      // Predicated region
      $region73: #{_lambda_.5} parent=5 // pred_check
        %p535 = pneg %p534
      $region74: #{_lambda_.5} parent=5 // pred_check_branch
        %537 = sbr.rel (%p535) target = $region76
      $region75: #{_lambda_.5} parent=5 // pred_region
        // Predicated region
        $region77: #{_lambda_.5} parent=75 // pred_check
          %p538 = pneg %p46
        $region78: #{_lambda_.5} parent=75 // pred_check_branch
          %540 = sbr.rel (%p538) target = $region80
        $region79: #{_lambda_.5} parent=75 // pred_region
          %p541 = scmp.lt.s32.totalorder %s26, 1
          %s542 = scalar_select %p541, %s26, 1
          %s543 = smul.addr %s542, 8
          %s544 = scalar_lea.vmem %s0, %s543
        $region80: #{_lambda_.5} parent=75 // pred_fallthru
          _
        // Predicated region
        $region81: #{_lambda_.5} parent=75 // pred_check
          %p545 = pneg %p72
        $region82: #{_lambda_.5} parent=75 // pred_check_branch
          %547 = sbr.rel (%p545) target = $region84
        $region83: #{_lambda_.5} parent=75 // pred_region
          %p548 = scmp.lt.s32.totalorder %s26, 1
          %s549 = scalar_select %p548, %s26, 1
          %s550 = smul.addr %s549, 8
          %s551 = scalar_lea.vmem %s1, %s550
        $region84: #{_lambda_.5} parent=75 // pred_fallthru
          _
      $region76: #{_lambda_.5} parent=5 // pred_fallthru
        _
      %p552 = scmp.le.s32.totalorder 1, %s26
      %p553 = scmp.lt.s32.totalorder %s26, 3
      %p554 = pnand %p552, %p553
      %p555 = pneg %p554
      // Predicated region
      $region85: #{_lambda_.5} parent=5 // pred_check
        _
      $region86: #{_lambda_.5} parent=5 // pred_check_branch
        %557 = sbr.rel (%p554) target = $region88
      $region87: #{_lambda_.5} parent=5 // pred_region
        %s558 = ssub.s32 %s26, 1
        // Predicated region
        $region89: #{_lambda_.5} parent=87 // pred_check
          %p559 = pneg %p141
        $region90: #{_lambda_.5} parent=87 // pred_check_branch
          %561 = sbr.rel (%p559) target = $region92
        $region91: #{_lambda_.5} parent=87 // pred_region
          %563 = dma.done [#allocation3], 1024
        $region92: #{_lambda_.5} parent=87 // pred_fallthru
          _
        // Predicated region
        $region93: #{_lambda_.5} parent=87 // pred_check
          %p564 = pneg %p246
        $region94: #{_lambda_.5} parent=87 // pred_check_branch
          %566 = sbr.rel (%p564) target = $region96
        $region95: #{_lambda_.5} parent=87 // pred_region
          %568 = dma.done [#allocation5], 2048
        $region96: #{_lambda_.5} parent=87 // pred_fallthru
          _
        // Predicated region
        $region97: #{_lambda_.5} parent=87 // pred_check
          %p569 = pneg %p288
        $region98: #{_lambda_.5} parent=87 // pred_check_branch
          %571 = sbr.rel (%p569) target = $region100
        $region99: #{_lambda_.5} parent=87 // pred_region
          %573 = dma.done [#allocation5], 2048
        $region100: #{_lambda_.5} parent=87 // pred_fallthru
          _
        // Predicated region
        $region101: #{_lambda_.5} parent=87 // pred_check
          %p574 = pneg %p330
        $region102: #{_lambda_.5} parent=87 // pred_check_branch
          %576 = sbr.rel (%p574) target = $region104
        $region103: #{_lambda_.5} parent=87 // pred_region
          %578 = dma.done [#allocation8], 2048
        $region104: #{_lambda_.5} parent=87 // pred_fallthru
          _
        // Predicated region
        $region105: #{_lambda_.5} parent=87 // pred_check
          %p579 = pneg %p372
        $region106: #{_lambda_.5} parent=87 // pred_check_branch
          %581 = sbr.rel (%p579) target = $region108
        $region107: #{_lambda_.5} parent=87 // pred_region
          %583 = dma.done [#allocation8], 2048
        $region108: #{_lambda_.5} parent=87 // pred_fallthru
          _
        %p584 = scmp.lt.s32.totalorder %s31, 1
        %s585 = scalar_select %p584, %s31, 1
        %s586 = smul.addr %s585, 8
        %s587 = scalar_lea.vmem %s0, %s586
        %p588 = pneg %p52
        %p589 = pneg %p49
        %p590 = scmp.lt.s32.totalorder %s31, 1
        %s591 = scalar_select %p590, %s31, 1
        %s592 = smul.addr %s591, 8
        %s593 = scalar_lea.vmem %s1, %s592
        %p594 = pneg %p78
        %p595 = pneg %p75
        %p596 = pneg %p99
        %p597 = pneg %p96
        %p598 = pneg %p120
        %p599 = pneg %p117
        %p600 = pneg %p141
        %p601 = pneg %p138
        %p602 = pneg %p162
        %p603 = pneg %p159
        %p604 = pneg %p183
        %p605 = pneg %p180
        %p606 = pneg %p204
        %p607 = pneg %p201
        %p608 = pneg %p225
        %p609 = pneg %p222
        %p610 = pneg %p246
        %p611 = pneg %p243
        %p612 = pneg %p267
        %p613 = pneg %p264
        %p614 = pneg %p288
        %p615 = pneg %p285
        %p616 = pneg %p309
        %p617 = pneg %p306
        %p618 = pneg %p330
        %p619 = pneg %p327
        %p620 = pneg %p351
        %p621 = pneg %p348
        %p622 = pneg %p372
        %p623 = pneg %p369
        %p624 = pneg %p393
        %p625 = pneg %p390
        %p626 = pneg %p419
        %p627 = pneg %p416
        %p628 = scmp.lt.s32.totalorder %s31, 1
        %s629 = scalar_select %p628, %s31, 1
        %s630 = smul.addr %s629, 8
        %s631 = scalar_lea.vmem %s17, %s630
        %p632 = scmp.lt.s32.totalorder %s31, 1
        %s633 = scalar_select %p632, %s31, 1
        %s634 = smul.addr %s633, 8
        %s635 = scalar_lea.vmem %s0, %s634
        %p636 = scmp.lt.s32.totalorder %s31, 1
        %s637 = scalar_select %p636, %s31, 1
        %s638 = smul.addr %s637, 8
        %s639 = scalar_lea.vmem %s1, %s638
        %p640 = scmp.lt.s32.totalorder %s31, 1
        %s641 = scalar_select %p640, %s31, 1
        %s642 = smul.addr %s641, 8
        %s643 = scalar_lea.vmem %s17, %s642
        %v645 = vld [vmem:[%s635] sm:$0xff]
        %v646 = vld [vmem:[%s2] sm:$0x1]
        %v647 = vld [vmem:[%s3] sm:$0x1]
        %648 = vadd.xlane.f32.xlu0 %v645
        %v649 = vpop.xlane.xlu0 %648
        %v650 = vrcp.pop 128.0
        %v651 = vmul.f32 128.0, %v650
        %v652 = vsub.f32 1.0, %v651
        %v653 = vmul.f32 %v650, %v652
        %v654 = vadd.f32 %v650, %v653
        %vm655 = vweird.f32 %v650
        %v656 = vsel %vm655, %v650, %v654
        %v657 = vmul.f32 %v649, %v656
        %v658 = vsub.f32 %v645, %v657
        %v659 = vmul.f32 %v658, %v658
        %660 = vadd.xlane.f32.xlu0 %v659
        %v661 = vpop.xlane.xlu0 %660
        %v662 = vmul.f32 %v661, %v656
        %v663 = vadd.f32 %v662, 1e-05
        %v664 = vrsqrt.pop %v663
        %v665 = vmul.f32 %v664, %v663
        %v666 = vmul.f32 %v665, %v664
        %v667 = vmul.f32 0.5, %v666
        %v668 = vsub.f32 1.5, %v667
        %v669 = vmul.f32 %v664, %v668
        %vm670 = vweird.f32 %v663
        %vm671 = vweird.f32 %v664
        %vm672 = vmor %vm670, %vm671
        %v673 = vsel %vm672, %v664, %v669
        %v674 = vmul.f32 %v658, %v673
        %v676 = vperm.slane %v646, 0
        %v678 = vmul.f32 %v674, %v676
        %v680 = vperm.slane %v647, 0
        %v682 = vadd.f32 %v678, %v680
        %v683 = vld [vmem:[#allocation2] sm:$0xf]
        %v684 = vld [vmem:[#allocation2 + $0x4] sm:$0xf]
        %v685 = vld [vmem:[#allocation2 + $0x8] sm:$0xf]
        %v686 = vld [vmem:[#allocation2 + $0xc] sm:$0xf]
        %v687 = vld [vmem:[#allocation2 + $0x10] sm:$0xf]
        %v688 = vld [vmem:[#allocation2 + $0x14] sm:$0xf]
        %v689 = vld [vmem:[#allocation2 + $0x18] sm:$0xf]
        %v690 = vld [vmem:[#allocation2 + $0x1c] sm:$0xf]
        %v691 = vld [vmem:[#allocation2 + $0x20] sm:$0xf]
        %v692 = vld [vmem:[#allocation2 + $0x24] sm:$0xf]
        %v693 = vld [vmem:[#allocation2 + $0x28] sm:$0xf]
        %v694 = vld [vmem:[#allocation2 + $0x2c] sm:$0xf]
        %v695 = vld [vmem:[#allocation2 + $0x30] sm:$0xf]
        %v696 = vld [vmem:[#allocation2 + $0x34] sm:$0xf]
        %v697 = vld [vmem:[#allocation2 + $0x38] sm:$0xf]
        %v698 = vld [vmem:[#allocation2 + $0x3c] sm:$0xf]
        %v699 = vpack.c.bf16 %v682, %v682
        %v700 = vld [vmem:[%s5] sm:$0x1]
        %v702 = vperm.slane %v700, 0
        %v720 = vunpack.c.l.b16 %v683
        %v721 = vunpack.c.l.b16 %v684
        %v722 = vunpack.c.l.b16 %v685
        %v723 = vunpack.c.l.b16 %v686
        %v724 = vunpack.c.l.b16 %v687
        %v725 = vunpack.c.l.b16 %v688
        %v726 = vunpack.c.l.b16 %v689
        %v727 = vunpack.c.l.b16 %v690
        %v728 = vunpack.c.l.b16 %v691
        %v729 = vunpack.c.l.b16 %v692
        %v730 = vunpack.c.l.b16 %v693
        %v731 = vunpack.c.l.b16 %v694
        %v732 = vunpack.c.l.b16 %v695
        %v733 = vunpack.c.l.b16 %v696
        %v734 = vunpack.c.l.b16 %v697
        %v735 = vunpack.c.l.b16 %v698
        %v736 = vpack.c.b16 %v721, %v720
        %v737 = vpack.c.b16 %v723, %v722
        %v738 = vpack.c.b16 %v725, %v724
        %v739 = vpack.c.b16 %v727, %v726
        %v740 = vpack.c.b16 %v729, %v728
        %v741 = vpack.c.b16 %v731, %v730
        %v742 = vpack.c.b16 %v733, %v732
        %v743 = vpack.c.b16 %v735, %v734
        %752 = vmatpush.bf16.msra.mxu0 %v743
        %753 = vmatpush.bf16.msra.mxu0 %v742
        %754 = vmatpush.bf16.msra.mxu0 %v741
        %755 = vmatpush.bf16.msra.mxu0 %v740
        %756 = vmatpush.bf16.msra.mxu0 %v739
        %757 = vmatpush.bf16.msra.mxu0 %v738
        %758 = vmatpush.bf16.msra.mxu0 %v737
        %759 = vmatpush.bf16.msra.mxu0 %v736
        %760 = vmatmul.bf16.gmra.mxu0 %v699
        %v761 = vpop.f32.mrf.mxu0
        %v762 = vadd.f32 %v702, %v761
        %v763 = vpop.f32.mrf.mxu0
        %764 = vdwg.mxu0
        %v765 = vld [vmem:[%s639] sm:$0xff]
        %v766 = vld [vmem:[%s8] sm:$0xf]
        %v767 = vld [vmem:[%s8 + $0x4] sm:$0xf]
        %v768 = vpack.c.bf16 %v765, %v765
        %v771 = vunpack.c.l.b16 %v766
        %v772 = vunpack.c.l.b16 %v767
        %v773 = vpack.c.b16 %v772, %v771
        %vm775 = vcmask 130048
        %v777 = vsel %vm775, %v768, 0
        %779 = vmatpush.bf16.msra.mxu0 0
        %780 = vmatpush.bf16.msra.mxu0 0
        %781 = vmatpush.bf16.msra.mxu0 0
        %782 = vmatpush.bf16.msra.mxu0 0
        %783 = vmatpush.bf16.msra.mxu0 0
        %784 = vmatpush.bf16.msra.mxu0 0
        %785 = vmatpush.bf16.msra.mxu0 0
        %786 = vmatpush.bf16.msra.mxu0 %v773
        %787 = vmatmul.bf16.gmra.mxu0 %v777
        %v788 = vpop.f32.mrf.mxu0
        %v789 = vadd.f32 %v682, %v788
        %v790 = vpop.f32.mrf.mxu0
        %791 = vdwg.mxu0
        %v792 = vld [vmem:[%s6] sm:$0x1]
        %v793 = vld [vmem:[%s7] sm:$0x1]
        %794 = vadd.xlane.f32.xlu0 %v789
        %v795 = vpop.xlane.xlu0 %794
        %v796 = vmul.f32 %v795, %v656
        %v797 = vsub.f32 %v789, %v796
        %v798 = vmul.f32 %v797, %v797
        %799 = vadd.xlane.f32.xlu0 %v798
        %v800 = vpop.xlane.xlu0 %799
        %v801 = vmul.f32 %v800, %v656
        %v802 = vadd.f32 %v801, 1e-05
        %v803 = vrsqrt.pop %v802
        %v804 = vmul.f32 %v803, %v802
        %v805 = vmul.f32 %v804, %v803
        %v806 = vmul.f32 0.5, %v805
        %v807 = vsub.f32 1.5, %v806
        %v808 = vmul.f32 %v803, %v807
        %vm809 = vweird.f32 %v802
        %vm810 = vweird.f32 %v803
        %vm811 = vmor %vm809, %vm810
        %v812 = vsel %vm811, %v803, %v808
        %v813 = vmul.f32 %v797, %v812
        %v815 = vperm.slane %v792, 0
        %v817 = vmul.f32 %v813, %v815
        %v819 = vperm.slane %v793, 0
        %v821 = vadd.f32 %v817, %v819
        %v822 = vld [vmem:[#allocation4] sm:$0xff]
        %v823 = vld [vmem:[#allocation4 + $0x8] sm:$0xff]
        %v824 = vld [vmem:[#allocation4 + $0x10] sm:$0xff]
        %v825 = vld [vmem:[#allocation4 + $0x18] sm:$0xff]
        %v826 = vld [vmem:[#allocation4 + $0x20] sm:$0xff]
        %v827 = vld [vmem:[#allocation4 + $0x28] sm:$0xff]
        %v828 = vld [vmem:[#allocation4 + $0x30] sm:$0xff]
        %v829 = vld [vmem:[#allocation4 + $0x38] sm:$0xff]
        %v830 = vld [vmem:[#allocation4 + $0x40] sm:$0xff]
        %v831 = vld [vmem:[#allocation4 + $0x48] sm:$0xff]
        %v832 = vld [vmem:[#allocation4 + $0x50] sm:$0xff]
        %v833 = vld [vmem:[#allocation4 + $0x58] sm:$0xff]
        %v834 = vld [vmem:[#allocation4 + $0x60] sm:$0xff]
        %v835 = vld [vmem:[#allocation4 + $0x68] sm:$0xff]
        %v836 = vld [vmem:[#allocation4 + $0x70] sm:$0xff]
        %v837 = vld [vmem:[#allocation4 + $0x78] sm:$0xff]
        %v838 = vld [vmem:[%s10] sm:$0x3]
        %v839 = vld [vmem:[#allocation6] sm:$0xf]
        %v840 = vld [vmem:[#allocation6 + $0x4] sm:$0xf]
        %v841 = vld [vmem:[#allocation6 + $0x8] sm:$0xf]
        %v842 = vld [vmem:[#allocation6 + $0xc] sm:$0xf]
        %v843 = vld [vmem:[#allocation6 + $0x10] sm:$0xf]
        %v844 = vld [vmem:[#allocation6 + $0x14] sm:$0xf]
        %v845 = vld [vmem:[#allocation6 + $0x18] sm:$0xf]
        %v846 = vld [vmem:[#allocation6 + $0x1c] sm:$0xf]
        %v847 = vld [vmem:[#allocation6 + $0x20] sm:$0xf]
        %v848 = vld [vmem:[#allocation6 + $0x24] sm:$0xf]
        %v849 = vld [vmem:[#allocation6 + $0x28] sm:$0xf]
        %v850 = vld [vmem:[#allocation6 + $0x2c] sm:$0xf]
        %v851 = vld [vmem:[#allocation6 + $0x30] sm:$0xf]
        %v852 = vld [vmem:[#allocation6 + $0x34] sm:$0xf]
        %v853 = vld [vmem:[#allocation6 + $0x38] sm:$0xf]
        %v854 = vld [vmem:[#allocation6 + $0x3c] sm:$0xf]
        %v855 = vld [vmem:[#allocation6 + $0x40] sm:$0xf]
        %v856 = vld [vmem:[#allocation6 + $0x44] sm:$0xf]
        %v857 = vld [vmem:[#allocation6 + $0x48] sm:$0xf]
        %v858 = vld [vmem:[#allocation6 + $0x4c] sm:$0xf]
        %v859 = vld [vmem:[#allocation6 + $0x50] sm:$0xf]
        %v860 = vld [vmem:[#allocation6 + $0x54] sm:$0xf]
        %v861 = vld [vmem:[#allocation6 + $0x58] sm:$0xf]
        %v862 = vld [vmem:[#allocation6 + $0x5c] sm:$0xf]
        %v863 = vld [vmem:[#allocation6 + $0x60] sm:$0xf]
        %v864 = vld [vmem:[#allocation6 + $0x64] sm:$0xf]
        %v865 = vld [vmem:[#allocation6 + $0x68] sm:$0xf]
        %v866 = vld [vmem:[#allocation6 + $0x6c] sm:$0xf]
        %v867 = vld [vmem:[#allocation6 + $0x70] sm:$0xf]
        %v868 = vld [vmem:[#allocation6 + $0x74] sm:$0xf]
        %v869 = vld [vmem:[#allocation6 + $0x78] sm:$0xf]
        %v870 = vld [vmem:[#allocation6 + $0x7c] sm:$0xf]
        %v871 = vld [vmem:[%s12] sm:$0x1]
        %v872 = vpack.c.bf16 %v821, %v821
        %v874 = vperm.slane %v838, 0
        %v875 = vperm.slane %v838, 1
        %v894 = vunpack.c.l.b16 %v822
        %v895 = vunpack.c.h.b16 %v822
        %v896 = vunpack.c.l.b16 %v823
        %v897 = vunpack.c.h.b16 %v823
        %v898 = vunpack.c.l.b16 %v824
        %v899 = vunpack.c.h.b16 %v824
        %v900 = vunpack.c.l.b16 %v825
        %v901 = vunpack.c.h.b16 %v825
        %v902 = vunpack.c.l.b16 %v826
        %v903 = vunpack.c.h.b16 %v826
        %v904 = vunpack.c.l.b16 %v827
        %v905 = vunpack.c.h.b16 %v827
        %v906 = vunpack.c.l.b16 %v828
        %v907 = vunpack.c.h.b16 %v828
        %v908 = vunpack.c.l.b16 %v829
        %v909 = vunpack.c.h.b16 %v829
        %v910 = vunpack.c.l.b16 %v830
        %v911 = vunpack.c.h.b16 %v830
        %v912 = vunpack.c.l.b16 %v831
        %v913 = vunpack.c.h.b16 %v831
        %v914 = vunpack.c.l.b16 %v832
        %v915 = vunpack.c.h.b16 %v832
        %v916 = vunpack.c.l.b16 %v833
        %v917 = vunpack.c.h.b16 %v833
        %v918 = vunpack.c.l.b16 %v834
        %v919 = vunpack.c.h.b16 %v834
        %v920 = vunpack.c.l.b16 %v835
        %v921 = vunpack.c.h.b16 %v835
        %v922 = vunpack.c.l.b16 %v836
        %v923 = vunpack.c.h.b16 %v836
        %v924 = vunpack.c.l.b16 %v837
        %v925 = vunpack.c.h.b16 %v837
        %v926 = vpack.c.b16 %v896, %v894
        %v927 = vpack.c.b16 %v897, %v895
        %v928 = vpack.c.b16 %v900, %v898
        %v929 = vpack.c.b16 %v901, %v899
        %v930 = vpack.c.b16 %v904, %v902
        %v931 = vpack.c.b16 %v905, %v903
        %v932 = vpack.c.b16 %v908, %v906
        %v933 = vpack.c.b16 %v909, %v907
        %v934 = vpack.c.b16 %v912, %v910
        %v935 = vpack.c.b16 %v913, %v911
        %v936 = vpack.c.b16 %v916, %v914
        %v937 = vpack.c.b16 %v917, %v915
        %v938 = vpack.c.b16 %v920, %v918
        %v939 = vpack.c.b16 %v921, %v919
        %v940 = vpack.c.b16 %v924, %v922
        %v941 = vpack.c.b16 %v925, %v923
        %958 = vmatpush.bf16.msra.mxu0 %v940
        %959 = vmatpush.bf16.msra.mxu0 %v938
        %960 = vmatpush.bf16.msra.mxu0 %v936
        %961 = vmatpush.bf16.msra.mxu0 %v934
        %962 = vmatpush.bf16.msra.mxu0 %v932
        %963 = vmatpush.bf16.msra.mxu0 %v930
        %964 = vmatpush.bf16.msra.mxu0 %v928
        %965 = vmatpush.bf16.msra.mxu0 %v926
        %966 = vmatmul.bf16.gmra.mxu0 %v872
        %v967 = vpop.f32.mrf.mxu0
        %v968 = vadd.f32 %v874, %v967
        %v969 = vpop.f32.mrf.mxu0
        %970 = vdwg.mxu0
        %971 = vmatpush.bf16.msra.mxu0 %v941
        %972 = vmatpush.bf16.msra.mxu0 %v939
        %973 = vmatpush.bf16.msra.mxu0 %v937
        %974 = vmatpush.bf16.msra.mxu0 %v935
        %975 = vmatpush.bf16.msra.mxu0 %v933
        %976 = vmatpush.bf16.msra.mxu0 %v931
        %977 = vmatpush.bf16.msra.mxu0 %v929
        %978 = vmatpush.bf16.msra.mxu0 %v927
        %979 = vmatmul.bf16.gmra.mxu0 %v872
        %v980 = vpop.f32.mrf.mxu0
        %v981 = vadd.f32 %v875, %v980
        %v982 = vpop.f32.mrf.mxu0
        %983 = vdwg.mxu0
        %v984 = vmul.f32 %v968, 0.5
        %v985 = vmul.f32 %v981, 0.5
        %v986 = vmul.f32 %v968, 0.70710677
        %v987 = vmul.f32 %v981, 0.70710677
        %v988 = vmul.f32 %v986, %v986
        %v989 = vmin.f32 16.0, %v988
        %v990 = vmul.f32 %v989, 2.1237322e-06
        %v991 = vadd.f32 %v990, 0.00028619796
        %v992 = vmul.f32 %v989, %v991
        %v993 = vadd.f32 %v992, 0.0036580483
        %v994 = vmul.f32 %v989, %v993
        %v995 = vadd.f32 %v994, 0.05243302
        %v996 = vmul.f32 %v989, %v995
        %v997 = vadd.f32 %v996, 0.18741608
        %v998 = vmul.f32 %v989, %v997
        %v999 = vadd.f32 %v998, 1.1283791
        %v1000 = vmul.f32 %v986, %v999
        %v1001 = vmul.f32 %v989, 3.8918573e-05
        %v1002 = vadd.f32 %v1001, 0.001143296
        %v1003 = vmul.f32 %v989, %v1002
        %v1004 = vadd.f32 %v1003, 0.014752088
        %v1005 = vmul.f32 %v989, %v1004
        %v1006 = vadd.f32 %v1005, 0.112945676
        %v1007 = vmul.f32 %v989, %v1006
        %v1008 = vadd.f32 %v1007, 0.4994258
        %v1009 = vmul.f32 %v989, %v1008
        %v1010 = vadd.f32 %v1009, 1.0
        %v1011 = vrcp.pop %v1010
        %v1012 = vmul.f32 %v1010, %v1011
        %v1013 = vsub.f32 1.0, %v1012
        %v1014 = vmul.f32 %v1011, %v1013
        %v1015 = vadd.f32 %v1011, %v1014
        %vm1016 = vweird.f32 %v1010
        %vm1017 = vweird.f32 %v1011
        %vm1018 = vmor %vm1016, %vm1017
        %v1019 = vsel %vm1018, %v1011, %v1015
        %v1020 = vand.u32 2147483647, %v1010
        %vm1021 = vcmp.eq.f32.partialorder %v1020, 8.507059e+37
        %v1022 = vand.u32 %v1010, 2147483648
        %v1023 = vor.u32 1.1754944e-38, %v1022
        %v1024 = vsel %vm1021, %v1023, %v1019
        %v1025 = vmul.f32 %v1000, %v1024
        %v1026 = vmin.f32 %v1025, 1.0
        %v1027 = vmax.f32 %v1026, -1.0
        %v1028 = vmul.f32 %v987, %v987
        %v1029 = vmin.f32 16.0, %v1028
        %v1030 = vmul.f32 %v1029, 2.1237322e-06
        %v1031 = vadd.f32 %v1030, 0.00028619796
        %v1032 = vmul.f32 %v1029, %v1031
        %v1033 = vadd.f32 %v1032, 0.0036580483
        %v1034 = vmul.f32 %v1029, %v1033
        %v1035 = vadd.f32 %v1034, 0.05243302
        %v1036 = vmul.f32 %v1029, %v1035
        %v1037 = vadd.f32 %v1036, 0.18741608
        %v1038 = vmul.f32 %v1029, %v1037
        %v1039 = vadd.f32 %v1038, 1.1283791
        %v1040 = vmul.f32 %v987, %v1039
        %v1041 = vmul.f32 %v1029, 3.8918573e-05
        %v1042 = vadd.f32 %v1041, 0.001143296
        %v1043 = vmul.f32 %v1029, %v1042
        %v1044 = vadd.f32 %v1043, 0.014752088
        %v1045 = vmul.f32 %v1029, %v1044
        %v1046 = vadd.f32 %v1045, 0.112945676
        %v1047 = vmul.f32 %v1029, %v1046
        %v1048 = vadd.f32 %v1047, 0.4994258
        %v1049 = vmul.f32 %v1029, %v1048
        %v1050 = vadd.f32 %v1049, 1.0
        %v1051 = vrcp.pop %v1050
        %v1052 = vmul.f32 %v1050, %v1051
        %v1053 = vsub.f32 1.0, %v1052
        %v1054 = vmul.f32 %v1051, %v1053
        %v1055 = vadd.f32 %v1051, %v1054
        %vm1056 = vweird.f32 %v1050
        %vm1057 = vweird.f32 %v1051
        %vm1058 = vmor %vm1056, %vm1057
        %v1059 = vsel %vm1058, %v1051, %v1055
        %v1060 = vand.u32 2147483647, %v1050
        %vm1061 = vcmp.eq.f32.partialorder %v1060, 8.507059e+37
        %v1062 = vand.u32 %v1050, 2147483648
        %v1063 = vor.u32 1.1754944e-38, %v1062
        %v1064 = vsel %vm1061, %v1063, %v1059
        %v1065 = vmul.f32 %v1040, %v1064
        %v1066 = vmin.f32 %v1065, 1.0
        %v1067 = vmax.f32 %v1066, -1.0
        %v1068 = vadd.f32 %v1027, 1.0
        %v1069 = vadd.f32 %v1067, 1.0
        %v1070 = vmul.f32 %v984, %v1068
        %v1071 = vmul.f32 %v985, %v1069
        %v1072 = vpack.c.bf16 %v1070, %v1070
        %v1073 = vpack.c.bf16 %v1071, %v1071
        %v1075 = vperm.slane %v871, 0
        %v1109 = vunpack.c.l.b16 %v839
        %v1110 = vunpack.c.l.b16 %v840
        %v1111 = vunpack.c.l.b16 %v841
        %v1112 = vunpack.c.l.b16 %v842
        %v1113 = vunpack.c.l.b16 %v843
        %v1114 = vunpack.c.l.b16 %v844
        %v1115 = vunpack.c.l.b16 %v845
        %v1116 = vunpack.c.l.b16 %v846
        %v1117 = vunpack.c.l.b16 %v847
        %v1118 = vunpack.c.l.b16 %v848
        %v1119 = vunpack.c.l.b16 %v849
        %v1120 = vunpack.c.l.b16 %v850
        %v1121 = vunpack.c.l.b16 %v851
        %v1122 = vunpack.c.l.b16 %v852
        %v1123 = vunpack.c.l.b16 %v853
        %v1124 = vunpack.c.l.b16 %v854
        %v1125 = vunpack.c.l.b16 %v855
        %v1126 = vunpack.c.l.b16 %v856
        %v1127 = vunpack.c.l.b16 %v857
        %v1128 = vunpack.c.l.b16 %v858
        %v1129 = vunpack.c.l.b16 %v859
        %v1130 = vunpack.c.l.b16 %v860
        %v1131 = vunpack.c.l.b16 %v861
        %v1132 = vunpack.c.l.b16 %v862
        %v1133 = vunpack.c.l.b16 %v863
        %v1134 = vunpack.c.l.b16 %v864
        %v1135 = vunpack.c.l.b16 %v865
        %v1136 = vunpack.c.l.b16 %v866
        %v1137 = vunpack.c.l.b16 %v867
        %v1138 = vunpack.c.l.b16 %v868
        %v1139 = vunpack.c.l.b16 %v869
        %v1140 = vunpack.c.l.b16 %v870
        %v1141 = vpack.c.b16 %v1110, %v1109
        %v1142 = vpack.c.b16 %v1112, %v1111
        %v1143 = vpack.c.b16 %v1114, %v1113
        %v1144 = vpack.c.b16 %v1116, %v1115
        %v1145 = vpack.c.b16 %v1118, %v1117
        %v1146 = vpack.c.b16 %v1120, %v1119
        %v1147 = vpack.c.b16 %v1122, %v1121
        %v1148 = vpack.c.b16 %v1124, %v1123
        %v1149 = vpack.c.b16 %v1126, %v1125
        %v1150 = vpack.c.b16 %v1128, %v1127
        %v1151 = vpack.c.b16 %v1130, %v1129
        %v1152 = vpack.c.b16 %v1132, %v1131
        %v1153 = vpack.c.b16 %v1134, %v1133
        %v1154 = vpack.c.b16 %v1136, %v1135
        %v1155 = vpack.c.b16 %v1138, %v1137
        %v1156 = vpack.c.b16 %v1140, %v1139
        %1173 = vmatpush.bf16.msra.mxu0 %v1148
        %1174 = vmatpush.bf16.msra.mxu0 %v1147
        %1175 = vmatpush.bf16.msra.mxu0 %v1146
        %1176 = vmatpush.bf16.msra.mxu0 %v1145
        %1177 = vmatpush.bf16.msra.mxu0 %v1144
        %1178 = vmatpush.bf16.msra.mxu0 %v1143
        %1179 = vmatpush.bf16.msra.mxu0 %v1142
        %1180 = vmatpush.bf16.msra.mxu0 %v1141
        %1181 = vmatmul.bf16.gmra.mxu0 %v1072
        %v1182 = vpop.f32.mrf.mxu0
        %v1183 = vadd.f32 %v1075, %v1182
        %v1184 = vpop.f32.mrf.mxu0
        %1185 = vdwg.mxu0
        %1186 = vmatpush.bf16.msra.mxu0 %v1156
        %1187 = vmatpush.bf16.msra.mxu0 %v1155
        %1188 = vmatpush.bf16.msra.mxu0 %v1154
        %1189 = vmatpush.bf16.msra.mxu0 %v1153
        %1190 = vmatpush.bf16.msra.mxu0 %v1152
        %1191 = vmatpush.bf16.msra.mxu0 %v1151
        %1192 = vmatpush.bf16.msra.mxu0 %v1150
        %1193 = vmatpush.bf16.msra.mxu0 %v1149
        %1194 = vmatmul.bf16.gmra.mxu0 %v1073
        %v1195 = vpop.f32.mrf.mxu0
        %v1196 = vadd.f32 %v1183, %v1195
        %v1197 = vpop.f32.mrf.mxu0
        %1198 = vdwg.mxu0
        %v1199 = vadd.f32 %v1196, %v789
        %v1200 = vmul.f32 %v762, %v1199
        %v1201 = vadd.f32 %v1200, %v645
        %1202 = vadd.xlane.f32.xlu0 %v1201
        %v1203 = vpop.xlane.xlu0 %1202
        %v1204 = vmul.f32 %v1203, %v656
        %v1205 = vsub.f32 %v1201, %v1204
        %v1206 = vmul.f32 %v1205, %v1205
        %1207 = vadd.xlane.f32.xlu0 %v1206
        %v1208 = vpop.xlane.xlu0 %1207
        %v1209 = vmul.f32 %v1208, %v656
        %v1210 = vadd.f32 %v1209, 1e-05
        %v1211 = vrsqrt.pop %v1210
        %v1212 = vmul.f32 %v1211, %v1210
        %v1213 = vmul.f32 %v1212, %v1211
        %v1214 = vmul.f32 0.5, %v1213
        %v1215 = vsub.f32 1.5, %v1214
        %v1216 = vmul.f32 %v1211, %v1215
        %vm1217 = vweird.f32 %v1210
        %vm1218 = vweird.f32 %v1211
        %vm1219 = vmor %vm1217, %vm1218
        %v1220 = vsel %vm1219, %v1211, %v1216
        %v1221 = vmul.f32 %v1205, %v1220
        %v1222 = vmul.f32 %v1221, %v676
        %v1223 = vadd.f32 %v1222, %v680
        %v1224 = vld [vmem:[#allocation7] sm:$0xff]
        %v1225 = vld [vmem:[#allocation7 + $0x8] sm:$0xff]
        %v1226 = vld [vmem:[#allocation7 + $0x10] sm:$0xff]
        %v1227 = vld [vmem:[#allocation7 + $0x18] sm:$0xff]
        %v1228 = vld [vmem:[#allocation7 + $0x20] sm:$0xff]
        %v1229 = vld [vmem:[#allocation7 + $0x28] sm:$0xff]
        %v1230 = vld [vmem:[#allocation7 + $0x30] sm:$0xff]
        %v1231 = vld [vmem:[#allocation7 + $0x38] sm:$0xff]
        %v1232 = vld [vmem:[#allocation7 + $0x40] sm:$0xff]
        %v1233 = vld [vmem:[#allocation7 + $0x48] sm:$0xff]
        %v1234 = vld [vmem:[#allocation7 + $0x50] sm:$0xff]
        %v1235 = vld [vmem:[#allocation7 + $0x58] sm:$0xff]
        %v1236 = vld [vmem:[#allocation7 + $0x60] sm:$0xff]
        %v1237 = vld [vmem:[#allocation7 + $0x68] sm:$0xff]
        %v1238 = vld [vmem:[#allocation7 + $0x70] sm:$0xff]
        %v1239 = vld [vmem:[#allocation7 + $0x78] sm:$0xff]
        %v1240 = vld [vmem:[%s14] sm:$0x3]
        %v1241 = vld [vmem:[#allocation9] sm:$0xf]
        %v1242 = vld [vmem:[#allocation9 + $0x4] sm:$0xf]
        %v1243 = vld [vmem:[#allocation9 + $0x8] sm:$0xf]
        %v1244 = vld [vmem:[#allocation9 + $0xc] sm:$0xf]
        %v1245 = vld [vmem:[#allocation9 + $0x10] sm:$0xf]
        %v1246 = vld [vmem:[#allocation9 + $0x14] sm:$0xf]
        %v1247 = vld [vmem:[#allocation9 + $0x18] sm:$0xf]
        %v1248 = vld [vmem:[#allocation9 + $0x1c] sm:$0xf]
        %v1249 = vld [vmem:[#allocation9 + $0x20] sm:$0xf]
        %v1250 = vld [vmem:[#allocation9 + $0x24] sm:$0xf]
        %v1251 = vld [vmem:[#allocation9 + $0x28] sm:$0xf]
        %v1252 = vld [vmem:[#allocation9 + $0x2c] sm:$0xf]
        %v1253 = vld [vmem:[#allocation9 + $0x30] sm:$0xf]
        %v1254 = vld [vmem:[#allocation9 + $0x34] sm:$0xf]
        %v1255 = vld [vmem:[#allocation9 + $0x38] sm:$0xf]
        %v1256 = vld [vmem:[#allocation9 + $0x3c] sm:$0xf]
        %v1257 = vld [vmem:[#allocation9 + $0x40] sm:$0xf]
        %v1258 = vld [vmem:[#allocation9 + $0x44] sm:$0xf]
        %v1259 = vld [vmem:[#allocation9 + $0x48] sm:$0xf]
        %v1260 = vld [vmem:[#allocation9 + $0x4c] sm:$0xf]
        %v1261 = vld [vmem:[#allocation9 + $0x50] sm:$0xf]
        %v1262 = vld [vmem:[#allocation9 + $0x54] sm:$0xf]
        %v1263 = vld [vmem:[#allocation9 + $0x58] sm:$0xf]
        %v1264 = vld [vmem:[#allocation9 + $0x5c] sm:$0xf]
        %v1265 = vld [vmem:[#allocation9 + $0x60] sm:$0xf]
        %v1266 = vld [vmem:[#allocation9 + $0x64] sm:$0xf]
        %v1267 = vld [vmem:[#allocation9 + $0x68] sm:$0xf]
        %v1268 = vld [vmem:[#allocation9 + $0x6c] sm:$0xf]
        %v1269 = vld [vmem:[#allocation9 + $0x70] sm:$0xf]
        %v1270 = vld [vmem:[#allocation9 + $0x74] sm:$0xf]
        %v1271 = vld [vmem:[#allocation9 + $0x78] sm:$0xf]
        %v1272 = vld [vmem:[#allocation9 + $0x7c] sm:$0xf]
        %v1273 = vld [vmem:[%s16] sm:$0x1]
        %v1274 = vpack.c.bf16 %v1223, %v1223
        %v1276 = vperm.slane %v1240, 0
        %v1277 = vperm.slane %v1240, 1
        %v1296 = vunpack.c.l.b16 %v1224
        %v1297 = vunpack.c.h.b16 %v1224
        %v1298 = vunpack.c.l.b16 %v1225
        %v1299 = vunpack.c.h.b16 %v1225
        %v1300 = vunpack.c.l.b16 %v1226
        %v1301 = vunpack.c.h.b16 %v1226
        %v1302 = vunpack.c.l.b16 %v1227
        %v1303 = vunpack.c.h.b16 %v1227
        %v1304 = vunpack.c.l.b16 %v1228
        %v1305 = vunpack.c.h.b16 %v1228
        %v1306 = vunpack.c.l.b16 %v1229
        %v1307 = vunpack.c.h.b16 %v1229
        %v1308 = vunpack.c.l.b16 %v1230
        %v1309 = vunpack.c.h.b16 %v1230
        %v1310 = vunpack.c.l.b16 %v1231
        %v1311 = vunpack.c.h.b16 %v1231
        %v1312 = vunpack.c.l.b16 %v1232
        %v1313 = vunpack.c.h.b16 %v1232
        %v1314 = vunpack.c.l.b16 %v1233
        %v1315 = vunpack.c.h.b16 %v1233
        %v1316 = vunpack.c.l.b16 %v1234
        %v1317 = vunpack.c.h.b16 %v1234
        %v1318 = vunpack.c.l.b16 %v1235
        %v1319 = vunpack.c.h.b16 %v1235
        %v1320 = vunpack.c.l.b16 %v1236
        %v1321 = vunpack.c.h.b16 %v1236
        %v1322 = vunpack.c.l.b16 %v1237
        %v1323 = vunpack.c.h.b16 %v1237
        %v1324 = vunpack.c.l.b16 %v1238
        %v1325 = vunpack.c.h.b16 %v1238
        %v1326 = vunpack.c.l.b16 %v1239
        %v1327 = vunpack.c.h.b16 %v1239
        %v1328 = vpack.c.b16 %v1298, %v1296
        %v1329 = vpack.c.b16 %v1299, %v1297
        %v1330 = vpack.c.b16 %v1302, %v1300
        %v1331 = vpack.c.b16 %v1303, %v1301
        %v1332 = vpack.c.b16 %v1306, %v1304
        %v1333 = vpack.c.b16 %v1307, %v1305
        %v1334 = vpack.c.b16 %v1310, %v1308
        %v1335 = vpack.c.b16 %v1311, %v1309
        %v1336 = vpack.c.b16 %v1314, %v1312
        %v1337 = vpack.c.b16 %v1315, %v1313
        %v1338 = vpack.c.b16 %v1318, %v1316
        %v1339 = vpack.c.b16 %v1319, %v1317
        %v1340 = vpack.c.b16 %v1322, %v1320
        %v1341 = vpack.c.b16 %v1323, %v1321
        %v1342 = vpack.c.b16 %v1326, %v1324
        %v1343 = vpack.c.b16 %v1327, %v1325
        %1360 = vmatpush.bf16.msra.mxu0 %v1342
        %1361 = vmatpush.bf16.msra.mxu0 %v1340
        %1362 = vmatpush.bf16.msra.mxu0 %v1338
        %1363 = vmatpush.bf16.msra.mxu0 %v1336
        %1364 = vmatpush.bf16.msra.mxu0 %v1334
        %1365 = vmatpush.bf16.msra.mxu0 %v1332
        %1366 = vmatpush.bf16.msra.mxu0 %v1330
        %1367 = vmatpush.bf16.msra.mxu0 %v1328
        %1368 = vmatmul.bf16.gmra.mxu0 %v1274
        %v1369 = vpop.f32.mrf.mxu0
        %v1370 = vadd.f32 %v1276, %v1369
        %v1371 = vpop.f32.mrf.mxu0
        %1372 = vdwg.mxu0
        %1373 = vmatpush.bf16.msra.mxu0 %v1343
        %1374 = vmatpush.bf16.msra.mxu0 %v1341
        %1375 = vmatpush.bf16.msra.mxu0 %v1339
        %1376 = vmatpush.bf16.msra.mxu0 %v1337
        %1377 = vmatpush.bf16.msra.mxu0 %v1335
        %1378 = vmatpush.bf16.msra.mxu0 %v1333
        %1379 = vmatpush.bf16.msra.mxu0 %v1331
        %1380 = vmatpush.bf16.msra.mxu0 %v1329
        %1381 = vmatmul.bf16.gmra.mxu0 %v1274
        %v1382 = vpop.f32.mrf.mxu0
        %v1383 = vadd.f32 %v1277, %v1382
        %v1384 = vpop.f32.mrf.mxu0
        %1385 = vdwg.mxu0
        %v1386 = vmul.f32 %v1370, 0.5
        %v1387 = vmul.f32 %v1383, 0.5
        %v1388 = vmul.f32 %v1370, 0.70710677
        %v1389 = vmul.f32 %v1383, 0.70710677
        %v1390 = vmul.f32 %v1388, %v1388
        %v1391 = vmin.f32 16.0, %v1390
        %v1392 = vmul.f32 %v1391, 2.1237322e-06
        %v1393 = vadd.f32 %v1392, 0.00028619796
        %v1394 = vmul.f32 %v1391, %v1393
        %v1395 = vadd.f32 %v1394, 0.0036580483
        %v1396 = vmul.f32 %v1391, %v1395
        %v1397 = vadd.f32 %v1396, 0.05243302
        %v1398 = vmul.f32 %v1391, %v1397
        %v1399 = vadd.f32 %v1398, 0.18741608
        %v1400 = vmul.f32 %v1391, %v1399
        %v1401 = vadd.f32 %v1400, 1.1283791
        %v1402 = vmul.f32 %v1388, %v1401
        %v1403 = vmul.f32 %v1391, 3.8918573e-05
        %v1404 = vadd.f32 %v1403, 0.001143296
        %v1405 = vmul.f32 %v1391, %v1404
        %v1406 = vadd.f32 %v1405, 0.014752088
        %v1407 = vmul.f32 %v1391, %v1406
        %v1408 = vadd.f32 %v1407, 0.112945676
        %v1409 = vmul.f32 %v1391, %v1408
        %v1410 = vadd.f32 %v1409, 0.4994258
        %v1411 = vmul.f32 %v1391, %v1410
        %v1412 = vadd.f32 %v1411, 1.0
        %v1413 = vrcp.pop %v1412
        %v1414 = vmul.f32 %v1412, %v1413
        %v1415 = vsub.f32 1.0, %v1414
        %v1416 = vmul.f32 %v1413, %v1415
        %v1417 = vadd.f32 %v1413, %v1416
        %vm1418 = vweird.f32 %v1412
        %vm1419 = vweird.f32 %v1413
        %vm1420 = vmor %vm1418, %vm1419
        %v1421 = vsel %vm1420, %v1413, %v1417
        %v1422 = vand.u32 2147483647, %v1412
        %vm1423 = vcmp.eq.f32.partialorder %v1422, 8.507059e+37
        %v1424 = vand.u32 %v1412, 2147483648
        %v1425 = vor.u32 1.1754944e-38, %v1424
        %v1426 = vsel %vm1423, %v1425, %v1421
        %v1427 = vmul.f32 %v1402, %v1426
        %v1428 = vmin.f32 %v1427, 1.0
        %v1429 = vmax.f32 %v1428, -1.0
        %v1430 = vmul.f32 %v1389, %v1389
        %v1431 = vmin.f32 16.0, %v1430
        %v1432 = vmul.f32 %v1431, 2.1237322e-06
        %v1433 = vadd.f32 %v1432, 0.00028619796
        %v1434 = vmul.f32 %v1431, %v1433
        %v1435 = vadd.f32 %v1434, 0.0036580483
        %v1436 = vmul.f32 %v1431, %v1435
        %v1437 = vadd.f32 %v1436, 0.05243302
        %v1438 = vmul.f32 %v1431, %v1437
        %v1439 = vadd.f32 %v1438, 0.18741608
        %v1440 = vmul.f32 %v1431, %v1439
        %v1441 = vadd.f32 %v1440, 1.1283791
        %v1442 = vmul.f32 %v1389, %v1441
        %v1443 = vmul.f32 %v1431, 3.8918573e-05
        %v1444 = vadd.f32 %v1443, 0.001143296
        %v1445 = vmul.f32 %v1431, %v1444
        %v1446 = vadd.f32 %v1445, 0.014752088
        %v1447 = vmul.f32 %v1431, %v1446
        %v1448 = vadd.f32 %v1447, 0.112945676
        %v1449 = vmul.f32 %v1431, %v1448
        %v1450 = vadd.f32 %v1449, 0.4994258
        %v1451 = vmul.f32 %v1431, %v1450
        %v1452 = vadd.f32 %v1451, 1.0
        %v1453 = vrcp.pop %v1452
        %v1454 = vmul.f32 %v1452, %v1453
        %v1455 = vsub.f32 1.0, %v1454
        %v1456 = vmul.f32 %v1453, %v1455
        %v1457 = vadd.f32 %v1453, %v1456
        %vm1458 = vweird.f32 %v1452
        %vm1459 = vweird.f32 %v1453
        %vm1460 = vmor %vm1458, %vm1459
        %v1461 = vsel %vm1460, %v1453, %v1457
        %v1462 = vand.u32 2147483647, %v1452
        %vm1463 = vcmp.eq.f32.partialorder %v1462, 8.507059e+37
        %v1464 = vand.u32 %v1452, 2147483648
        %v1465 = vor.u32 1.1754944e-38, %v1464
        %v1466 = vsel %vm1463, %v1465, %v1461
        %v1467 = vmul.f32 %v1442, %v1466
        %v1468 = vmin.f32 %v1467, 1.0
        %v1469 = vmax.f32 %v1468, -1.0
        %v1470 = vadd.f32 %v1429, 1.0
        %v1471 = vadd.f32 %v1469, 1.0
        %v1472 = vmul.f32 %v1386, %v1470
        %v1473 = vmul.f32 %v1387, %v1471
        %v1474 = vpack.c.bf16 %v1472, %v1472
        %v1475 = vpack.c.bf16 %v1473, %v1473
        %v1477 = vperm.slane %v1273, 0
        %v1511 = vunpack.c.l.b16 %v1241
        %v1512 = vunpack.c.l.b16 %v1242
        %v1513 = vunpack.c.l.b16 %v1243
        %v1514 = vunpack.c.l.b16 %v1244
        %v1515 = vunpack.c.l.b16 %v1245
        %v1516 = vunpack.c.l.b16 %v1246
        %v1517 = vunpack.c.l.b16 %v1247
        %v1518 = vunpack.c.l.b16 %v1248
        %v1519 = vunpack.c.l.b16 %v1249
        %v1520 = vunpack.c.l.b16 %v1250
        %v1521 = vunpack.c.l.b16 %v1251
        %v1522 = vunpack.c.l.b16 %v1252
        %v1523 = vunpack.c.l.b16 %v1253
        %v1524 = vunpack.c.l.b16 %v1254
        %v1525 = vunpack.c.l.b16 %v1255
        %v1526 = vunpack.c.l.b16 %v1256
        %v1527 = vunpack.c.l.b16 %v1257
        %v1528 = vunpack.c.l.b16 %v1258
        %v1529 = vunpack.c.l.b16 %v1259
        %v1530 = vunpack.c.l.b16 %v1260
        %v1531 = vunpack.c.l.b16 %v1261
        %v1532 = vunpack.c.l.b16 %v1262
        %v1533 = vunpack.c.l.b16 %v1263
        %v1534 = vunpack.c.l.b16 %v1264
        %v1535 = vunpack.c.l.b16 %v1265
        %v1536 = vunpack.c.l.b16 %v1266
        %v1537 = vunpack.c.l.b16 %v1267
        %v1538 = vunpack.c.l.b16 %v1268
        %v1539 = vunpack.c.l.b16 %v1269
        %v1540 = vunpack.c.l.b16 %v1270
        %v1541 = vunpack.c.l.b16 %v1271
        %v1542 = vunpack.c.l.b16 %v1272
        %v1543 = vpack.c.b16 %v1512, %v1511
        %v1544 = vpack.c.b16 %v1514, %v1513
        %v1545 = vpack.c.b16 %v1516, %v1515
        %v1546 = vpack.c.b16 %v1518, %v1517
        %v1547 = vpack.c.b16 %v1520, %v1519
        %v1548 = vpack.c.b16 %v1522, %v1521
        %v1549 = vpack.c.b16 %v1524, %v1523
        %v1550 = vpack.c.b16 %v1526, %v1525
        %v1551 = vpack.c.b16 %v1528, %v1527
        %v1552 = vpack.c.b16 %v1530, %v1529
        %v1553 = vpack.c.b16 %v1532, %v1531
        %v1554 = vpack.c.b16 %v1534, %v1533
        %v1555 = vpack.c.b16 %v1536, %v1535
        %v1556 = vpack.c.b16 %v1538, %v1537
        %v1557 = vpack.c.b16 %v1540, %v1539
        %v1558 = vpack.c.b16 %v1542, %v1541
        %1575 = vmatpush.bf16.msra.mxu0 %v1550
        %1576 = vmatpush.bf16.msra.mxu0 %v1549
        %1577 = vmatpush.bf16.msra.mxu0 %v1548
        %1578 = vmatpush.bf16.msra.mxu0 %v1547
        %1579 = vmatpush.bf16.msra.mxu0 %v1546
        %1580 = vmatpush.bf16.msra.mxu0 %v1545
        %1581 = vmatpush.bf16.msra.mxu0 %v1544
        %1582 = vmatpush.bf16.msra.mxu0 %v1543
        %1583 = vmatmul.bf16.gmra.mxu0 %v1474
        %v1584 = vpop.f32.mrf.mxu0
        %v1585 = vadd.f32 %v1477, %v1584
        %v1586 = vpop.f32.mrf.mxu0
        %1587 = vdwg.mxu0
        %1588 = vmatpush.bf16.msra.mxu0 %v1558
        %1589 = vmatpush.bf16.msra.mxu0 %v1557
        %1590 = vmatpush.bf16.msra.mxu0 %v1556
        %1591 = vmatpush.bf16.msra.mxu0 %v1555
        %1592 = vmatpush.bf16.msra.mxu0 %v1554
        %1593 = vmatpush.bf16.msra.mxu0 %v1553
        %1594 = vmatpush.bf16.msra.mxu0 %v1552
        %1595 = vmatpush.bf16.msra.mxu0 %v1551
        %1596 = vmatmul.bf16.gmra.mxu0 %v1475
        %v1597 = vpop.f32.mrf.mxu0
        %v1598 = vadd.f32 %v1585, %v1597
        %v1599 = vpop.f32.mrf.mxu0
        %1600 = vdwg.mxu0
        %v1601 = vadd.f32 %v1598, %v1201
        %1602 = vst [vmem:[%s643] sm:$0xff] %v1601
        %p1603 = scmp.lt.s32.totalorder %s31, 1
        %s1604 = scalar_select %p1603, %s31, 1
        %s1605 = smul.addr %s1604, 8
        %s1606 = scalar_lea.vmem %s17, %s1605
        // Predicated region
        $region109: #{_lambda_.5} parent=87 // pred_check
          %p1607 = pneg %p416
        $region110: #{_lambda_.5} parent=87 // pred_check_branch
          %1609 = sbr.rel (%p1607) target = $region112
        $region111: #{_lambda_.5} parent=87 // pred_region
          _
        $region112: #{_lambda_.5} parent=87 // pred_fallthru
          _
      $region88: #{_lambda_.5} parent=5 // pred_fallthru
        _
      %p1610 = scmp.le.s32.totalorder 2, %s26
      // Predicated region
      $region113: #{_lambda_.5} parent=5 // pred_check
        %p1611 = pneg %p1610
      $region114: #{_lambda_.5} parent=5 // pred_check_branch
        %1613 = sbr.rel (%p1611) target = $region116
      $region115: #{_lambda_.5} parent=5 // pred_region
        %s1614 = ssub.s32 %s26, 2
        // Predicated region
        $region117: #{_lambda_.5} parent=115 // pred_check
          %p1615 = pneg %p422
        $region118: #{_lambda_.5} parent=115 // pred_check_branch
          %1617 = sbr.rel (%p1615) target = $region120
        $region119: #{_lambda_.5} parent=115 // pred_region
          %p1618 = scmp.lt.s32.totalorder %s32, 1
          %s1619 = scalar_select %p1618, %s32, 1
          %s1620 = smul.addr %s1619, 8
          %s1621 = scalar_lea.vmem %s17, %s1620
        $region120: #{_lambda_.5} parent=115 // pred_fallthru
          _
      $region116: #{_lambda_.5} parent=5 // pred_fallthru
        _
    $region6: #{_lambda_.5} parent=1 // loop_footer
      %s30 = sadd.s32 1, %s26
    $region7: #{_lambda_.5} parent=1 // loop_footer_branch
      %25 = sbr.rel target = $region3
    $region8: #{_lambda_.5} parent=1 // loop_exit
      _
    %1622 = vsyncpa [#allocation3], 1
    %s1623 = scalar_lea.sflag [#allocation3], 1
    %1624 = vsyncpa %s1623, 1
    %1625 = vsyncpa [#allocation5], 1
    %1626 = vsyncpa [#allocation8], 1

</llo_original>
